<compile_context>
chip_gen: v7x
topology: tpu7x:2x2x1
jax: 0.10.0
libtpu: 0.0.40
codegen_flags: <defaults>
</compile_context>

<pallas_src>
import numpy as np
import jax
import jax.numpy as jnp
from jax.experimental import pallas as pl
from jax.experimental.pallas import tpu as pltpu

EPS = 1e-5  # nn.BatchNorm2d default eps


def _vmem_budget():
    """(working-set budget, vmem_limit_bytes) per TPU generation."""
    cap = None
    try:
        info = pltpu.get_tpu_info()
        cap = getattr(info, "vmem_capacity_bytes", None)
    except Exception:
        cap = None
    if cap is None:
        cap = 128 * 1024 * 1024
    if cap <= 64 * 1024 * 1024:               # v7x-class TensorCore: 64 MiB physical VMEM
        return 24 * 1024 * 1024, 32 * 1024 * 1024
    return 48 * 1024 * 1024, 64 * 1024 * 1024  # v5e / v6e: 128 MiB physical VMEM


def _pick_tile_hp(hp, c_in, d, p, w_img, wp, budget):
    """Largest TH (multiple of 16 dividing hp, or hp itself) whose per-step working set
    (double-buffered blocks + constants) fits the VMEM budget."""
    cands = {hp}
    t = 16
    while t < hp:
        if hp % t == 0:
            cands.add(t)
        t += 16
    best = None
    for t in sorted(cands):
        if t > 512:                       # cap the (TH, TH*p) row-deinterleave matmul cost
            continue
        ws = 2 * (c_in * t * p * w_img * 4    # x block, f32, double-buffered
                  + d * t * wp * 2            # y2 block, bf16
                  + d * t * wp * 4            # pass-3 output block, f32
                  + 2 * d * wp * 4)           # per-image stat blocks
        ws += p * t * t * p * 2 + p * w_img * wp * 2   # prow / sel constants (bf16)
        if ws <= budget:
            best = t
    return best if best is not None else min(cands)


def _patch_embed_forward(x, w_proj, b_proj, w_conv, b_conv, g1, be1, g2, be2, patch_size):
    """Forward of PatchEmbed (training-mode BatchNorms).

    x: (N, C_in, H, W); w_proj: (D, C_in, p, p); w_conv: (D, D, 1, 1);
    b_proj/b_conv/g1/be1/g2/be2: (D,).  Returns (N, D, H/p, W/p).
    """
    del b_proj, b_conv  # cancelled exactly by training-mode BN mean subtraction
    n, c_in, h, w_img = x.shape
    p = int(patch_size)
    hp, wp = h // p, w_img // p
    d = w_conv.shape[0]
    m_total = n * hp * wp

    ws_budget, vmem_limit = _vmem_budget()
    th = _pick_tile_hp(hp, c_in, d, p, w_img, wp, ws_budget)
    thp = th * p
    grid = (n, hp // th)

    # Fold the 1x1 conv into the patchify conv: W2[d, c, ph, pw] (tiny host-side einsum).
    w2 = jnp.einsum("de,eckl->dckl",
                    w_conv.reshape(d, d).astype(jnp.float32),
                    w_proj.astype(jnp.float32))
    w2_flat = w2.reshape(-1)                      # (D*C*p*p,)  -> SMEM scalar table

    # Exact 0/1 de-interleave matrices (bf16 is exact for 0/1).
    prow_np = np.zeros((p, th, thp), np.float32)  # prow[ph, t, t*p+ph] = 1
    t_idx = np.arange(th)
    for ph in range(p):
        prow_np[ph, t_idx, t_idx * p + ph] = 1.0
    sel_np = np.zeros((p, w_img, wp), np.float32)  # sel[pw, j*p+pw, j] = 1
    j_idx = np.arange(wp)
    for pw in range(p):
        sel_np[pw, j_idx * p + pw, j_idx] = 1.0
    prow = jnp.asarray(prow_np, jnp.bfloat16)
    sel = jnp.asarray(sel_np, jnp.bfloat16)

    y_block = pl.BlockSpec((None, d, th, wp), lambda i, j: (i, 0, j, 0))
    stat_block = pl.BlockSpec((None, d, 1, wp), lambda i, j: (i, 0, 0, 0))

    def full_spec(shape):
        return pl.BlockSpec(shape, lambda i, j: (0,) * len(shape))

    reduce_params = pltpu.CompilerParams(
        dimension_semantics=("parallel", "arbitrary"),
        vmem_limit_bytes=vmem_limit)

    # ---------------- pass 1: fused patchify+1x1 conv + per-image BN1 moments -------------
    def proj_stats_kernel(x_ref, w2_ref, prow_ref, sel_ref, y_ref, sum_ref, sq_ref):
        # x_ref: (C, TH*p, W) f32   prow_ref: (p, TH, TH*p) bf16   sel_ref: (p, W, Wp) bf16
        # y_ref: (D, TH, Wp) bf16   sum_ref/sq_ref: (D, 1, Wp) f32 per-image partials
        @pl.when(pl.program_id(1) == 0)
        def _init():
            sum_ref[...] = jnp.zeros_like(sum_ref)
            sq_ref[...] = jnp.zeros_like(sq_ref)

        acc = [jnp.zeros((th, wp), jnp.float32) for _ in range(d)]
        for c in range(c_in):
            xc = x_ref[c].astype(jnp.bfloat16)                       # (TH*p, W)
            for ph in range(p):
                # row de-interleave on the MXU: keeps rows t*p+ph -> row t (exact).
                xph = jnp.dot(prow_ref[ph], xc,
                              preferred_element_type=jnp.float32).astype(jnp.bfloat16)
                for pw in range(p):
                    # lane de-interleave on the MXU: keeps lanes j*p+pw -> lane j (exact).
                    b = jnp.dot(xph, sel_ref[pw],
                                preferred_element_type=jnp.float32)  # (TH, Wp) f32
                    for dd in range(d):
                        wsc = w2_ref[((dd * c_in + c) * p + ph) * p + pw]
                        acc[dd] = acc[dd] + wsc * b                  # VPU broadcast-FMA
        for dd in range(d):
            y_ref[dd] = acc[dd].astype(y_ref.dtype)
        yv = y_ref[...].astype(jnp.float32)                          # (D, TH, Wp)
        sum_ref[...] += jnp.sum(yv, axis=1, keepdims=True)
        sq_ref[...] += jnp.sum(yv * yv, axis=1, keepdims=True)

    y2, psum1, psq1 = pl.pallas_call(
        proj_stats_kernel,
        out_shape=(
            jax.ShapeDtypeStruct((n, d, hp, wp), jnp.bfloat16),
            jax.ShapeDtypeStruct((n, d, 1, wp), jnp.float32),
            jax.ShapeDtypeStruct((n, d, 1, wp), jnp.float32),
        ),
        grid=grid,
        in_specs=[
            pl.BlockSpec((None, c_in, thp, w_img), lambda i, j: (i, 0, j, 0)),
            pl.BlockSpec(memory_space=pltpu.MemorySpace.SMEM),
            full_spec((p, th, thp)),
            full_spec((p, w_img, wp)),
        ],
        out_specs=(y_block, stat_block, stat_block),
        compiler_params=reduce_params,
    )(x, w2_flat, prow, sel)

    cnt = float(m_total)
    mean1 = jnp.sum(psum1, axis=(0, 2, 3)) / cnt
    var1 = jnp.maximum(jnp.sum(psq1, axis=(0, 2, 3)) / cnt - mean1 * mean1, 0.0)
    scale1_v = g1.astype(jnp.float32) * jax.lax.rsqrt(var1 + EPS)
    shift1_v = be1.astype(jnp.float32) - mean1 * scale1_v
    scale1 = scale1_v.reshape(d, 1, 1)
    shift1 = shift1_v.reshape(d, 1, 1)

    # ---------------- pass 2: per-image moments of ReLU(BN1(y2)) ---------------------------
    def relu_stats_kernel(y_ref, sc_ref, sh_ref, sum_ref, sq_ref):
        @pl.when(pl.program_id(1) == 0)
        def _init():
            sum_ref[...] = jnp.zeros_like(sum_ref)
            sq_ref[...] = jnp.zeros_like(sq_ref)
        r = jnp.maximum(y_ref[...].astype(jnp.float32) * sc_ref[...] + sh_ref[...], 0.0)
        sum_ref[...] += jnp.sum(r, axis=1, keepdims=True)
        sq_ref[...] += jnp.sum(r * r, axis=1, keepdims=True)

    psum2, psq2 = pl.pallas_call(
        relu_stats_kernel,
        out_shape=(
            jax.ShapeDtypeStruct((n, d, 1, wp), jnp.float32),
            jax.ShapeDtypeStruct((n, d, 1, wp), jnp.float32),
        ),
        grid=grid,
        in_specs=[y_block, full_spec((d, 1, 1)), full_spec((d, 1, 1))],
        out_specs=(stat_block, stat_block),
        compiler_params=reduce_params,
    )(y2, scale1, shift1)

    mean2 = jnp.sum(psum2, axis=(0, 2, 3)) / cnt
    var2 = jnp.maximum(jnp.sum(psq2, axis=(0, 2, 3)) / cnt - mean2 * mean2, 0.0)
    scale2_v = g2.astype(jnp.float32) * jax.lax.rsqrt(var2 + EPS)
    shift2_v = be2.astype(jnp.float32) - mean2 * scale2_v
    scale2 = scale2_v.reshape(d, 1, 1)
    shift2 = shift2_v.reshape(d, 1, 1)

    # ---------------- pass 3: out = BN2(ReLU(BN1(y2)))  (two FMAs + max) -------------------
    def apply_kernel(y_ref, sc1_ref, sh1_ref, sc2_ref, sh2_ref, o_ref):
        r = jnp.maximum(y_ref[...].astype(jnp.float32) * sc1_ref[...] + sh1_ref[...], 0.0)
        o_ref[...] = (r * sc2_ref[...] + sh2_ref[...]).astype(o_ref.dtype)

    out = pl.pallas_call(
        apply_kernel,
        out_shape=jax.ShapeDtypeStruct((n, d, hp, wp), x.dtype),
        grid=grid,
        in_specs=[y_block, full_spec((d, 1, 1)), full_spec((d, 1, 1)),
                  full_spec((d, 1, 1)), full_spec((d, 1, 1))],
        out_specs=y_block,
        compiler_params=pltpu.CompilerParams(
            dimension_semantics=("parallel", "parallel"),
            vmem_limit_bytes=vmem_limit),
    )(y2, scale1, shift1, scale2, shift2)

    return out


patch_embed_forward = jax.jit(_patch_embed_forward, static_argnums=(9,))


if __name__ == "__main__":
    key = jax.random.PRNGKey(0)
    ks = jax.random.split(key, 8)

    # PatchEmbed(img_size=16, patch_size=2, in_chans=4, embed_dim=2)
    N, C_IN, H, W = 2, 4, 16, 16
    P = 2
    EMBED = 2
    D = EMBED * 2            # proj out-channels == conv_ channels
    K = C_IN * P * P

    x = jax.random.normal(ks[0], (N, C_IN, H, W), dtype=jnp.float32)

    # proj: Conv2d(C_IN, D, kernel_size=P, stride=P)
    bound_p = 1.0 / (C_IN * P * P) ** 0.5
    w_proj = jax.random.uniform(ks[1], (D, C_IN, P, P), jnp.float32, -bound_p, bound_p)
    b_proj = jax.random.uniform(ks[2], (D,), jnp.float32, -bound_p, bound_p)

    # conv_: Conv2d(D, D, 1) + BatchNorm2d(D) + ReLU
    bound_c = 1.0 / D ** 0.5
    w_conv = jax.random.uniform(ks[3], (D, D, 1, 1), jnp.float32, -bound_c, bound_c)
    b_conv = jax.random.uniform(ks[4], (D,), jnp.float32, -bound_c, bound_c)
    g1 = 1.0 + 0.1 * jax.random.normal(ks[5], (D,), jnp.float32)
    be1 = 0.1 * jax.random.normal(ks[6], (D,), jnp.float32)

    # norm: BatchNorm2d(D)  (non-trivial affine to exercise the kernel)
    g2 = 1.0 + 0.1 * jax.random.normal(ks[7], (D,), jnp.float32)
    be2 = 0.05 * jnp.arange(D, dtype=jnp.float32)

    out = patch_embed_forward(x, w_proj, b_proj, w_conv, b_conv, g1, be1, g2, be2, P)
    jax.block_until_ready(out)

    # ---- pure-JAX f32 reference of the same (training-mode) semantics ----
    y1 = jax.lax.conv_general_dilated(
        x, w_proj, window_strides=(P, P), padding="VALID",
        dimension_numbers=("NCHW", "OIHW", "NCHW")) + b_proj[None, :, None, None]
    y2 = jnp.einsum("nchw,oc->nohw", y1, w_conv.reshape(D, D)) + b_conv[None, :, None, None]
    m1 = jnp.mean(y2, axis=(0, 2, 3), keepdims=True)
    v1 = jnp.mean((y2 - m1) ** 2, axis=(0, 2, 3), keepdims=True)
    r = jnp.maximum((y2 - m1) * jax.lax.rsqrt(v1 + EPS) * g1[None, :, None, None]
                    + be1[None, :, None, None], 0.0)
    m2 = jnp.mean(r, axis=(0, 2, 3), keepdims=True)
    v2 = jnp.mean((r - m2) ** 2, axis=(0, 2, 3), keepdims=True)
    ref = (r - m2) * jax.lax.rsqrt(v2 + EPS) * g2[None, :, None, None] + be2[None, :, None, None]

    assert out.shape == (N, D, H // P, W // P)
    # Tolerance covers the single bf16 rounding of x (weights stay f32, accumulation f32).
    err = float(jnp.max(jnp.abs(out - ref)))
    assert jnp.allclose(out, ref, atol=3e-2, rtol=3e-2), err

    print("KERNEL_OK")
</pallas_src>

<mosaic_0001>
module attributes {stable_mosaic.version = 11 : i64} {
  func.func @proj_stats_kernel(%arg0: i32, %arg1: i32, %arg2: memref<1x4x16x16xf32, #tpu.memory_space<vmem>>, %arg3: memref<64xf32, #tpu.memory_space<smem>>, %arg4: memref<2x8x16xbf16, #tpu.memory_space<vmem>>, %arg5: memref<2x16x8xbf16, #tpu.memory_space<vmem>>, %arg6: memref<1x4x8x8xbf16, #tpu.memory_space<vmem>>, %arg7: memref<1x4x1x8xf32, #tpu.memory_space<vmem>>, %arg8: memref<1x4x1x8xf32, #tpu.memory_space<vmem>>) attributes {dimension_semantics = [#tpu.dimension_semantics<parallel>, #tpu.dimension_semantics<arbitrary>], iteration_bounds = array<i64: 2, 1>, scalar_prefetch = 0 : i64, scratch_operands = 0 : i64, tpu.core_type = #tpu.core_type<tc>, window_params = [{transform_indices = @transform_0, window_bounds = array<i64: 1, 4, 16, 16>}, {transform_indices = @transform_1, window_bounds = array<i64: 64>}, {pipeline_mode = #tpu.pipeline_mode<synchronous>, transform_indices = @transform_2, window_bounds = array<i64: 2, 8, 16>}, {pipeline_mode = #tpu.pipeline_mode<synchronous>, transform_indices = @transform_3, window_bounds = array<i64: 2, 16, 8>}, {transform_indices = @transform_4, window_bounds = array<i64: 1, 4, 8, 8>}, {transform_indices = @transform_5, window_bounds = array<i64: 1, 4, 1, 8>}, {transform_indices = @transform_6, window_bounds = array<i64: 1, 4, 1, 8>}]} {
    %c0_i32 = arith.constant 0 : i32
    %0 = arith.cmpi eq, %arg1, %c0_i32 : i32
    %1 = arith.extui %0 : i1 to i32
    %c0_i32_0 = arith.constant 0 : i32
    %2 = arith.cmpi ne, %1, %c0_i32_0 : i32
    scf.if %2 {
      %cst_154 = arith.constant 0.000000e+00 : f32
      %391 = vector.broadcast %cst_154 : f32 to vector<4x1x8xf32>
      %c0_155 = arith.constant 0 : index
      %c0_156 = arith.constant 0 : index
      %c0_157 = arith.constant 0 : index
      %c0_158 = arith.constant 0 : index
      %392 = vector.load %arg7[%c0_155, %c0_156, %c0_157, %c0_158] : memref<1x4x1x8xf32, #tpu.memory_space<vmem>>, vector<1x4x1x8xf32>
      %393 = vector.shape_cast %392 : vector<1x4x1x8xf32> to vector<4x1x8xf32>
      %394 = vector.shape_cast %391 : vector<4x1x8xf32> to vector<1x4x1x8xf32>
      tpu.vector_store %arg7[%c0_155, %c0_156, %c0_157, %c0_158], %394 {strides = array<i32>} : memref<1x4x1x8xf32, #tpu.memory_space<vmem>>, vector<1x4x1x8xf32>,
      %cst_159 = arith.constant 0.000000e+00 : f32
      %395 = vector.broadcast %cst_159 : f32 to vector<4x1x8xf32>
      %c0_160 = arith.constant 0 : index
      %c0_161 = arith.constant 0 : index
      %c0_162 = arith.constant 0 : index
      %c0_163 = arith.constant 0 : index
      %396 = vector.load %arg8[%c0_160, %c0_161, %c0_162, %c0_163] : memref<1x4x1x8xf32, #tpu.memory_space<vmem>>, vector<1x4x1x8xf32>
      %397 = vector.shape_cast %396 : vector<1x4x1x8xf32> to vector<4x1x8xf32>
      %398 = vector.shape_cast %395 : vector<4x1x8xf32> to vector<1x4x1x8xf32>
      tpu.vector_store %arg8[%c0_160, %c0_161, %c0_162, %c0_163], %398 {strides = array<i32>} : memref<1x4x1x8xf32, #tpu.memory_space<vmem>>, vector<1x4x1x8xf32>,
    } else {
    }
    %cst = arith.constant 0.000000e+00 : f32
    %3 = vector.broadcast %cst : f32 to vector<8x8xf32>
    %cst_1 = arith.constant 0.000000e+00 : f32
    %4 = vector.broadcast %cst_1 : f32 to vector<8x8xf32>
    %cst_2 = arith.constant 0.000000e+00 : f32
    %5 = vector.broadcast %cst_2 : f32 to vector<8x8xf32>
    %cst_3 = arith.constant 0.000000e+00 : f32
    %6 = vector.broadcast %cst_3 : f32 to vector<8x8xf32>
    %c0 = arith.constant 0 : index
    %c0_4 = arith.constant 0 : index
    %c0_5 = arith.constant 0 : index
    %c0_6 = arith.constant 0 : index
    %7 = vector.load %arg2[%c0, %c0_4, %c0_5, %c0_6] : memref<1x4x16x16xf32, #tpu.memory_space<vmem>>, vector<1x1x16x16xf32>
    %8 = vector.shape_cast %7 : vector<1x1x16x16xf32> to vector<16x16xf32>
    %9 = arith.truncf %8 : vector<16x16xf32> to vector<16x16xbf16>
    %c0_7 = arith.constant 0 : index
    %c0_8 = arith.constant 0 : index
    %c0_9 = arith.constant 0 : index
    %10 = vector.load %arg4[%c0_7, %c0_8, %c0_9] : memref<2x8x16xbf16, #tpu.memory_space<vmem>>, vector<1x8x16xbf16>
    %11 = vector.shape_cast %10 : vector<1x8x16xbf16> to vector<8x16xbf16>
    %cst_10 = arith.constant dense<0.000000e+00> : vector<8x16xf32>
    %12 = tpu.matmul %11, %9, %cst_10 {dimension_numbers = #tpu.dot_dimension_numbers<[1], [0], [0], [1], [0, 0, 1, 1], [], []>} : vector<8x16xbf16>, vector<16x16xbf16>, vector<8x16xf32> -> vector<8x16xf32>
    %13 = arith.truncf %12 : vector<8x16xf32> to vector<8x16xbf16>
    %c0_11 = arith.constant 0 : index
    %c0_12 = arith.constant 0 : index
    %c0_13 = arith.constant 0 : index
    %14 = vector.load %arg5[%c0_11, %c0_12, %c0_13] : memref<2x16x8xbf16, #tpu.memory_space<vmem>>, vector<1x16x8xbf16>
    %15 = vector.shape_cast %14 : vector<1x16x8xbf16> to vector<16x8xbf16>
    %cst_14 = arith.constant dense<0.000000e+00> : vector<8x8xf32>
    %16 = tpu.matmul %13, %15, %cst_14 {dimension_numbers = #tpu.dot_dimension_numbers<[1], [0], [0], [1], [0, 0, 1, 1], [], []>} : vector<8x16xbf16>, vector<16x8xbf16>, vector<8x8xf32> -> vector<8x8xf32>
    %c0_15 = arith.constant 0 : index
    %17 = memref.load %arg3[%c0_15] : memref<64xf32, #tpu.memory_space<smem>>
    %18 = vector.broadcast %17 : f32 to vector<8x8xf32>
    %19 = arith.mulf %18, %16 : vector<8x8xf32>
    %20 = arith.addf %3, %19 : vector<8x8xf32>
    %c16 = arith.constant 16 : index
    %21 = memref.load %arg3[%c16] : memref<64xf32, #tpu.memory_space<smem>>
    %22 = vector.broadcast %21 : f32 to vector<8x8xf32>
    %23 = arith.mulf %22, %16 : vector<8x8xf32>
    %24 = arith.addf %4, %23 : vector<8x8xf32>
    %c32 = arith.constant 32 : index
    %25 = memref.load %arg3[%c32] : memref<64xf32, #tpu.memory_space<smem>>
    %26 = vector.broadcast %25 : f32 to vector<8x8xf32>
    %27 = arith.mulf %26, %16 : vector<8x8xf32>
    %28 = arith.addf %5, %27 : vector<8x8xf32>
    %c48 = arith.constant 48 : index
    %29 = memref.load %arg3[%c48] : memref<64xf32, #tpu.memory_space<smem>>
    %30 = vector.broadcast %29 : f32 to vector<8x8xf32>
    %31 = arith.mulf %30, %16 : vector<8x8xf32>
    %32 = arith.addf %6, %31 : vector<8x8xf32>
    %c1 = arith.constant 1 : index
    %c0_16 = arith.constant 0 : index
    %c0_17 = arith.constant 0 : index
    %33 = vector.load %arg5[%c1, %c0_16, %c0_17] : memref<2x16x8xbf16, #tpu.memory_space<vmem>>, vector<1x16x8xbf16>
    %34 = vector.shape_cast %33 : vector<1x16x8xbf16> to vector<16x8xbf16>
    %cst_18 = arith.constant dense<0.000000e+00> : vector<8x8xf32>
    %35 = tpu.matmul %13, %34, %cst_18 {dimension_numbers = #tpu.dot_dimension_numbers<[1], [0], [0], [1], [0, 0, 1, 1], [], []>} : vector<8x16xbf16>, vector<16x8xbf16>, vector<8x8xf32> -> vector<8x8xf32>
    %c1_19 = arith.constant 1 : index
    %36 = memref.load %arg3[%c1_19] : memref<64xf32, #tpu.memory_space<smem>>
    %37 = vector.broadcast %36 : f32 to vector<8x8xf32>
    %38 = arith.mulf %37, %35 : vector<8x8xf32>
    %39 = arith.addf %20, %38 : vector<8x8xf32>
    %c17 = arith.constant 17 : index
    %40 = memref.load %arg3[%c17] : memref<64xf32, #tpu.memory_space<smem>>
    %41 = vector.broadcast %40 : f32 to vector<8x8xf32>
    %42 = arith.mulf %41, %35 : vector<8x8xf32>
    %43 = arith.addf %24, %42 : vector<8x8xf32>
    %c33 = arith.constant 33 : index
    %44 = memref.load %arg3[%c33] : memref<64xf32, #tpu.memory_space<smem>>
    %45 = vector.broadcast %44 : f32 to vector<8x8xf32>
    %46 = arith.mulf %45, %35 : vector<8x8xf32>
    %47 = arith.addf %28, %46 : vector<8x8xf32>
    %c49 = arith.constant 49 : index
    %48 = memref.load %arg3[%c49] : memref<64xf32, #tpu.memory_space<smem>>
    %49 = vector.broadcast %48 : f32 to vector<8x8xf32>
    %50 = arith.mulf %49, %35 : vector<8x8xf32>
    %51 = arith.addf %32, %50 : vector<8x8xf32>
    %c1_20 = arith.constant 1 : index
    %c0_21 = arith.constant 0 : index
    %c0_22 = arith.constant 0 : index
    %52 = vector.load %arg4[%c1_20, %c0_21, %c0_22] : memref<2x8x16xbf16, #tpu.memory_space<vmem>>, vector<1x8x16xbf16>
    %53 = vector.shape_cast %52 : vector<1x8x16xbf16> to vector<8x16xbf16>
    %cst_23 = arith.constant dense<0.000000e+00> : vector<8x16xf32>
    %54 = tpu.matmul %53, %9, %cst_23 {dimension_numbers = #tpu.dot_dimension_numbers<[1], [0], [0], [1], [0, 0, 1, 1], [], []>} : vector<8x16xbf16>, vector<16x16xbf16>, vector<8x16xf32> -> vector<8x16xf32>
    %55 = arith.truncf %54 : vector<8x16xf32> to vector<8x16xbf16>
    %c0_24 = arith.constant 0 : index
    %c0_25 = arith.constant 0 : index
    %c0_26 = arith.constant 0 : index
    %56 = vector.load %arg5[%c0_24, %c0_25, %c0_26] : memref<2x16x8xbf16, #tpu.memory_space<vmem>>, vector<1x16x8xbf16>
    %57 = vector.shape_cast %56 : vector<1x16x8xbf16> to vector<16x8xbf16>
    %cst_27 = arith.constant dense<0.000000e+00> : vector<8x8xf32>
    %58 = tpu.matmul %55, %57, %cst_27 {dimension_numbers = #tpu.dot_dimension_numbers<[1], [0], [0], [1], [0, 0, 1, 1], [], []>} : vector<8x16xbf16>, vector<16x8xbf16>, vector<8x8xf32> -> vector<8x8xf32>
    %c2 = arith.constant 2 : index
    %59 = memref.load %arg3[%c2] : memref<64xf32, #tpu.memory_space<smem>>
    %60 = vector.broadcast %59 : f32 to vector<8x8xf32>
    %61 = arith.mulf %60, %58 : vector<8x8xf32>
    %62 = arith.addf %39, %61 : vector<8x8xf32>
    %c18 = arith.constant 18 : index
    %63 = memref.load %arg3[%c18] : memref<64xf32, #tpu.memory_space<smem>>
    %64 = vector.broadcast %63 : f32 to vector<8x8xf32>
    %65 = arith.mulf %64, %58 : vector<8x8xf32>
    %66 = arith.addf %43, %65 : vector<8x8xf32>
    %c34 = arith.constant 34 : index
    %67 = memref.load %arg3[%c34] : memref<64xf32, #tpu.memory_space<smem>>
    %68 = vector.broadcast %67 : f32 to vector<8x8xf32>
    %69 = arith.mulf %68, %58 : vector<8x8xf32>
    %70 = arith.addf %47, %69 : vector<8x8xf32>
    %c50 = arith.constant 50 : index
    %71 = memref.load %arg3[%c50] : memref<64xf32, #tpu.memory_space<smem>>
    %72 = vector.broadcast %71 : f32 to vector<8x8xf32>
    %73 = arith.mulf %72, %58 : vector<8x8xf32>
    %74 = arith.addf %51, %73 : vector<8x8xf32>
    %c1_28 = arith.constant 1 : index
    %c0_29 = arith.constant 0 : index
    %c0_30 = arith.constant 0 : index
    %75 = vector.load %arg5[%c1_28, %c0_29, %c0_30] : memref<2x16x8xbf16, #tpu.memory_space<vmem>>, vector<1x16x8xbf16>
    %76 = vector.shape_cast %75 : vector<1x16x8xbf16> to vector<16x8xbf16>
    %cst_31 = arith.constant dense<0.000000e+00> : vector<8x8xf32>
    %77 = tpu.matmul %55, %76, %cst_31 {dimension_numbers = #tpu.dot_dimension_numbers<[1], [0], [0], [1], [0, 0, 1, 1], [], []>} : vector<8x16xbf16>, vector<16x8xbf16>, vector<8x8xf32> -> vector<8x8xf32>
    %c3 = arith.constant 3 : index
    %78 = memref.load %arg3[%c3] : memref<64xf32, #tpu.memory_space<smem>>
    %79 = vector.broadcast %78 : f32 to vector<8x8xf32>
    %80 = arith.mulf %79, %77 : vector<8x8xf32>
    %81 = arith.addf %62, %80 : vector<8x8xf32>
    %c19 = arith.constant 19 : index
    %82 = memref.load %arg3[%c19] : memref<64xf32, #tpu.memory_space<smem>>
    %83 = vector.broadcast %82 : f32 to vector<8x8xf32>
    %84 = arith.mulf %83, %77 : vector<8x8xf32>
    %85 = arith.addf %66, %84 : vector<8x8xf32>
    %c35 = arith.constant 35 : index
    %86 = memref.load %arg3[%c35] : memref<64xf32, #tpu.memory_space<smem>>
    %87 = vector.broadcast %86 : f32 to vector<8x8xf32>
    %88 = arith.mulf %87, %77 : vector<8x8xf32>
    %89 = arith.addf %70, %88 : vector<8x8xf32>
    %c51 = arith.constant 51 : index
    %90 = memref.load %arg3[%c51] : memref<64xf32, #tpu.memory_space<smem>>
    %91 = vector.broadcast %90 : f32 to vector<8x8xf32>
    %92 = arith.mulf %91, %77 : vector<8x8xf32>
    %93 = arith.addf %74, %92 : vector<8x8xf32>
    %c0_32 = arith.constant 0 : index
    %c1_33 = arith.constant 1 : index
    %c0_34 = arith.constant 0 : index
    %c0_35 = arith.constant 0 : index
    %94 = vector.load %arg2[%c0_32, %c1_33, %c0_34, %c0_35] : memref<1x4x16x16xf32, #tpu.memory_space<vmem>>, vector<1x1x16x16xf32>
    %95 = vector.shape_cast %94 : vector<1x1x16x16xf32> to vector<16x16xf32>
    %96 = arith.truncf %95 : vector<16x16xf32> to vector<16x16xbf16>
    %c0_36 = arith.constant 0 : index
    %c0_37 = arith.constant 0 : index
    %c0_38 = arith.constant 0 : index
    %97 = vector.load %arg4[%c0_36, %c0_37, %c0_38] : memref<2x8x16xbf16, #tpu.memory_space<vmem>>, vector<1x8x16xbf16>
    %98 = vector.shape_cast %97 : vector<1x8x16xbf16> to vector<8x16xbf16>
    %cst_39 = arith.constant dense<0.000000e+00> : vector<8x16xf32>
    %99 = tpu.matmul %98, %96, %cst_39 {dimension_numbers = #tpu.dot_dimension_numbers<[1], [0], [0], [1], [0, 0, 1, 1], [], []>} : vector<8x16xbf16>, vector<16x16xbf16>, vector<8x16xf32> -> vector<8x16xf32>
    %100 = arith.truncf %99 : vector<8x16xf32> to vector<8x16xbf16>
    %c0_40 = arith.constant 0 : index
    %c0_41 = arith.constant 0 : index
    %c0_42 = arith.constant 0 : index
    %101 = vector.load %arg5[%c0_40, %c0_41, %c0_42] : memref<2x16x8xbf16, #tpu.memory_space<vmem>>, vector<1x16x8xbf16>
    %102 = vector.shape_cast %101 : vector<1x16x8xbf16> to vector<16x8xbf16>
    %cst_43 = arith.constant dense<0.000000e+00> : vector<8x8xf32>
    %103 = tpu.matmul %100, %102, %cst_43 {dimension_numbers = #tpu.dot_dimension_numbers<[1], [0], [0], [1], [0, 0, 1, 1], [], []>} : vector<8x16xbf16>, vector<16x8xbf16>, vector<8x8xf32> -> vector<8x8xf32>
    %c4 = arith.constant 4 : index
    %104 = memref.load %arg3[%c4] : memref<64xf32, #tpu.memory_space<smem>>
    %105 = vector.broadcast %104 : f32 to vector<8x8xf32>
    %106 = arith.mulf %105, %103 : vector<8x8xf32>
    %107 = arith.addf %81, %106 : vector<8x8xf32>
    %c20 = arith.constant 20 : index
    %108 = memref.load %arg3[%c20] : memref<64xf32, #tpu.memory_space<smem>>
    %109 = vector.broadcast %108 : f32 to vector<8x8xf32>
    %110 = arith.mulf %109, %103 : vector<8x8xf32>
    %111 = arith.addf %85, %110 : vector<8x8xf32>
    %c36 = arith.constant 36 : index
    %112 = memref.load %arg3[%c36] : memref<64xf32, #tpu.memory_space<smem>>
    %113 = vector.broadcast %112 : f32 to vector<8x8xf32>
    %114 = arith.mulf %113, %103 : vector<8x8xf32>
    %115 = arith.addf %89, %114 : vector<8x8xf32>
    %c52 = arith.constant 52 : index
    %116 = memref.load %arg3[%c52] : memref<64xf32, #tpu.memory_space<smem>>
    %117 = vector.broadcast %116 : f32 to vector<8x8xf32>
    %118 = arith.mulf %117, %103 : vector<8x8xf32>
    %119 = arith.addf %93, %118 : vector<8x8xf32>
    %c1_44 = arith.constant 1 : index
    %c0_45 = arith.constant 0 : index
    %c0_46 = arith.constant 0 : index
    %120 = vector.load %arg5[%c1_44, %c0_45, %c0_46] : memref<2x16x8xbf16, #tpu.memory_space<vmem>>, vector<1x16x8xbf16>
    %121 = vector.shape_cast %120 : vector<1x16x8xbf16> to vector<16x8xbf16>
    %cst_47 = arith.constant dense<0.000000e+00> : vector<8x8xf32>
    %122 = tpu.matmul %100, %121, %cst_47 {dimension_numbers = #tpu.dot_dimension_numbers<[1], [0], [0], [1], [0, 0, 1, 1], [], []>} : vector<8x16xbf16>, vector<16x8xbf16>, vector<8x8xf32> -> vector<8x8xf32>
    %c5 = arith.constant 5 : index
    %123 = memref.load %arg3[%c5] : memref<64xf32, #tpu.memory_space<smem>>
    %124 = vector.broadcast %123 : f32 to vector<8x8xf32>
    %125 = arith.mulf %124, %122 : vector<8x8xf32>
    %126 = arith.addf %107, %125 : vector<8x8xf32>
    %c21 = arith.constant 21 : index
    %127 = memref.load %arg3[%c21] : memref<64xf32, #tpu.memory_space<smem>>
    %128 = vector.broadcast %127 : f32 to vector<8x8xf32>
    %129 = arith.mulf %128, %122 : vector<8x8xf32>
    %130 = arith.addf %111, %129 : vector<8x8xf32>
    %c37 = arith.constant 37 : index
    %131 = memref.load %arg3[%c37] : memref<64xf32, #tpu.memory_space<smem>>
    %132 = vector.broadcast %131 : f32 to vector<8x8xf32>
    %133 = arith.mulf %132, %122 : vector<8x8xf32>
    %134 = arith.addf %115, %133 : vector<8x8xf32>
    %c53 = arith.constant 53 : index
    %135 = memref.load %arg3[%c53] : memref<64xf32, #tpu.memory_space<smem>>
    %136 = vector.broadcast %135 : f32 to vector<8x8xf32>
    %137 = arith.mulf %136, %122 : vector<8x8xf32>
    %138 = arith.addf %119, %137 : vector<8x8xf32>
    %c1_48 = arith.constant 1 : index
    %c0_49 = arith.constant 0 : index
    %c0_50 = arith.constant 0 : index
    %139 = vector.load %arg4[%c1_48, %c0_49, %c0_50] : memref<2x8x16xbf16, #tpu.memory_space<vmem>>, vector<1x8x16xbf16>
    %140 = vector.shape_cast %139 : vector<1x8x16xbf16> to vector<8x16xbf16>
    %cst_51 = arith.constant dense<0.000000e+00> : vector<8x16xf32>
    %141 = tpu.matmul %140, %96, %cst_51 {dimension_numbers = #tpu.dot_dimension_numbers<[1], [0], [0], [1], [0, 0, 1, 1], [], []>} : vector<8x16xbf16>, vector<16x16xbf16>, vector<8x16xf32> -> vector<8x16xf32>
    %142 = arith.truncf %141 : vector<8x16xf32> to vector<8x16xbf16>
    %c0_52 = arith.constant 0 : index
    %c0_53 = arith.constant 0 : index
    %c0_54 = arith.constant 0 : index
    %143 = vector.load %arg5[%c0_52, %c0_53, %c0_54] : memref<2x16x8xbf16, #tpu.memory_space<vmem>>, vector<1x16x8xbf16>
    %144 = vector.shape_cast %143 : vector<1x16x8xbf16> to vector<16x8xbf16>
    %cst_55 = arith.constant dense<0.000000e+00> : vector<8x8xf32>
    %145 = tpu.matmul %142, %144, %cst_55 {dimension_numbers = #tpu.dot_dimension_numbers<[1], [0], [0], [1], [0, 0, 1, 1], [], []>} : vector<8x16xbf16>, vector<16x8xbf16>, vector<8x8xf32> -> vector<8x8xf32>
    %c6 = arith.constant 6 : index
    %146 = memref.load %arg3[%c6] : memref<64xf32, #tpu.memory_space<smem>>
    %147 = vector.broadcast %146 : f32 to vector<8x8xf32>
    %148 = arith.mulf %147, %145 : vector<8x8xf32>
    %149 = arith.addf %126, %148 : vector<8x8xf32>
    %c22 = arith.constant 22 : index
    %150 = memref.load %arg3[%c22] : memref<64xf32, #tpu.memory_space<smem>>
    %151 = vector.broadcast %150 : f32 to vector<8x8xf32>
    %152 = arith.mulf %151, %145 : vector<8x8xf32>
    %153 = arith.addf %130, %152 : vector<8x8xf32>
    %c38 = arith.constant 38 : index
    %154 = memref.load %arg3[%c38] : memref<64xf32, #tpu.memory_space<smem>>
    %155 = vector.broadcast %154 : f32 to vector<8x8xf32>
    %156 = arith.mulf %155, %145 : vector<8x8xf32>
    %157 = arith.addf %134, %156 : vector<8x8xf32>
    %c54 = arith.constant 54 : index
    %158 = memref.load %arg3[%c54] : memref<64xf32, #tpu.memory_space<smem>>
    %159 = vector.broadcast %158 : f32 to vector<8x8xf32>
    %160 = arith.mulf %159, %145 : vector<8x8xf32>
    %161 = arith.addf %138, %160 : vector<8x8xf32>
    %c1_56 = arith.constant 1 : index
    %c0_57 = arith.constant 0 : index
    %c0_58 = arith.constant 0 : index
    %162 = vector.load %arg5[%c1_56, %c0_57, %c0_58] : memref<2x16x8xbf16, #tpu.memory_space<vmem>>, vector<1x16x8xbf16>
    %163 = vector.shape_cast %162 : vector<1x16x8xbf16> to vector<16x8xbf16>
    %cst_59 = arith.constant dense<0.000000e+00> : vector<8x8xf32>
    %164 = tpu.matmul %142, %163, %cst_59 {dimension_numbers = #tpu.dot_dimension_numbers<[1], [0], [0], [1], [0, 0, 1, 1], [], []>} : vector<8x16xbf16>, vector<16x8xbf16>, vector<8x8xf32> -> vector<8x8xf32>
    %c7 = arith.constant 7 : index
    %165 = memref.load %arg3[%c7] : memref<64xf32, #tpu.memory_space<smem>>
    %166 = vector.broadcast %165 : f32 to vector<8x8xf32>
    %167 = arith.mulf %166, %164 : vector<8x8xf32>
    %168 = arith.addf %149, %167 : vector<8x8xf32>
    %c23 = arith.constant 23 : index
    %169 = memref.load %arg3[%c23] : memref<64xf32, #tpu.memory_space<smem>>
    %170 = vector.broadcast %169 : f32 to vector<8x8xf32>
    %171 = arith.mulf %170, %164 : vector<8x8xf32>
    %172 = arith.addf %153, %171 : vector<8x8xf32>
    %c39 = arith.constant 39 : index
    %173 = memref.load %arg3[%c39] : memref<64xf32, #tpu.memory_space<smem>>
    %174 = vector.broadcast %173 : f32 to vector<8x8xf32>
    %175 = arith.mulf %174, %164 : vector<8x8xf32>
    %176 = arith.addf %157, %175 : vector<8x8xf32>
    %c55 = arith.constant 55 : index
    %177 = memref.load %arg3[%c55] : memref<64xf32, #tpu.memory_space<smem>>
    %178 = vector.broadcast %177 : f32 to vector<8x8xf32>
    %179 = arith.mulf %178, %164 : vector<8x8xf32>
    %180 = arith.addf %161, %179 : vector<8x8xf32>
    %c0_60 = arith.constant 0 : index
    %c2_61 = arith.constant 2 : index
    %c0_62 = arith.constant 0 : index
    %c0_63 = arith.constant 0 : index
    %181 = vector.load %arg2[%c0_60, %c2_61, %c0_62, %c0_63] : memref<1x4x16x16xf32, #tpu.memory_space<vmem>>, vector<1x1x16x16xf32>
    %182 = vector.shape_cast %181 : vector<1x1x16x16xf32> to vector<16x16xf32>
    %183 = arith.truncf %182 : vector<16x16xf32> to vector<16x16xbf16>
    %c0_64 = arith.constant 0 : index
    %c0_65 = arith.constant 0 : index
    %c0_66 = arith.constant 0 : index
    %184 = vector.load %arg4[%c0_64, %c0_65, %c0_66] : memref<2x8x16xbf16, #tpu.memory_space<vmem>>, vector<1x8x16xbf16>
    %185 = vector.shape_cast %184 : vector<1x8x16xbf16> to vector<8x16xbf16>
    %cst_67 = arith.constant dense<0.000000e+00> : vector<8x16xf32>
    %186 = tpu.matmul %185, %183, %cst_67 {dimension_numbers = #tpu.dot_dimension_numbers<[1], [0], [0], [1], [0, 0, 1, 1], [], []>} : vector<8x16xbf16>, vector<16x16xbf16>, vector<8x16xf32> -> vector<8x16xf32>
    %187 = arith.truncf %186 : vector<8x16xf32> to vector<8x16xbf16>
    %c0_68 = arith.constant 0 : index
    %c0_69 = arith.constant 0 : index
    %c0_70 = arith.constant 0 : index
    %188 = vector.load %arg5[%c0_68, %c0_69, %c0_70] : memref<2x16x8xbf16, #tpu.memory_space<vmem>>, vector<1x16x8xbf16>
    %189 = vector.shape_cast %188 : vector<1x16x8xbf16> to vector<16x8xbf16>
    %cst_71 = arith.constant dense<0.000000e+00> : vector<8x8xf32>
    %190 = tpu.matmul %187, %189, %cst_71 {dimension_numbers = #tpu.dot_dimension_numbers<[1], [0], [0], [1], [0, 0, 1, 1], [], []>} : vector<8x16xbf16>, vector<16x8xbf16>, vector<8x8xf32> -> vector<8x8xf32>
    %c8 = arith.constant 8 : index
    %191 = memref.load %arg3[%c8] : memref<64xf32, #tpu.memory_space<smem>>
    %192 = vector.broadcast %191 : f32 to vector<8x8xf32>
    %193 = arith.mulf %192, %190 : vector<8x8xf32>
    %194 = arith.addf %168, %193 : vector<8x8xf32>
    %c24 = arith.constant 24 : index
    %195 = memref.load %arg3[%c24] : memref<64xf32, #tpu.memory_space<smem>>
    %196 = vector.broadcast %195 : f32 to vector<8x8xf32>
    %197 = arith.mulf %196, %190 : vector<8x8xf32>
    %198 = arith.addf %172, %197 : vector<8x8xf32>
    %c40 = arith.constant 40 : index
    %199 = memref.load %arg3[%c40] : memref<64xf32, #tpu.memory_space<smem>>
    %200 = vector.broadcast %199 : f32 to vector<8x8xf32>
    %201 = arith.mulf %200, %190 : vector<8x8xf32>
    %202 = arith.addf %176, %201 : vector<8x8xf32>
    %c56 = arith.constant 56 : index
    %203 = memref.load %arg3[%c56] : memref<64xf32, #tpu.memory_space<smem>>
    %204 = vector.broadcast %203 : f32 to vector<8x8xf32>
    %205 = arith.mulf %204, %190 : vector<8x8xf32>
    %206 = arith.addf %180, %205 : vector<8x8xf32>
    %c1_72 = arith.constant 1 : index
    %c0_73 = arith.constant 0 : index
    %c0_74 = arith.constant 0 : index
    %207 = vector.load %arg5[%c1_72, %c0_73, %c0_74] : memref<2x16x8xbf16, #tpu.memory_space<vmem>>, vector<1x16x8xbf16>
    %208 = vector.shape_cast %207 : vector<1x16x8xbf16> to vector<16x8xbf16>
    %cst_75 = arith.constant dense<0.000000e+00> : vector<8x8xf32>
    %209 = tpu.matmul %187, %208, %cst_75 {dimension_numbers = #tpu.dot_dimension_numbers<[1], [0], [0], [1], [0, 0, 1, 1], [], []>} : vector<8x16xbf16>, vector<16x8xbf16>, vector<8x8xf32> -> vector<8x8xf32>
    %c9 = arith.constant 9 : index
    %210 = memref.load %arg3[%c9] : memref<64xf32, #tpu.memory_space<smem>>
    %211 = vector.broadcast %210 : f32 to vector<8x8xf32>
    %212 = arith.mulf %211, %209 : vector<8x8xf32>
    %213 = arith.addf %194, %212 : vector<8x8xf32>
    %c25 = arith.constant 25 : index
    %214 = memref.load %arg3[%c25] : memref<64xf32, #tpu.memory_space<smem>>
    %215 = vector.broadcast %214 : f32 to vector<8x8xf32>
    %216 = arith.mulf %215, %209 : vector<8x8xf32>
    %217 = arith.addf %198, %216 : vector<8x8xf32>
    %c41 = arith.constant 41 : index
    %218 = memref.load %arg3[%c41] : memref<64xf32, #tpu.memory_space<smem>>
    %219 = vector.broadcast %218 : f32 to vector<8x8xf32>
    %220 = arith.mulf %219, %209 : vector<8x8xf32>
    %221 = arith.addf %202, %220 : vector<8x8xf32>
    %c57 = arith.constant 57 : index
    %222 = memref.load %arg3[%c57] : memref<64xf32, #tpu.memory_space<smem>>
    %223 = vector.broadcast %222 : f32 to vector<8x8xf32>
    %224 = arith.mulf %223, %209 : vector<8x8xf32>
    %225 = arith.addf %206, %224 : vector<8x8xf32>
    %c1_76 = arith.constant 1 : index
    %c0_77 = arith.constant 0 : index
    %c0_78 = arith.constant 0 : index
    %226 = vector.load %arg4[%c1_76, %c0_77, %c0_78] : memref<2x8x16xbf16, #tpu.memory_space<vmem>>, vector<1x8x16xbf16>
    %227 = vector.shape_cast %226 : vector<1x8x16xbf16> to vector<8x16xbf16>
    %cst_79 = arith.constant dense<0.000000e+00> : vector<8x16xf32>
    %228 = tpu.matmul %227, %183, %cst_79 {dimension_numbers = #tpu.dot_dimension_numbers<[1], [0], [0], [1], [0, 0, 1, 1], [], []>} : vector<8x16xbf16>, vector<16x16xbf16>, vector<8x16xf32> -> vector<8x16xf32>
    %229 = arith.truncf %228 : vector<8x16xf32> to vector<8x16xbf16>
    %c0_80 = arith.constant 0 : index
    %c0_81 = arith.constant 0 : index
    %c0_82 = arith.constant 0 : index
    %230 = vector.load %arg5[%c0_80, %c0_81, %c0_82] : memref<2x16x8xbf16, #tpu.memory_space<vmem>>, vector<1x16x8xbf16>
    %231 = vector.shape_cast %230 : vector<1x16x8xbf16> to vector<16x8xbf16>
    %cst_83 = arith.constant dense<0.000000e+00> : vector<8x8xf32>
    %232 = tpu.matmul %229, %231, %cst_83 {dimension_numbers = #tpu.dot_dimension_numbers<[1], [0], [0], [1], [0, 0, 1, 1], [], []>} : vector<8x16xbf16>, vector<16x8xbf16>, vector<8x8xf32> -> vector<8x8xf32>
    %c10 = arith.constant 10 : index
    %233 = memref.load %arg3[%c10] : memref<64xf32, #tpu.memory_space<smem>>
    %234 = vector.broadcast %233 : f32 to vector<8x8xf32>
    %235 = arith.mulf %234, %232 : vector<8x8xf32>
    %236 = arith.addf %213, %235 : vector<8x8xf32>
    %c26 = arith.constant 26 : index
    %237 = memref.load %arg3[%c26] : memref<64xf32, #tpu.memory_space<smem>>
    %238 = vector.broadcast %237 : f32 to vector<8x8xf32>
    %239 = arith.mulf %238, %232 : vector<8x8xf32>
    %240 = arith.addf %217, %239 : vector<8x8xf32>
    %c42 = arith.constant 42 : index
    %241 = memref.load %arg3[%c42] : memref<64xf32, #tpu.memory_space<smem>>
    %242 = vector.broadcast %241 : f32 to vector<8x8xf32>
    %243 = arith.mulf %242, %232 : vector<8x8xf32>
    %244 = arith.addf %221, %243 : vector<8x8xf32>
    %c58 = arith.constant 58 : index
    %245 = memref.load %arg3[%c58] : memref<64xf32, #tpu.memory_space<smem>>
    %246 = vector.broadcast %245 : f32 to vector<8x8xf32>
    %247 = arith.mulf %246, %232 : vector<8x8xf32>
    %248 = arith.addf %225, %247 : vector<8x8xf32>
    %c1_84 = arith.constant 1 : index
    %c0_85 = arith.constant 0 : index
    %c0_86 = arith.constant 0 : index
    %249 = vector.load %arg5[%c1_84, %c0_85, %c0_86] : memref<2x16x8xbf16, #tpu.memory_space<vmem>>, vector<1x16x8xbf16>
    %250 = vector.shape_cast %249 : vector<1x16x8xbf16> to vector<16x8xbf16>
    %cst_87 = arith.constant dense<0.000000e+00> : vector<8x8xf32>
    %251 = tpu.matmul %229, %250, %cst_87 {dimension_numbers = #tpu.dot_dimension_numbers<[1], [0], [0], [1], [0, 0, 1, 1], [], []>} : vector<8x16xbf16>, vector<16x8xbf16>, vector<8x8xf32> -> vector<8x8xf32>
    %c11 = arith.constant 11 : index
    %252 = memref.load %arg3[%c11] : memref<64xf32, #tpu.memory_space<smem>>
    %253 = vector.broadcast %252 : f32 to vector<8x8xf32>
    %254 = arith.mulf %253, %251 : vector<8x8xf32>
    %255 = arith.addf %236, %254 : vector<8x8xf32>
    %c27 = arith.constant 27 : index
    %256 = memref.load %arg3[%c27] : memref<64xf32, #tpu.memory_space<smem>>
    %257 = vector.broadcast %256 : f32 to vector<8x8xf32>
    %258 = arith.mulf %257, %251 : vector<8x8xf32>
    %259 = arith.addf %240, %258 : vector<8x8xf32>
    %c43 = arith.constant 43 : index
    %260 = memref.load %arg3[%c43] : memref<64xf32, #tpu.memory_space<smem>>
    %261 = vector.broadcast %260 : f32 to vector<8x8xf32>
    %262 = arith.mulf %261, %251 : vector<8x8xf32>
    %263 = arith.addf %244, %262 : vector<8x8xf32>
    %c59 = arith.constant 59 : index
    %264 = memref.load %arg3[%c59] : memref<64xf32, #tpu.memory_space<smem>>
    %265 = vector.broadcast %264 : f32 to vector<8x8xf32>
    %266 = arith.mulf %265, %251 : vector<8x8xf32>
    %267 = arith.addf %248, %266 : vector<8x8xf32>
    %c0_88 = arith.constant 0 : index
    %c3_89 = arith.constant 3 : index
    %c0_90 = arith.constant 0 : index
    %c0_91 = arith.constant 0 : index
    %268 = vector.load %arg2[%c0_88, %c3_89, %c0_90, %c0_91] : memref<1x4x16x16xf32, #tpu.memory_space<vmem>>, vector<1x1x16x16xf32>
    %269 = vector.shape_cast %268 : vector<1x1x16x16xf32> to vector<16x16xf32>
    %270 = arith.truncf %269 : vector<16x16xf32> to vector<16x16xbf16>
    %c0_92 = arith.constant 0 : index
    %c0_93 = arith.constant 0 : index
    %c0_94 = arith.constant 0 : index
    %271 = vector.load %arg4[%c0_92, %c0_93, %c0_94] : memref<2x8x16xbf16, #tpu.memory_space<vmem>>, vector<1x8x16xbf16>
    %272 = vector.shape_cast %271 : vector<1x8x16xbf16> to vector<8x16xbf16>
    %cst_95 = arith.constant dense<0.000000e+00> : vector<8x16xf32>
    %273 = tpu.matmul %272, %270, %cst_95 {dimension_numbers = #tpu.dot_dimension_numbers<[1], [0], [0], [1], [0, 0, 1, 1], [], []>} : vector<8x16xbf16>, vector<16x16xbf16>, vector<8x16xf32> -> vector<8x16xf32>
    %274 = arith.truncf %273 : vector<8x16xf32> to vector<8x16xbf16>
    %c0_96 = arith.constant 0 : index
    %c0_97 = arith.constant 0 : index
    %c0_98 = arith.constant 0 : index
    %275 = vector.load %arg5[%c0_96, %c0_97, %c0_98] : memref<2x16x8xbf16, #tpu.memory_space<vmem>>, vector<1x16x8xbf16>
    %276 = vector.shape_cast %275 : vector<1x16x8xbf16> to vector<16x8xbf16>
    %cst_99 = arith.constant dense<0.000000e+00> : vector<8x8xf32>
    %277 = tpu.matmul %274, %276, %cst_99 {dimension_numbers = #tpu.dot_dimension_numbers<[1], [0], [0], [1], [0, 0, 1, 1], [], []>} : vector<8x16xbf16>, vector<16x8xbf16>, vector<8x8xf32> -> vector<8x8xf32>
    %c12 = arith.constant 12 : index
    %278 = memref.load %arg3[%c12] : memref<64xf32, #tpu.memory_space<smem>>
    %279 = vector.broadcast %278 : f32 to vector<8x8xf32>
    %280 = arith.mulf %279, %277 : vector<8x8xf32>
    %281 = arith.addf %255, %280 : vector<8x8xf32>
    %c28 = arith.constant 28 : index
    %282 = memref.load %arg3[%c28] : memref<64xf32, #tpu.memory_space<smem>>
    %283 = vector.broadcast %282 : f32 to vector<8x8xf32>
    %284 = arith.mulf %283, %277 : vector<8x8xf32>
    %285 = arith.addf %259, %284 : vector<8x8xf32>
    %c44 = arith.constant 44 : index
    %286 = memref.load %arg3[%c44] : memref<64xf32, #tpu.memory_space<smem>>
    %287 = vector.broadcast %286 : f32 to vector<8x8xf32>
    %288 = arith.mulf %287, %277 : vector<8x8xf32>
    %289 = arith.addf %263, %288 : vector<8x8xf32>
    %c60 = arith.constant 60 : index
    %290 = memref.load %arg3[%c60] : memref<64xf32, #tpu.memory_space<smem>>
    %291 = vector.broadcast %290 : f32 to vector<8x8xf32>
    %292 = arith.mulf %291, %277 : vector<8x8xf32>
    %293 = arith.addf %267, %292 : vector<8x8xf32>
    %c1_100 = arith.constant 1 : index
    %c0_101 = arith.constant 0 : index
    %c0_102 = arith.constant 0 : index
    %294 = vector.load %arg5[%c1_100, %c0_101, %c0_102] : memref<2x16x8xbf16, #tpu.memory_space<vmem>>, vector<1x16x8xbf16>
    %295 = vector.shape_cast %294 : vector<1x16x8xbf16> to vector<16x8xbf16>
    %cst_103 = arith.constant dense<0.000000e+00> : vector<8x8xf32>
    %296 = tpu.matmul %274, %295, %cst_103 {dimension_numbers = #tpu.dot_dimension_numbers<[1], [0], [0], [1], [0, 0, 1, 1], [], []>} : vector<8x16xbf16>, vector<16x8xbf16>, vector<8x8xf32> -> vector<8x8xf32>
    %c13 = arith.constant 13 : index
    %297 = memref.load %arg3[%c13] : memref<64xf32, #tpu.memory_space<smem>>
    %298 = vector.broadcast %297 : f32 to vector<8x8xf32>
    %299 = arith.mulf %298, %296 : vector<8x8xf32>
    %300 = arith.addf %281, %299 : vector<8x8xf32>
    %c29 = arith.constant 29 : index
    %301 = memref.load %arg3[%c29] : memref<64xf32, #tpu.memory_space<smem>>
    %302 = vector.broadcast %301 : f32 to vector<8x8xf32>
    %303 = arith.mulf %302, %296 : vector<8x8xf32>
    %304 = arith.addf %285, %303 : vector<8x8xf32>
    %c45 = arith.constant 45 : index
    %305 = memref.load %arg3[%c45] : memref<64xf32, #tpu.memory_space<smem>>
    %306 = vector.broadcast %305 : f32 to vector<8x8xf32>
    %307 = arith.mulf %306, %296 : vector<8x8xf32>
    %308 = arith.addf %289, %307 : vector<8x8xf32>
    %c61 = arith.constant 61 : index
    %309 = memref.load %arg3[%c61] : memref<64xf32, #tpu.memory_space<smem>>
    %310 = vector.broadcast %309 : f32 to vector<8x8xf32>
    %311 = arith.mulf %310, %296 : vector<8x8xf32>
    %312 = arith.addf %293, %311 : vector<8x8xf32>
    %c1_104 = arith.constant 1 : index
    %c0_105 = arith.constant 0 : index
    %c0_106 = arith.constant 0 : index
    %313 = vector.load %arg4[%c1_104, %c0_105, %c0_106] : memref<2x8x16xbf16, #tpu.memory_space<vmem>>, vector<1x8x16xbf16>
    %314 = vector.shape_cast %313 : vector<1x8x16xbf16> to vector<8x16xbf16>
    %cst_107 = arith.constant dense<0.000000e+00> : vector<8x16xf32>
    %315 = tpu.matmul %314, %270, %cst_107 {dimension_numbers = #tpu.dot_dimension_numbers<[1], [0], [0], [1], [0, 0, 1, 1], [], []>} : vector<8x16xbf16>, vector<16x16xbf16>, vector<8x16xf32> -> vector<8x16xf32>
    %316 = arith.truncf %315 : vector<8x16xf32> to vector<8x16xbf16>
    %c0_108 = arith.constant 0 : index
    %c0_109 = arith.constant 0 : index
    %c0_110 = arith.constant 0 : index
    %317 = vector.load %arg5[%c0_108, %c0_109, %c0_110] : memref<2x16x8xbf16, #tpu.memory_space<vmem>>, vector<1x16x8xbf16>
    %318 = vector.shape_cast %317 : vector<1x16x8xbf16> to vector<16x8xbf16>
    %cst_111 = arith.constant dense<0.000000e+00> : vector<8x8xf32>
    %319 = tpu.matmul %316, %318, %cst_111 {dimension_numbers = #tpu.dot_dimension_numbers<[1], [0], [0], [1], [0, 0, 1, 1], [], []>} : vector<8x16xbf16>, vector<16x8xbf16>, vector<8x8xf32> -> vector<8x8xf32>
    %c14 = arith.constant 14 : index
    %320 = memref.load %arg3[%c14] : memref<64xf32, #tpu.memory_space<smem>>
    %321 = vector.broadcast %320 : f32 to vector<8x8xf32>
    %322 = arith.mulf %321, %319 : vector<8x8xf32>
    %323 = arith.addf %300, %322 : vector<8x8xf32>
    %c30 = arith.constant 30 : index
    %324 = memref.load %arg3[%c30] : memref<64xf32, #tpu.memory_space<smem>>
    %325 = vector.broadcast %324 : f32 to vector<8x8xf32>
    %326 = arith.mulf %325, %319 : vector<8x8xf32>
    %327 = arith.addf %304, %326 : vector<8x8xf32>
    %c46 = arith.constant 46 : index
    %328 = memref.load %arg3[%c46] : memref<64xf32, #tpu.memory_space<smem>>
    %329 = vector.broadcast %328 : f32 to vector<8x8xf32>
    %330 = arith.mulf %329, %319 : vector<8x8xf32>
    %331 = arith.addf %308, %330 : vector<8x8xf32>
    %c62 = arith.constant 62 : index
    %332 = memref.load %arg3[%c62] : memref<64xf32, #tpu.memory_space<smem>>
    %333 = vector.broadcast %332 : f32 to vector<8x8xf32>
    %334 = arith.mulf %333, %319 : vector<8x8xf32>
    %335 = arith.addf %312, %334 : vector<8x8xf32>
    %c1_112 = arith.constant 1 : index
    %c0_113 = arith.constant 0 : index
    %c0_114 = arith.constant 0 : index
    %336 = vector.load %arg5[%c1_112, %c0_113, %c0_114] : memref<2x16x8xbf16, #tpu.memory_space<vmem>>, vector<1x16x8xbf16>
    %337 = vector.shape_cast %336 : vector<1x16x8xbf16> to vector<16x8xbf16>
    %cst_115 = arith.constant dense<0.000000e+00> : vector<8x8xf32>
    %338 = tpu.matmul %316, %337, %cst_115 {dimension_numbers = #tpu.dot_dimension_numbers<[1], [0], [0], [1], [0, 0, 1, 1], [], []>} : vector<8x16xbf16>, vector<16x8xbf16>, vector<8x8xf32> -> vector<8x8xf32>
    %c15 = arith.constant 15 : index
    %339 = memref.load %arg3[%c15] : memref<64xf32, #tpu.memory_space<smem>>
    %340 = vector.broadcast %339 : f32 to vector<8x8xf32>
    %341 = arith.mulf %340, %338 : vector<8x8xf32>
    %342 = arith.addf %323, %341 : vector<8x8xf32>
    %c31 = arith.constant 31 : index
    %343 = memref.load %arg3[%c31] : memref<64xf32, #tpu.memory_space<smem>>
    %344 = vector.broadcast %343 : f32 to vector<8x8xf32>
    %345 = arith.mulf %344, %338 : vector<8x8xf32>
    %346 = arith.addf %327, %345 : vector<8x8xf32>
    %c47 = arith.constant 47 : index
    %347 = memref.load %arg3[%c47] : memref<64xf32, #tpu.memory_space<smem>>
    %348 = vector.broadcast %347 : f32 to vector<8x8xf32>
    %349 = arith.mulf %348, %338 : vector<8x8xf32>
    %350 = arith.addf %331, %349 : vector<8x8xf32>
    %c63 = arith.constant 63 : index
    %351 = memref.load %arg3[%c63] : memref<64xf32, #tpu.memory_space<smem>>
    %352 = vector.broadcast %351 : f32 to vector<8x8xf32>
    %353 = arith.mulf %352, %338 : vector<8x8xf32>
    %354 = arith.addf %335, %353 : vector<8x8xf32>
    %355 = arith.truncf %342 : vector<8x8xf32> to vector<8x8xbf16>
    %c0_116 = arith.constant 0 : index
    %c0_117 = arith.constant 0 : index
    %c0_118 = arith.constant 0 : index
    %c0_119 = arith.constant 0 : index
    %356 = vector.load %arg6[%c0_116, %c0_117, %c0_118, %c0_119] : memref<1x4x8x8xbf16, #tpu.memory_space<vmem>>, vector<1x1x8x8xbf16>
    %357 = vector.shape_cast %356 : vector<1x1x8x8xbf16> to vector<8x8xbf16>
    %358 = vector.shape_cast %355 : vector<8x8xbf16> to vector<1x1x8x8xbf16>
    tpu.vector_store %arg6[%c0_116, %c0_117, %c0_118, %c0_119], %358 {strides = array<i32>} : memref<1x4x8x8xbf16, #tpu.memory_space<vmem>>, vector<1x1x8x8xbf16>,
    %359 = arith.truncf %346 : vector<8x8xf32> to vector<8x8xbf16>
    %c0_120 = arith.constant 0 : index
    %c1_121 = arith.constant 1 : index
    %c0_122 = arith.constant 0 : index
    %c0_123 = arith.constant 0 : index
    %360 = vector.load %arg6[%c0_120, %c1_121, %c0_122, %c0_123] : memref<1x4x8x8xbf16, #tpu.memory_space<vmem>>, vector<1x1x8x8xbf16>
    %361 = vector.shape_cast %360 : vector<1x1x8x8xbf16> to vector<8x8xbf16>
    %362 = vector.shape_cast %359 : vector<8x8xbf16> to vector<1x1x8x8xbf16>
    tpu.vector_store %arg6[%c0_120, %c1_121, %c0_122, %c0_123], %362 {strides = array<i32>} : memref<1x4x8x8xbf16, #tpu.memory_space<vmem>>, vector<1x1x8x8xbf16>,
    %363 = arith.truncf %350 : vector<8x8xf32> to vector<8x8xbf16>
    %c0_124 = arith.constant 0 : index
    %c2_125 = arith.constant 2 : index
    %c0_126 = arith.constant 0 : index
    %c0_127 = arith.constant 0 : index
    %364 = vector.load %arg6[%c0_124, %c2_125, %c0_126, %c0_127] : memref<1x4x8x8xbf16, #tpu.memory_space<vmem>>, vector<1x1x8x8xbf16>
    %365 = vector.shape_cast %364 : vector<1x1x8x8xbf16> to vector<8x8xbf16>
    %366 = vector.shape_cast %363 : vector<8x8xbf16> to vector<1x1x8x8xbf16>
    tpu.vector_store %arg6[%c0_124, %c2_125, %c0_126, %c0_127], %366 {strides = array<i32>} : memref<1x4x8x8xbf16, #tpu.memory_space<vmem>>, vector<1x1x8x8xbf16>,
    %367 = arith.truncf %354 : vector<8x8xf32> to vector<8x8xbf16>
    %c0_128 = arith.constant 0 : index
    %c3_129 = arith.constant 3 : index
    %c0_130 = arith.constant 0 : index
    %c0_131 = arith.constant 0 : index
    %368 = vector.load %arg6[%c0_128, %c3_129, %c0_130, %c0_131] : memref<1x4x8x8xbf16, #tpu.memory_space<vmem>>, vector<1x1x8x8xbf16>
    %369 = vector.shape_cast %368 : vector<1x1x8x8xbf16> to vector<8x8xbf16>
    %370 = vector.shape_cast %367 : vector<8x8xbf16> to vector<1x1x8x8xbf16>
    tpu.vector_store %arg6[%c0_128, %c3_129, %c0_130, %c0_131], %370 {strides = array<i32>} : memref<1x4x8x8xbf16, #tpu.memory_space<vmem>>, vector<1x1x8x8xbf16>,
    %c0_132 = arith.constant 0 : index
    %c0_133 = arith.constant 0 : index
    %c0_134 = arith.constant 0 : index
    %c0_135 = arith.constant 0 : index
    %371 = vector.load %arg6[%c0_132, %c0_133, %c0_134, %c0_135] : memref<1x4x8x8xbf16, #tpu.memory_space<vmem>>, vector<1x4x8x8xbf16>
    %372 = vector.shape_cast %371 : vector<1x4x8x8xbf16> to vector<4x8x8xbf16>
    %373 = arith.extf %372 : vector<4x8x8xbf16> to vector<4x8x8xf32>
    %c0_136 = arith.constant 0 : index
    %c0_137 = arith.constant 0 : index
    %c0_138 = arith.constant 0 : index
    %c0_139 = arith.constant 0 : index
    %374 = vector.load %arg7[%c0_136, %c0_137, %c0_138, %c0_139] : memref<1x4x1x8xf32, #tpu.memory_space<vmem>>, vector<1x4x1x8xf32>
    %375 = vector.shape_cast %374 : vector<1x4x1x8xf32> to vector<4x1x8xf32>
    %cst_140 = arith.constant dense<0.000000e+00> : vector<4x8xf32>
    %376 = vector.multi_reduction <add>, %373, %cst_140 [1] : vector<4x8x8xf32> to vector<4x8xf32>
    %377 = vector.shape_cast %376 : vector<4x8xf32> to vector<4x1x8xf32>
    %378 = arith.addf %375, %377 : vector<4x1x8xf32>
    %c0_141 = arith.constant 0 : index
    %c0_142 = arith.constant 0 : index
    %c0_143 = arith.constant 0 : index
    %c0_144 = arith.constant 0 : index
    %379 = vector.load %arg7[%c0_141, %c0_142, %c0_143, %c0_144] : memref<1x4x1x8xf32, #tpu.memory_space<vmem>>, vector<1x4x1x8xf32>
    %380 = vector.shape_cast %379 : vector<1x4x1x8xf32> to vector<4x1x8xf32>
    %381 = vector.shape_cast %378 : vector<4x1x8xf32> to vector<1x4x1x8xf32>
    tpu.vector_store %arg7[%c0_141, %c0_142, %c0_143, %c0_144], %381 {strides = array<i32>} : memref<1x4x1x8xf32, #tpu.memory_space<vmem>>, vector<1x4x1x8xf32>,
    %c0_145 = arith.constant 0 : index
    %c0_146 = arith.constant 0 : index
    %c0_147 = arith.constant 0 : index
    %c0_148 = arith.constant 0 : index
    %382 = vector.load %arg8[%c0_145, %c0_146, %c0_147, %c0_148] : memref<1x4x1x8xf32, #tpu.memory_space<vmem>>, vector<1x4x1x8xf32>
    %383 = vector.shape_cast %382 : vector<1x4x1x8xf32> to vector<4x1x8xf32>
    %384 = arith.mulf %373, %373 : vector<4x8x8xf32>
    %cst_149 = arith.constant dense<0.000000e+00> : vector<4x8xf32>
    %385 = vector.multi_reduction <add>, %384, %cst_149 [1] : vector<4x8x8xf32> to vector<4x8xf32>
    %386 = vector.shape_cast %385 : vector<4x8xf32> to vector<4x1x8xf32>
    %387 = arith.addf %383, %386 : vector<4x1x8xf32>
    %c0_150 = arith.constant 0 : index
    %c0_151 = arith.constant 0 : index
    %c0_152 = arith.constant 0 : index
    %c0_153 = arith.constant 0 : index
    %388 = vector.load %arg8[%c0_150, %c0_151, %c0_152, %c0_153] : memref<1x4x1x8xf32, #tpu.memory_space<vmem>>, vector<1x4x1x8xf32>
    %389 = vector.shape_cast %388 : vector<1x4x1x8xf32> to vector<4x1x8xf32>
    %390 = vector.shape_cast %387 : vector<4x1x8xf32> to vector<1x4x1x8xf32>
    tpu.vector_store %arg8[%c0_150, %c0_151, %c0_152, %c0_153], %390 {strides = array<i32>} : memref<1x4x1x8xf32, #tpu.memory_space<vmem>>, vector<1x4x1x8xf32>,
    return
  }
  func.func @transform_0(%arg0: i32, %arg1: i32) -> (i32, i32, i32, i32) {
    %c0_i32 = arith.constant 0 : i32
    %c0_i32_0 = arith.constant 0 : i32
    %c0_i32_1 = arith.constant 0 : i32
    return %arg0, %c0_i32, %arg1, %c0_i32_0 : i32, i32, i32, i32
  }
  func.func @transform_1(%arg0: i32, %arg1: i32) -> i32 {
    %c0_i32 = arith.constant 0 : i32
    %c0_i32_0 = arith.constant 0 : i32
    return %c0_i32 : i32
  }
  func.func @transform_2(%arg0: i32, %arg1: i32) -> (i32, i32, i32) {
    %c0_i32 = arith.constant 0 : i32
    %c0_i32_0 = arith.constant 0 : i32
    %c0_i32_1 = arith.constant 0 : i32
    %c0_i32_2 = arith.constant 0 : i32
    return %c0_i32, %c0_i32_0, %c0_i32_1 : i32, i32, i32
  }
  func.func @transform_3(%arg0: i32, %arg1: i32) -> (i32, i32, i32) {
    %c0_i32 = arith.constant 0 : i32
    %c0_i32_0 = arith.constant 0 : i32
    %c0_i32_1 = arith.constant 0 : i32
    %c0_i32_2 = arith.constant 0 : i32
    return %c0_i32, %c0_i32_0, %c0_i32_1 : i32, i32, i32
  }
  func.func @transform_4(%arg0: i32, %arg1: i32) -> (i32, i32, i32, i32) {
    %c0_i32 = arith.constant 0 : i32
    %c0_i32_0 = arith.constant 0 : i32
    %c0_i32_1 = arith.constant 0 : i32
    return %arg0, %c0_i32, %arg1, %c0_i32_0 : i32, i32, i32, i32
  }
  func.func @transform_5(%arg0: i32, %arg1: i32) -> (i32, i32, i32, i32) {
    %c0_i32 = arith.constant 0 : i32
    %c0_i32_0 = arith.constant 0 : i32
    %c0_i32_1 = arith.constant 0 : i32
    %c0_i32_2 = arith.constant 0 : i32
    return %arg0, %c0_i32, %c0_i32_0, %c0_i32_1 : i32, i32, i32, i32
  }
  func.func @transform_6(%arg0: i32, %arg1: i32) -> (i32, i32, i32, i32) {
    %c0_i32 = arith.constant 0 : i32
    %c0_i32_0 = arith.constant 0 : i32
    %c0_i32_1 = arith.constant 0 : i32
    %c0_i32_2 = arith.constant 0 : i32
    return %arg0, %c0_i32, %c0_i32_0, %c0_i32_1 : i32, i32, i32, i32
  }
}

module attributes {stable_mosaic.version = 11 : i64} {
  func.func @apply_kernel(%arg0: i32, %arg1: i32, %arg2: memref<1x4x8x8xbf16, #tpu.memory_space<vmem>>, %arg3: memref<4x1x1xf32, #tpu.memory_space<vmem>>, %arg4: memref<4x1x1xf32, #tpu.memory_space<vmem>>, %arg5: memref<4x1x1xf32, #tpu.memory_space<vmem>>, %arg6: memref<4x1x1xf32, #tpu.memory_space<vmem>>, %arg7: memref<1x4x8x8xf32, #tpu.memory_space<vmem>>) attributes {dimension_semantics = [#tpu.dimension_semantics<parallel>, #tpu.dimension_semantics<parallel>], iteration_bounds = array<i64: 2, 1>, scalar_prefetch = 0 : i64, scratch_operands = 0 : i64, tpu.core_type = #tpu.core_type<tc>, window_params = [{transform_indices = @transform_0, window_bounds = array<i64: 1, 4, 8, 8>}, {pipeline_mode = #tpu.pipeline_mode<synchronous>, transform_indices = @transform_1, window_bounds = array<i64: 4, 1, 1>}, {pipeline_mode = #tpu.pipeline_mode<synchronous>, transform_indices = @transform_2, window_bounds = array<i64: 4, 1, 1>}, {pipeline_mode = #tpu.pipeline_mode<synchronous>, transform_indices = @transform_3, window_bounds = array<i64: 4, 1, 1>}, {pipeline_mode = #tpu.pipeline_mode<synchronous>, transform_indices = @transform_4, window_bounds = array<i64: 4, 1, 1>}, {transform_indices = @transform_5, window_bounds = array<i64: 1, 4, 8, 8>}]} {
    %c0 = arith.constant 0 : index
    %c0_0 = arith.constant 0 : index
    %c0_1 = arith.constant 0 : index
    %c0_2 = arith.constant 0 : index
    %0 = vector.load %arg2[%c0, %c0_0, %c0_1, %c0_2] : memref<1x4x8x8xbf16, #tpu.memory_space<vmem>>, vector<1x4x8x8xbf16>
    %1 = vector.shape_cast %0 : vector<1x4x8x8xbf16> to vector<4x8x8xbf16>
    %2 = arith.extf %1 : vector<4x8x8xbf16> to vector<4x8x8xf32>
    %c0_3 = arith.constant 0 : index
    %c0_4 = arith.constant 0 : index
    %c0_5 = arith.constant 0 : index
    %3 = vector.load %arg3[%c0_3, %c0_4, %c0_5] : memref<4x1x1xf32, #tpu.memory_space<vmem>>, vector<4x1x1xf32>
    %4 = vector.broadcast %3 : vector<4x1x1xf32> to vector<4x8x8xf32>
    %5 = arith.mulf %2, %4 : vector<4x8x8xf32>
    %c0_6 = arith.constant 0 : index
    %c0_7 = arith.constant 0 : index
    %c0_8 = arith.constant 0 : index
    %6 = vector.load %arg4[%c0_6, %c0_7, %c0_8] : memref<4x1x1xf32, #tpu.memory_space<vmem>>, vector<4x1x1xf32>
    %7 = vector.broadcast %6 : vector<4x1x1xf32> to vector<4x8x8xf32>
    %8 = arith.addf %5, %7 : vector<4x8x8xf32>
    %cst = arith.constant 0.000000e+00 : f32
    %9 = vector.broadcast %cst : f32 to vector<4x8x8xf32>
    %10 = arith.maximumf %8, %9 : vector<4x8x8xf32>
    %c0_9 = arith.constant 0 : index
    %c0_10 = arith.constant 0 : index
    %c0_11 = arith.constant 0 : index
    %11 = vector.load %arg5[%c0_9, %c0_10, %c0_11] : memref<4x1x1xf32, #tpu.memory_space<vmem>>, vector<4x1x1xf32>
    %12 = vector.broadcast %11 : vector<4x1x1xf32> to vector<4x8x8xf32>
    %13 = arith.mulf %10, %12 : vector<4x8x8xf32>
    %c0_12 = arith.constant 0 : index
    %c0_13 = arith.constant 0 : index
    %c0_14 = arith.constant 0 : index
    %14 = vector.load %arg6[%c0_12, %c0_13, %c0_14] : memref<4x1x1xf32, #tpu.memory_space<vmem>>, vector<4x1x1xf32>
    %15 = vector.broadcast %14 : vector<4x1x1xf32> to vector<4x8x8xf32>
    %16 = arith.addf %13, %15 : vector<4x8x8xf32>
    %c0_15 = arith.constant 0 : index
    %c0_16 = arith.constant 0 : index
    %c0_17 = arith.constant 0 : index
    %c0_18 = arith.constant 0 : index
    %17 = vector.load %arg7[%c0_15, %c0_16, %c0_17, %c0_18] : memref<1x4x8x8xf32, #tpu.memory_space<vmem>>, vector<1x4x8x8xf32>
    %18 = vector.shape_cast %17 : vector<1x4x8x8xf32> to vector<4x8x8xf32>
    %19 = vector.shape_cast %16 : vector<4x8x8xf32> to vector<1x4x8x8xf32>
    tpu.vector_store %arg7[%c0_15, %c0_16, %c0_17, %c0_18], %19 {strides = array<i32>} : memref<1x4x8x8xf32, #tpu.memory_space<vmem>>, vector<1x4x8x8xf32>,
    return
  }
  func.func @transform_0(%arg0: i32, %arg1: i32) -> (i32, i32, i32, i32) {
    %c0_i32 = arith.constant 0 : i32
    %c0_i32_0 = arith.constant 0 : i32
    %c0_i32_1 = arith.constant 0 : i32
    return %arg0, %c0_i32, %arg1, %c0_i32_0 : i32, i32, i32, i32
  }
  func.func @transform_1(%arg0: i32, %arg1: i32) -> (i32, i32, i32) {
    %c0_i32 = arith.constant 0 : i32
    %c0_i32_0 = arith.constant 0 : i32
    %c0_i32_1 = arith.constant 0 : i32
    %c0_i32_2 = arith.constant 0 : i32
    return %c0_i32, %c0_i32_0, %c0_i32_1 : i32, i32, i32
  }
  func.func @transform_2(%arg0: i32, %arg1: i32) -> (i32, i32, i32) {
    %c0_i32 = arith.constant 0 : i32
    %c0_i32_0 = arith.constant 0 : i32
    %c0_i32_1 = arith.constant 0 : i32
    %c0_i32_2 = arith.constant 0 : i32
    return %c0_i32, %c0_i32_0, %c0_i32_1 : i32, i32, i32
  }
  func.func @transform_3(%arg0: i32, %arg1: i32) -> (i32, i32, i32) {
    %c0_i32 = arith.constant 0 : i32
    %c0_i32_0 = arith.constant 0 : i32
    %c0_i32_1 = arith.constant 0 : i32
    %c0_i32_2 = arith.constant 0 : i32
    return %c0_i32, %c0_i32_0, %c0_i32_1 : i32, i32, i32
  }
  func.func @transform_4(%arg0: i32, %arg1: i32) -> (i32, i32, i32) {
    %c0_i32 = arith.constant 0 : i32
    %c0_i32_0 = arith.constant 0 : i32
    %c0_i32_1 = arith.constant 0 : i32
    %c0_i32_2 = arith.constant 0 : i32
    return %c0_i32, %c0_i32_0, %c0_i32_1 : i32, i32, i32
  }
  func.func @transform_5(%arg0: i32, %arg1: i32) -> (i32, i32, i32, i32) {
    %c0_i32 = arith.constant 0 : i32
    %c0_i32_0 = arith.constant 0 : i32
    %c0_i32_1 = arith.constant 0 : i32
    return %arg0, %c0_i32, %arg1, %c0_i32_0 : i32, i32, i32, i32
  }
}

module attributes {stable_mosaic.version = 11 : i64} {
  func.func @relu_stats_kernel(%arg0: i32, %arg1: i32, %arg2: memref<1x4x8x8xbf16, #tpu.memory_space<vmem>>, %arg3: memref<4x1x1xf32, #tpu.memory_space<vmem>>, %arg4: memref<4x1x1xf32, #tpu.memory_space<vmem>>, %arg5: memref<1x4x1x8xf32, #tpu.memory_space<vmem>>, %arg6: memref<1x4x1x8xf32, #tpu.memory_space<vmem>>) attributes {dimension_semantics = [#tpu.dimension_semantics<parallel>, #tpu.dimension_semantics<arbitrary>], iteration_bounds = array<i64: 2, 1>, scalar_prefetch = 0 : i64, scratch_operands = 0 : i64, tpu.core_type = #tpu.core_type<tc>, window_params = [{transform_indices = @transform_0, window_bounds = array<i64: 1, 4, 8, 8>}, {pipeline_mode = #tpu.pipeline_mode<synchronous>, transform_indices = @transform_1, window_bounds = array<i64: 4, 1, 1>}, {pipeline_mode = #tpu.pipeline_mode<synchronous>, transform_indices = @transform_2, window_bounds = array<i64: 4, 1, 1>}, {transform_indices = @transform_3, window_bounds = array<i64: 1, 4, 1, 8>}, {transform_indices = @transform_4, window_bounds = array<i64: 1, 4, 1, 8>}]} {
    %c0_i32 = arith.constant 0 : i32
    %0 = arith.cmpi eq, %arg1, %c0_i32 : i32
    %1 = arith.extui %0 : i1 to i32
    %c0_i32_0 = arith.constant 0 : i32
    %2 = arith.cmpi ne, %1, %c0_i32_0 : i32
    scf.if %2 {
      %cst_28 = arith.constant 0.000000e+00 : f32
      %31 = vector.broadcast %cst_28 : f32 to vector<4x1x8xf32>
      %c0_29 = arith.constant 0 : index
      %c0_30 = arith.constant 0 : index
      %c0_31 = arith.constant 0 : index
      %c0_32 = arith.constant 0 : index
      %32 = vector.load %arg5[%c0_29, %c0_30, %c0_31, %c0_32] : memref<1x4x1x8xf32, #tpu.memory_space<vmem>>, vector<1x4x1x8xf32>
      %33 = vector.shape_cast %32 : vector<1x4x1x8xf32> to vector<4x1x8xf32>
      %34 = vector.shape_cast %31 : vector<4x1x8xf32> to vector<1x4x1x8xf32>
      tpu.vector_store %arg5[%c0_29, %c0_30, %c0_31, %c0_32], %34 {strides = array<i32>} : memref<1x4x1x8xf32, #tpu.memory_space<vmem>>, vector<1x4x1x8xf32>,
      %cst_33 = arith.constant 0.000000e+00 : f32
      %35 = vector.broadcast %cst_33 : f32 to vector<4x1x8xf32>
      %c0_34 = arith.constant 0 : index
      %c0_35 = arith.constant 0 : index
      %c0_36 = arith.constant 0 : index
      %c0_37 = arith.constant 0 : index
      %36 = vector.load %arg6[%c0_34, %c0_35, %c0_36, %c0_37] : memref<1x4x1x8xf32, #tpu.memory_space<vmem>>, vector<1x4x1x8xf32>
      %37 = vector.shape_cast %36 : vector<1x4x1x8xf32> to vector<4x1x8xf32>
      %38 = vector.shape_cast %35 : vector<4x1x8xf32> to vector<1x4x1x8xf32>
      tpu.vector_store %arg6[%c0_34, %c0_35, %c0_36, %c0_37], %38 {strides = array<i32>} : memref<1x4x1x8xf32, #tpu.memory_space<vmem>>, vector<1x4x1x8xf32>,
    } else {
    }
    %c0 = arith.constant 0 : index
    %c0_1 = arith.constant 0 : index
    %c0_2 = arith.constant 0 : index
    %c0_3 = arith.constant 0 : index
    %3 = vector.load %arg2[%c0, %c0_1, %c0_2, %c0_3] : memref<1x4x8x8xbf16, #tpu.memory_space<vmem>>, vector<1x4x8x8xbf16>
    %4 = vector.shape_cast %3 : vector<1x4x8x8xbf16> to vector<4x8x8xbf16>
    %5 = arith.extf %4 : vector<4x8x8xbf16> to vector<4x8x8xf32>
    %c0_4 = arith.constant 0 : index
    %c0_5 = arith.constant 0 : index
    %c0_6 = arith.constant 0 : index
    %6 = vector.load %arg3[%c0_4, %c0_5, %c0_6] : memref<4x1x1xf32, #tpu.memory_space<vmem>>, vector<4x1x1xf32>
    %7 = vector.broadcast %6 : vector<4x1x1xf32> to vector<4x8x8xf32>
    %8 = arith.mulf %5, %7 : vector<4x8x8xf32>
    %c0_7 = arith.constant 0 : index
    %c0_8 = arith.constant 0 : index
    %c0_9 = arith.constant 0 : index
    %9 = vector.load %arg4[%c0_7, %c0_8, %c0_9] : memref<4x1x1xf32, #tpu.memory_space<vmem>>, vector<4x1x1xf32>
    %10 = vector.broadcast %9 : vector<4x1x1xf32> to vector<4x8x8xf32>
    %11 = arith.addf %8, %10 : vector<4x8x8xf32>
    %cst = arith.constant 0.000000e+00 : f32
    %12 = vector.broadcast %cst : f32 to vector<4x8x8xf32>
    %13 = arith.maximumf %11, %12 : vector<4x8x8xf32>
    %c0_10 = arith.constant 0 : index
    %c0_11 = arith.constant 0 : index
    %c0_12 = arith.constant 0 : index
    %c0_13 = arith.constant 0 : index
    %14 = vector.load %arg5[%c0_10, %c0_11, %c0_12, %c0_13] : memref<1x4x1x8xf32, #tpu.memory_space<vmem>>, vector<1x4x1x8xf32>
    %15 = vector.shape_cast %14 : vector<1x4x1x8xf32> to vector<4x1x8xf32>
    %cst_14 = arith.constant dense<0.000000e+00> : vector<4x8xf32>
    %16 = vector.multi_reduction <add>, %13, %cst_14 [1] : vector<4x8x8xf32> to vector<4x8xf32>
    %17 = vector.shape_cast %16 : vector<4x8xf32> to vector<4x1x8xf32>
    %18 = arith.addf %15, %17 : vector<4x1x8xf32>
    %c0_15 = arith.constant 0 : index
    %c0_16 = arith.constant 0 : index
    %c0_17 = arith.constant 0 : index
    %c0_18 = arith.constant 0 : index
    %19 = vector.load %arg5[%c0_15, %c0_16, %c0_17, %c0_18] : memref<1x4x1x8xf32, #tpu.memory_space<vmem>>, vector<1x4x1x8xf32>
    %20 = vector.shape_cast %19 : vector<1x4x1x8xf32> to vector<4x1x8xf32>
    %21 = vector.shape_cast %18 : vector<4x1x8xf32> to vector<1x4x1x8xf32>
    tpu.vector_store %arg5[%c0_15, %c0_16, %c0_17, %c0_18], %21 {strides = array<i32>} : memref<1x4x1x8xf32, #tpu.memory_space<vmem>>, vector<1x4x1x8xf32>,
    %c0_19 = arith.constant 0 : index
    %c0_20 = arith.constant 0 : index
    %c0_21 = arith.constant 0 : index
    %c0_22 = arith.constant 0 : index
    %22 = vector.load %arg6[%c0_19, %c0_20, %c0_21, %c0_22] : memref<1x4x1x8xf32, #tpu.memory_space<vmem>>, vector<1x4x1x8xf32>
    %23 = vector.shape_cast %22 : vector<1x4x1x8xf32> to vector<4x1x8xf32>
    %24 = arith.mulf %13, %13 : vector<4x8x8xf32>
    %cst_23 = arith.constant dense<0.000000e+00> : vector<4x8xf32>
    %25 = vector.multi_reduction <add>, %24, %cst_23 [1] : vector<4x8x8xf32> to vector<4x8xf32>
    %26 = vector.shape_cast %25 : vector<4x8xf32> to vector<4x1x8xf32>
    %27 = arith.addf %23, %26 : vector<4x1x8xf32>
    %c0_24 = arith.constant 0 : index
    %c0_25 = arith.constant 0 : index
    %c0_26 = arith.constant 0 : index
    %c0_27 = arith.constant 0 : index
    %28 = vector.load %arg6[%c0_24, %c0_25, %c0_26, %c0_27] : memref<1x4x1x8xf32, #tpu.memory_space<vmem>>, vector<1x4x1x8xf32>
    %29 = vector.shape_cast %28 : vector<1x4x1x8xf32> to vector<4x1x8xf32>
    %30 = vector.shape_cast %27 : vector<4x1x8xf32> to vector<1x4x1x8xf32>
    tpu.vector_store %arg6[%c0_24, %c0_25, %c0_26, %c0_27], %30 {strides = array<i32>} : memref<1x4x1x8xf32, #tpu.memory_space<vmem>>, vector<1x4x1x8xf32>,
    return
  }
  func.func @transform_0(%arg0: i32, %arg1: i32) -> (i32, i32, i32, i32) {
    %c0_i32 = arith.constant 0 : i32
    %c0_i32_0 = arith.constant 0 : i32
    %c0_i32_1 = arith.constant 0 : i32
    return %arg0, %c0_i32, %arg1, %c0_i32_0 : i32, i32, i32, i32
  }
  func.func @transform_1(%arg0: i32, %arg1: i32) -> (i32, i32, i32) {
    %c0_i32 = arith.constant 0 : i32
    %c0_i32_0 = arith.constant 0 : i32
    %c0_i32_1 = arith.constant 0 : i32
    %c0_i32_2 = arith.constant 0 : i32
    return %c0_i32, %c0_i32_0, %c0_i32_1 : i32, i32, i32
  }
  func.func @transform_2(%arg0: i32, %arg1: i32) -> (i32, i32, i32) {
    %c0_i32 = arith.constant 0 : i32
    %c0_i32_0 = arith.constant 0 : i32
    %c0_i32_1 = arith.constant 0 : i32
    %c0_i32_2 = arith.constant 0 : i32
    return %c0_i32, %c0_i32_0, %c0_i32_1 : i32, i32, i32
  }
  func.func @transform_3(%arg0: i32, %arg1: i32) -> (i32, i32, i32, i32) {
    %c0_i32 = arith.constant 0 : i32
    %c0_i32_0 = arith.constant 0 : i32
    %c0_i32_1 = arith.constant 0 : i32
    %c0_i32_2 = arith.constant 0 : i32
    return %arg0, %c0_i32, %c0_i32_0, %c0_i32_1 : i32, i32, i32, i32
  }
  func.func @transform_4(%arg0: i32, %arg1: i32) -> (i32, i32, i32, i32) {
    %c0_i32 = arith.constant 0 : i32
    %c0_i32_0 = arith.constant 0 : i32
    %c0_i32_1 = arith.constant 0 : i32
    %c0_i32_2 = arith.constant 0 : i32
    return %arg0, %c0_i32, %c0_i32_0, %c0_i32_1 : i32, i32, i32, i32
  }
}

</mosaic_0001>

<llo_original>
// kernel: _patch_embed_forward.5
$region0: #{_patch_embed_forward.5}
  #allocation0 [shape = 'u32[]', space=smem, size = 0x4, offset = 0x4, fixed_abs, tag = 'smem constant byte address 0x4 - core index']
  #allocation1 [shape = 'u32[144,128]{1,0:T(1,128)}', space=vmem, size = 0x12000, scoped, tag = 'internal scratch']
  %s0 = inlined_call_operand.hbm [shape: bf16[2,4,8,8], index: 0, kind: input, shape index: {}]
  %s1 = inlined_call_operand.hbm [shape: f32[4,1,1], index: 1, kind: input, shape index: {}]
  %s2 = inlined_call_operand.hbm [shape: f32[4,1,1], index: 2, kind: input, shape index: {}]
  %s3 = inlined_call_operand.hbm [shape: f32[4,1,1], index: 3, kind: input, shape index: {}]
  %s4 = inlined_call_operand.hbm [shape: f32[4,1,1], index: 4, kind: input, shape index: {}]
  %s5 = inlined_call_operand.hbm [shape: f32[2,4,8,8], index: 5, kind: output, shape index: {}]
  %s6 = sld [smem:[#allocation0]]
  $region73: #{_patch_embed_forward.5} parent=0
    _
  %s8 = ssub.s32 1, %s6
  %s9 = scalar_select 0, %s8, %s6
  $region1: #{_patch_embed_forward.5} parent=0
    #allocation2 [shape = 'u8[16384]{0}', space=vmem, size = 0x4000, scoped, tag = 'input window, operand 0']
    #allocation3 [shape = 's32[2]{0}', space=sflag, size = 0x8, scoped, tag = 'scoped memory for _patch_embed_forward.5']
    #allocation4 [shape = 's32[2]{0}', space=sflag, size = 0x8, scoped, tag = 'scoped memory for _patch_embed_forward.5']
    #allocation5 [shape = 'u8[2048]{0}', space=vmem, size = 0x800, scoped, tag = 'input window, operand 1, single buffered']
    #allocation6 [shape = 's32[1]{0}', space=sflag, size = 0x4, scoped, tag = 'scoped memory for _patch_embed_forward.5']
    #allocation7 [shape = 'u8[2048]{0}', space=vmem, size = 0x800, scoped, tag = 'input window, operand 2, single buffered']
    #allocation8 [shape = 'u8[2048]{0}', space=vmem, size = 0x800, scoped, tag = 'input window, operand 3, single buffered']
    #allocation9 [shape = 's32[1]{0}', space=sflag, size = 0x4, scoped, tag = 'scoped memory for _patch_embed_forward.5']
    #allocation10 [shape = 'u8[2048]{0}', space=vmem, size = 0x800, scoped, tag = 'input window, operand 4, single buffered']
    #allocation11 [shape = 'u8[32768]{0}', space=vmem, size = 0x8000, scoped, tag = 'output window, operand 0']
    %10 = vsyncpa [#allocation3], 0
    %s11 = scalar_lea.sflag [#allocation3], 1
    %12 = vsyncpa %s11, 0
    %13 = vsyncpa [#allocation6], 0
    %14 = vsyncpa [#allocation9], 0
    %15 = vsyncpa [#allocation4], 0
    %s16 = scalar_lea.sflag [#allocation4], 1
    %17 = vsyncpa %s16, 0
    loop: start=0, step=1, limit=4
    $region2: #{_patch_embed_forward.5} parent=1 // loop_pre_header
      _
    $region3: #{_patch_embed_forward.5} parent=1 // loop_header
      %s19 = sphi 0, %s23
      %p20 = scmp.ge.s32.totalorder %s19, 4
      %s26 = sphi 0, %s38
      %s27 = sphi 0, %s34
      %s28 = sphi 0, %s26
      %s29 = sphi 0, %s27
      %s30 = sphi 0, %s28
      %s31 = sphi 0, %s29
      %s43 = sphi 0, %s45
      %s46 = sphi 0, %s43
      %s47 = sphi 0, %s46
      %s63 = sphi 0, %s47
      %s67 = sphi 0, %s67
      %s69 = sphi 0, %s67
      %s70 = sphi 0, %s69
      %s84 = sphi 0, %s70
      %s88 = sphi 0, %s88
      %s90 = sphi 0, %s88
      %s91 = sphi 0, %s90
      %s105 = sphi 0, %s91
      %s109 = sphi 0, %s109
      %s111 = sphi 0, %s109
      %s112 = sphi 0, %s111
      %s126 = sphi 0, %s112
      %s130 = sphi 0, %s130
      %s132 = sphi 0, %s130
      %s133 = sphi 0, %s132
      %s147 = sphi 0, %s133
      %s155 = sphi 0, %s157
      %s158 = sphi 0, %s155
      %s159 = sphi 0, %s158
      %s175 = sphi 0, %s159
    $region4: #{_patch_embed_forward.5} parent=1 // loop_header_branch
      %22 = sbr.rel (%p20) target = $region8
    $region5: #{_patch_embed_forward.5} parent=1 // loop_body
      %s24 = ssub.s32 %s19, 1
      %s25 = ssub.s32 %s19, 2
      %s32 = sadd.s32 1, %s27
      %p33 = scmp.ge.s32.totalorder %s32, 1
      %s34 = scalar_select %p33, 0, %s32
      %s35 = sadd.s32 1, %s26
      %s36 = scalar_select %p33, %s35, %s26
      %p37 = scmp.ge.s32.totalorder %s36, 2
      %s38 = scalar_select %p37, 0, %s36
      %s39 = ssub.s32 %s26, %s38
      %s40 = ssub.s32 %s27, %s34
      %s41 = sor.u32 %s39, %s40
      %p42 = scmp.eq.s32.totalorder %s41, 0
      %s44 = sadd.s32 %s43, 1
      %s45 = scalar_select %p42, %s43, %s44
      %p48 = pneg %p42
      %p49 = scmp.eq.s32.totalorder %s19, 1
      %p50 = por %p48, %p49
      %p51 = scmp.ne.s32.totalorder %s43, %s46
      %p52 = scmp.eq.s32.totalorder %s19, 0
      %p53 = por %p51, %p52
      %p54 = scmp.ne.s32.totalorder %s43, %s46
      %p55 = scmp.eq.s32.totalorder %s24, 1
      %p56 = por %p54, %p55
      %p57 = scmp.ne.s32.totalorder %s46, %s47
      %p58 = scmp.eq.s32.totalorder %s24, 0
      %p59 = por %p57, %p58
      %p60 = scmp.ne.s32.totalorder %s46, %s47
      %p61 = scmp.eq.s32.totalorder %s25, 1
      %p62 = por %p60, %p61
      %p64 = scmp.ne.s32.totalorder %s47, %s63
      %p65 = scmp.eq.s32.totalorder %s25, 0
      %p66 = por %p64, %p65
      %s68 = sadd.s32 %s67, 1
      %p71 = scmp.eq.s32.totalorder %s19, 1
      %p72 = scmp.ne.s32.totalorder %s67, %s69
      %p73 = scmp.eq.s32.totalorder %s19, 0
      %p74 = por %p72, %p73
      %p75 = scmp.ne.s32.totalorder %s67, %s69
      %p76 = scmp.eq.s32.totalorder %s24, 1
      %p77 = por %p75, %p76
      %p78 = scmp.ne.s32.totalorder %s69, %s70
      %p79 = scmp.eq.s32.totalorder %s24, 0
      %p80 = por %p78, %p79
      %p81 = scmp.ne.s32.totalorder %s69, %s70
      %p82 = scmp.eq.s32.totalorder %s25, 1
      %p83 = por %p81, %p82
      %p85 = scmp.ne.s32.totalorder %s70, %s84
      %p86 = scmp.eq.s32.totalorder %s25, 0
      %p87 = por %p85, %p86
      %s89 = sadd.s32 %s88, 1
      %p92 = scmp.eq.s32.totalorder %s19, 1
      %p93 = scmp.ne.s32.totalorder %s88, %s90
      %p94 = scmp.eq.s32.totalorder %s19, 0
      %p95 = por %p93, %p94
      %p96 = scmp.ne.s32.totalorder %s88, %s90
      %p97 = scmp.eq.s32.totalorder %s24, 1
      %p98 = por %p96, %p97
      %p99 = scmp.ne.s32.totalorder %s90, %s91
      %p100 = scmp.eq.s32.totalorder %s24, 0
      %p101 = por %p99, %p100
      %p102 = scmp.ne.s32.totalorder %s90, %s91
      %p103 = scmp.eq.s32.totalorder %s25, 1
      %p104 = por %p102, %p103
      %p106 = scmp.ne.s32.totalorder %s91, %s105
      %p107 = scmp.eq.s32.totalorder %s25, 0
      %p108 = por %p106, %p107
      %s110 = sadd.s32 %s109, 1
      %p113 = scmp.eq.s32.totalorder %s19, 1
      %p114 = scmp.ne.s32.totalorder %s109, %s111
      %p115 = scmp.eq.s32.totalorder %s19, 0
      %p116 = por %p114, %p115
      %p117 = scmp.ne.s32.totalorder %s109, %s111
      %p118 = scmp.eq.s32.totalorder %s24, 1
      %p119 = por %p117, %p118
      %p120 = scmp.ne.s32.totalorder %s111, %s112
      %p121 = scmp.eq.s32.totalorder %s24, 0
      %p122 = por %p120, %p121
      %p123 = scmp.ne.s32.totalorder %s111, %s112
      %p124 = scmp.eq.s32.totalorder %s25, 1
      %p125 = por %p123, %p124
      %p127 = scmp.ne.s32.totalorder %s112, %s126
      %p128 = scmp.eq.s32.totalorder %s25, 0
      %p129 = por %p127, %p128
      %s131 = sadd.s32 %s130, 1
      %p134 = scmp.eq.s32.totalorder %s19, 1
      %p135 = scmp.ne.s32.totalorder %s130, %s132
      %p136 = scmp.eq.s32.totalorder %s19, 0
      %p137 = por %p135, %p136
      %p138 = scmp.ne.s32.totalorder %s130, %s132
      %p139 = scmp.eq.s32.totalorder %s24, 1
      %p140 = por %p138, %p139
      %p141 = scmp.ne.s32.totalorder %s132, %s133
      %p142 = scmp.eq.s32.totalorder %s24, 0
      %p143 = por %p141, %p142
      %p144 = scmp.ne.s32.totalorder %s132, %s133
      %p145 = scmp.eq.s32.totalorder %s25, 1
      %p146 = por %p144, %p145
      %p148 = scmp.ne.s32.totalorder %s133, %s147
      %p149 = scmp.eq.s32.totalorder %s25, 0
      %p150 = por %p148, %p149
      %s151 = ssub.s32 %s26, %s38
      %s152 = ssub.s32 %s27, %s34
      %s153 = sor.u32 %s151, %s152
      %p154 = scmp.eq.s32.totalorder %s153, 0
      %s156 = sadd.s32 %s155, 1
      %s157 = scalar_select %p154, %s155, %s156
      %p160 = pneg %p154
      %p161 = scmp.eq.s32.totalorder %s19, 1
      %p162 = por %p160, %p161
      %p163 = scmp.ne.s32.totalorder %s155, %s158
      %p164 = scmp.eq.s32.totalorder %s19, 0
      %p165 = por %p163, %p164
      %p166 = scmp.ne.s32.totalorder %s155, %s158
      %p167 = scmp.eq.s32.totalorder %s24, 1
      %p168 = por %p166, %p167
      %p169 = scmp.ne.s32.totalorder %s158, %s159
      %p170 = scmp.eq.s32.totalorder %s24, 0
      %p171 = por %p169, %p170
      %p172 = scmp.ne.s32.totalorder %s158, %s159
      %p173 = scmp.eq.s32.totalorder %s25, 1
      %p174 = por %p172, %p173
      %p176 = scmp.ne.s32.totalorder %s159, %s175
      %p177 = scmp.eq.s32.totalorder %s25, 0
      %p178 = por %p176, %p177
      %p179 = scmp.le.s32.totalorder 1, %s19
      %p180 = scmp.lt.s32.totalorder %s19, 3
      %p181 = pnand %p179, %p180
      %p182 = pneg %p181
      // Predicated region
      $region9: #{_patch_embed_forward.5} parent=5 // pred_check
        _
      $region10: #{_patch_embed_forward.5} parent=5 // pred_check_branch
        %184 = sbr.rel (%p181) target = $region12
      $region11: #{_patch_embed_forward.5} parent=5 // pred_region
        %s185 = ssub.s32 %s19, 1
        // Predicated region
        $region13: #{_patch_embed_forward.5} parent=11 // pred_check
          %p186 = pneg %p80
        $region14: #{_patch_embed_forward.5} parent=11 // pred_check_branch
          %188 = sbr.rel (%p186) target = $region16
        $region15: #{_patch_embed_forward.5} parent=11 // pred_region
          %s190 = ssub.s32 64, 64
          %191 = vsyncadd [#allocation6], %s190
          %s192 = sshll.u32 [#allocation5], 4
          %s193 = int_to_ptr.vmem [resolvable:$true] %s192
          %198 = dma.hbm_to_vmem [thread:$0]  %s1, 64, %s193, [#allocation6], 16, 16, 1
        $region16: #{_patch_embed_forward.5} parent=11 // pred_fallthru
          _
        // Predicated region
        $region17: #{_patch_embed_forward.5} parent=11 // pred_check
          %p199 = pneg %p101
        $region18: #{_patch_embed_forward.5} parent=11 // pred_check_branch
          %201 = sbr.rel (%p199) target = $region20
        $region19: #{_patch_embed_forward.5} parent=11 // pred_region
          %s203 = ssub.s32 64, 64
          %204 = vsyncadd [#allocation6], %s203
          %s205 = sshll.u32 [#allocation7], 4
          %s206 = int_to_ptr.vmem [resolvable:$true] %s205
          %211 = dma.hbm_to_vmem [thread:$0]  %s2, 64, %s206, [#allocation6], 16, 16, 1
        $region20: #{_patch_embed_forward.5} parent=11 // pred_fallthru
          _
        // Predicated region
        $region21: #{_patch_embed_forward.5} parent=11 // pred_check
          %p212 = pneg %p122
        $region22: #{_patch_embed_forward.5} parent=11 // pred_check_branch
          %214 = sbr.rel (%p212) target = $region24
        $region23: #{_patch_embed_forward.5} parent=11 // pred_region
          %s216 = ssub.s32 64, 64
          %217 = vsyncadd [#allocation9], %s216
          %s218 = sshll.u32 [#allocation8], 4
          %s219 = int_to_ptr.vmem [resolvable:$true] %s218
          %224 = dma.hbm_to_vmem [thread:$0]  %s3, 64, %s219, [#allocation9], 16, 16, 1
        $region24: #{_patch_embed_forward.5} parent=11 // pred_fallthru
          _
        // Predicated region
        $region25: #{_patch_embed_forward.5} parent=11 // pred_check
          %p225 = pneg %p143
        $region26: #{_patch_embed_forward.5} parent=11 // pred_check_branch
          %227 = sbr.rel (%p225) target = $region28
        $region27: #{_patch_embed_forward.5} parent=11 // pred_region
          %s229 = ssub.s32 64, 64
          %230 = vsyncadd [#allocation9], %s229
          %s231 = sshll.u32 [#allocation10], 4
          %s232 = int_to_ptr.vmem [resolvable:$true] %s231
          %237 = dma.hbm_to_vmem [thread:$0]  %s4, 64, %s232, [#allocation9], 16, 16, 1
        $region28: #{_patch_embed_forward.5} parent=11 // pred_fallthru
          _
      $region12: #{_patch_embed_forward.5} parent=5 // pred_fallthru
        _
      %p238 = scmp.lt.s32.totalorder %s19, 2
      // Predicated region
      $region29: #{_patch_embed_forward.5} parent=5 // pred_check
        %p239 = pneg %p238
      $region30: #{_patch_embed_forward.5} parent=5 // pred_check_branch
        %241 = sbr.rel (%p239) target = $region32
      $region31: #{_patch_embed_forward.5} parent=5 // pred_region
        // Predicated region
        $region33: #{_patch_embed_forward.5} parent=31 // pred_check
          %p242 = pneg %p53
        $region34: #{_patch_embed_forward.5} parent=31 // pred_check_branch
          %244 = sbr.rel (%p242) target = $region36
        $region35: #{_patch_embed_forward.5} parent=31 // pred_region
          %s245 = sand.u32 %s43, 1
          %s246 = scalar_lea.sflag [#allocation3], %s245
          %s247 = sand.u32 %s43, 1
          %s248 = smul.addr %s247, 16
          %s249 = scalar_lea.vmem [#allocation2], %s248
          %s251 = ssub.s32 256, 256
          %252 = vsyncadd %s246, %s251
          %s253 = smul.addr %s26, 4
          %s254 = sadd.s32 %s27, %s253
          %s255 = smul.addr %s254, 64
          %s256 = scalar_lea.hbm %s0, %s255
          %s257 = sshll.u32 %s249, 4
          %s258 = int_to_ptr.vmem [resolvable:$true] %s257
          %263 = dma.hbm_to_vmem [thread:$0]  %s256, 256, %s258, %s246, 64, 64, 4
        $region36: #{_patch_embed_forward.5} parent=31 // pred_fallthru
          _
      $region32: #{_patch_embed_forward.5} parent=5 // pred_fallthru
        _
      %p264 = scmp.le.s32.totalorder 1, %s19
      %p265 = scmp.lt.s32.totalorder %s19, 3
      %p266 = pnand %p264, %p265
      %p267 = pneg %p266
      // Predicated region
      $region37: #{_patch_embed_forward.5} parent=5 // pred_check
        _
      $region38: #{_patch_embed_forward.5} parent=5 // pred_check_branch
        %269 = sbr.rel (%p266) target = $region40
      $region39: #{_patch_embed_forward.5} parent=5 // pred_region
        %s270 = ssub.s32 %s19, 1
        %s271 = sand.u32 %s46, 1
        %s272 = scalar_lea.sflag [#allocation3], %s271
        %s273 = sand.u32 %s46, 1
        %s274 = smul.addr %s273, 16
        %s275 = scalar_lea.vmem [#allocation2], %s274
        // Predicated region
        $region41: #{_patch_embed_forward.5} parent=39 // pred_check
          %p276 = pneg %p59
        $region42: #{_patch_embed_forward.5} parent=39 // pred_check_branch
          %278 = sbr.rel (%p276) target = $region44
        $region43: #{_patch_embed_forward.5} parent=39 // pred_region
          %279 = dma.done %s272, 256
        $region44: #{_patch_embed_forward.5} parent=39 // pred_fallthru
          _
        // Predicated region
        $region45: #{_patch_embed_forward.5} parent=39 // pred_check
          %p280 = pneg %p80
        $region46: #{_patch_embed_forward.5} parent=39 // pred_check_branch
          %282 = sbr.rel (%p280) target = $region48
        $region47: #{_patch_embed_forward.5} parent=39 // pred_region
          %283 = dma.done [#allocation6], 64
        $region48: #{_patch_embed_forward.5} parent=39 // pred_fallthru
          _
        // Predicated region
        $region49: #{_patch_embed_forward.5} parent=39 // pred_check
          %p284 = pneg %p101
        $region50: #{_patch_embed_forward.5} parent=39 // pred_check_branch
          %286 = sbr.rel (%p284) target = $region52
        $region51: #{_patch_embed_forward.5} parent=39 // pred_region
          %287 = dma.done [#allocation6], 64
        $region52: #{_patch_embed_forward.5} parent=39 // pred_fallthru
          _
        // Predicated region
        $region53: #{_patch_embed_forward.5} parent=39 // pred_check
          %p288 = pneg %p122
        $region54: #{_patch_embed_forward.5} parent=39 // pred_check_branch
          %290 = sbr.rel (%p288) target = $region56
        $region55: #{_patch_embed_forward.5} parent=39 // pred_region
          %291 = dma.done [#allocation9], 64
        $region56: #{_patch_embed_forward.5} parent=39 // pred_fallthru
          _
        // Predicated region
        $region57: #{_patch_embed_forward.5} parent=39 // pred_check
          %p292 = pneg %p143
        $region58: #{_patch_embed_forward.5} parent=39 // pred_check_branch
          %294 = sbr.rel (%p292) target = $region60
        $region59: #{_patch_embed_forward.5} parent=39 // pred_region
          %295 = dma.done [#allocation9], 64
        $region60: #{_patch_embed_forward.5} parent=39 // pred_fallthru
          _
        %s296 = sand.u32 %s46, 1
        %s297 = scalar_lea.sflag [#allocation3], %s296
        %s298 = sand.u32 %s46, 1
        %s299 = smul.addr %s298, 16
        %s300 = scalar_lea.vmem [#allocation2], %s299
        %p301 = pneg %p59
        %p302 = pneg %p56
        %p303 = pneg %p80
        %p304 = pneg %p77
        %p305 = pneg %p101
        %p306 = pneg %p98
        %p307 = pneg %p122
        %p308 = pneg %p119
        %p309 = pneg %p143
        %p310 = pneg %p140
        %p311 = pneg %p171
        %p312 = pneg %p168
        %s313 = sand.u32 %s158, 1
        %s314 = scalar_lea.sflag [#allocation4], %s313
        %s315 = sand.u32 %s158, 1
        %s316 = smul.addr %s315, 32
        %s317 = scalar_lea.vmem [#allocation11], %s316
        %v318 = vld [vmem:[%s275] sm:$0xf]
        %v319 = vld [vmem:[%s275 + $0x4] sm:$0xf]
        %v320 = vld [vmem:[%s275 + $0x8] sm:$0xf]
        %v321 = vld [vmem:[%s275 + $0xc] sm:$0xf]
        %v322 = vunpack.c.l.bf16 %v318
        %v323 = vunpack.c.l.bf16 %v319
        %v324 = vunpack.c.l.bf16 %v320
        %v325 = vunpack.c.l.bf16 %v321
        %v326 = vld [vmem:[#allocation5] sm:$0x1]
        %v327 = vld [vmem:[#allocation5 + $0x1] sm:$0x1]
        %v328 = vld [vmem:[#allocation5 + $0x2] sm:$0x1]
        %v329 = vld [vmem:[#allocation5 + $0x3] sm:$0x1]
        %v334 = vlaneseq
        %v335 = vshrl.u32 %v334, 7
        %v336 = vsub.s32 0, %v335
        %v337 = vrot.slane %v326, %v336
        %v338 = vlaneseq
        %v339 = vshrl.u32 %v338, 7
        %v340 = vsub.s32 0, %v339
        %v341 = vrot.slane %v327, %v340
        %v342 = vlaneseq
        %v343 = vshrl.u32 %v342, 7
        %v344 = vsub.s32 0, %v343
        %v345 = vrot.slane %v328, %v344
        %v346 = vlaneseq
        %v347 = vshrl.u32 %v346, 7
        %v348 = vsub.s32 0, %v347
        %v349 = vrot.slane %v329, %v348
        %350 = vset.pattern.permute.xlu0 0
        %351 = vperm.xlu0 %350, %v337
        %v352 = vpop.permute.xlu0 %351
        %354 = vset.pattern.permute.xlu0 0
        %355 = vperm.xlu0 %354, %v341
        %v356 = vpop.permute.xlu0 %355
        %358 = vset.pattern.permute.xlu0 0
        %359 = vperm.xlu0 %358, %v345
        %v360 = vpop.permute.xlu0 %359
        %362 = vset.pattern.permute.xlu0 0
        %363 = vperm.xlu0 %362, %v349
        %v364 = vpop.permute.xlu0 %363
        %v366 = vmul.f32 %v322, %v352
        %v367 = vmul.f32 %v323, %v356
        %v368 = vmul.f32 %v324, %v360
        %v369 = vmul.f32 %v325, %v364
        %v370 = vld [vmem:[#allocation7] sm:$0x1]
        %v371 = vld [vmem:[#allocation7 + $0x1] sm:$0x1]
        %v372 = vld [vmem:[#allocation7 + $0x2] sm:$0x1]
        %v373 = vld [vmem:[#allocation7 + $0x3] sm:$0x1]
        %v378 = vlaneseq
        %v379 = vshrl.u32 %v378, 7
        %v380 = vsub.s32 0, %v379
        %v381 = vrot.slane %v370, %v380
        %v382 = vlaneseq
        %v383 = vshrl.u32 %v382, 7
        %v384 = vsub.s32 0, %v383
        %v385 = vrot.slane %v371, %v384
        %v386 = vlaneseq
        %v387 = vshrl.u32 %v386, 7
        %v388 = vsub.s32 0, %v387
        %v389 = vrot.slane %v372, %v388
        %v390 = vlaneseq
        %v391 = vshrl.u32 %v390, 7
        %v392 = vsub.s32 0, %v391
        %v393 = vrot.slane %v373, %v392
        %394 = vset.pattern.permute.xlu0 0
        %395 = vperm.xlu0 %394, %v381
        %v396 = vpop.permute.xlu0 %395
        %398 = vset.pattern.permute.xlu0 0
        %399 = vperm.xlu0 %398, %v385
        %v400 = vpop.permute.xlu0 %399
        %402 = vset.pattern.permute.xlu0 0
        %403 = vperm.xlu0 %402, %v389
        %v404 = vpop.permute.xlu0 %403
        %406 = vset.pattern.permute.xlu0 0
        %407 = vperm.xlu0 %406, %v393
        %v408 = vpop.permute.xlu0 %407
        %v410 = vadd.f32 %v366, %v396
        %v411 = vadd.f32 %v367, %v400
        %v412 = vadd.f32 %v368, %v404
        %v413 = vadd.f32 %v369, %v408
        %v414 = vmax.f32 %v410, 0.0
        %v415 = vmax.f32 %v411, 0.0
        %v416 = vmax.f32 %v412, 0.0
        %v417 = vmax.f32 %v413, 0.0
        %v418 = vld [vmem:[#allocation8] sm:$0x1]
        %v419 = vld [vmem:[#allocation8 + $0x1] sm:$0x1]
        %v420 = vld [vmem:[#allocation8 + $0x2] sm:$0x1]
        %v421 = vld [vmem:[#allocation8 + $0x3] sm:$0x1]
        %v426 = vlaneseq
        %v427 = vshrl.u32 %v426, 7
        %v428 = vsub.s32 0, %v427
        %v429 = vrot.slane %v418, %v428
        %v430 = vlaneseq
        %v431 = vshrl.u32 %v430, 7
        %v432 = vsub.s32 0, %v431
        %v433 = vrot.slane %v419, %v432
        %v434 = vlaneseq
        %v435 = vshrl.u32 %v434, 7
        %v436 = vsub.s32 0, %v435
        %v437 = vrot.slane %v420, %v436
        %v438 = vlaneseq
        %v439 = vshrl.u32 %v438, 7
        %v440 = vsub.s32 0, %v439
        %v441 = vrot.slane %v421, %v440
        %442 = vset.pattern.permute.xlu0 0
        %443 = vperm.xlu0 %442, %v429
        %v444 = vpop.permute.xlu0 %443
        %446 = vset.pattern.permute.xlu0 0
        %447 = vperm.xlu0 %446, %v433
        %v448 = vpop.permute.xlu0 %447
        %450 = vset.pattern.permute.xlu0 0
        %451 = vperm.xlu0 %450, %v437
        %v452 = vpop.permute.xlu0 %451
        %454 = vset.pattern.permute.xlu0 0
        %455 = vperm.xlu0 %454, %v441
        %v456 = vpop.permute.xlu0 %455
        %v458 = vmul.f32 %v414, %v444
        %v459 = vmul.f32 %v415, %v448
        %v460 = vmul.f32 %v416, %v452
        %v461 = vmul.f32 %v417, %v456
        %v462 = vld [vmem:[#allocation10] sm:$0x1]
        %v463 = vld [vmem:[#allocation10 + $0x1] sm:$0x1]
        %v464 = vld [vmem:[#allocation10 + $0x2] sm:$0x1]
        %v465 = vld [vmem:[#allocation10 + $0x3] sm:$0x1]
        %v470 = vlaneseq
        %v471 = vshrl.u32 %v470, 7
        %v472 = vsub.s32 0, %v471
        %v473 = vrot.slane %v462, %v472
        %v474 = vlaneseq
        %v475 = vshrl.u32 %v474, 7
        %v476 = vsub.s32 0, %v475
        %v477 = vrot.slane %v463, %v476
        %v478 = vlaneseq
        %v479 = vshrl.u32 %v478, 7
        %v480 = vsub.s32 0, %v479
        %v481 = vrot.slane %v464, %v480
        %v482 = vlaneseq
        %v483 = vshrl.u32 %v482, 7
        %v484 = vsub.s32 0, %v483
        %v485 = vrot.slane %v465, %v484
        %486 = vset.pattern.permute.xlu0 0
        %487 = vperm.xlu0 %486, %v473
        %v488 = vpop.permute.xlu0 %487
        %490 = vset.pattern.permute.xlu0 0
        %491 = vperm.xlu0 %490, %v477
        %v492 = vpop.permute.xlu0 %491
        %494 = vset.pattern.permute.xlu0 0
        %495 = vperm.xlu0 %494, %v481
        %v496 = vpop.permute.xlu0 %495
        %498 = vset.pattern.permute.xlu0 0
        %499 = vperm.xlu0 %498, %v485
        %v500 = vpop.permute.xlu0 %499
        %v502 = vadd.f32 %v458, %v488
        %v503 = vadd.f32 %v459, %v492
        %v504 = vadd.f32 %v460, %v496
        %v505 = vadd.f32 %v461, %v500
        %vm506 = vcmask 64512
        %507 = vst.msk [vmem:[%s317] sm:$0xff] %vm506, %v502
        %508 = vst.msk [vmem:[%s317 + $0x8] sm:$0xff] %vm506, %v503
        %509 = vst.msk [vmem:[%s317 + $0x10] sm:$0xff] %vm506, %v504
        %510 = vst.msk [vmem:[%s317 + $0x18] sm:$0xff] %vm506, %v505
        %s511 = sand.u32 %s158, 1
        %s512 = scalar_lea.sflag [#allocation4], %s511
        %s513 = sand.u32 %s158, 1
        %s514 = smul.addr %s513, 32
        %s515 = scalar_lea.vmem [#allocation11], %s514
        // Predicated region
        $region61: #{_patch_embed_forward.5} parent=39 // pred_check
          %p516 = pneg %p168
        $region62: #{_patch_embed_forward.5} parent=39 // pred_check_branch
          %518 = sbr.rel (%p516) target = $region64
        $region63: #{_patch_embed_forward.5} parent=39 // pred_region
          %s520 = ssub.s32 512, 512
          %521 = vsyncadd %s512, %s520
          %s522 = smul.addr %s28, 4
          %s523 = sadd.s32 %s29, %s522
          %s524 = smul.addr %s523, 128
          %s525 = scalar_lea.hbm %s5, %s524
          %s526 = sshll.u32 %s515, 4
          %s527 = int_to_ptr.vmem [resolvable:$true] %s526
          %532 = dma.vmem_to_hbm [thread:$0]  %s527, 512, %s525, %s512, 128, 128, 8
        $region64: #{_patch_embed_forward.5} parent=39 // pred_fallthru
          _
      $region40: #{_patch_embed_forward.5} parent=5 // pred_fallthru
        _
      %p533 = scmp.le.s32.totalorder 2, %s19
      // Predicated region
      $region65: #{_patch_embed_forward.5} parent=5 // pred_check
        %p534 = pneg %p533
      $region66: #{_patch_embed_forward.5} parent=5 // pred_check_branch
        %536 = sbr.rel (%p534) target = $region68
      $region67: #{_patch_embed_forward.5} parent=5 // pred_region
        %s537 = ssub.s32 %s19, 2
        // Predicated region
        $region69: #{_patch_embed_forward.5} parent=67 // pred_check
          %p538 = pneg %p174
        $region70: #{_patch_embed_forward.5} parent=67 // pred_check_branch
          %540 = sbr.rel (%p538) target = $region72
        $region71: #{_patch_embed_forward.5} parent=67 // pred_region
          %s541 = sand.u32 %s159, 1
          %s542 = scalar_lea.sflag [#allocation4], %s541
          %s543 = sand.u32 %s159, 1
          %s544 = smul.addr %s543, 32
          %s545 = scalar_lea.vmem [#allocation11], %s544
          %546 = dma.done %s542, 512
        $region72: #{_patch_embed_forward.5} parent=67 // pred_fallthru
          _
      $region68: #{_patch_embed_forward.5} parent=5 // pred_fallthru
        _
    $region6: #{_patch_embed_forward.5} parent=1 // loop_footer
      %s23 = sadd.s32 1, %s19
    $region7: #{_patch_embed_forward.5} parent=1 // loop_footer_branch
      %18 = sbr.rel target = $region3
    $region8: #{_patch_embed_forward.5} parent=1 // loop_exit
      _
    %547 = vsyncpa [#allocation3], 1
    %s548 = scalar_lea.sflag [#allocation3], 1
    %549 = vsyncpa %s548, 1
    %550 = vsyncpa [#allocation6], 1
    %551 = vsyncpa [#allocation9], 1
    %552 = vsyncpa [#allocation4], 1
    %s553 = scalar_lea.sflag [#allocation4], 1
    %554 = vsyncpa %s553, 1

// kernel: _patch_embed_forward.4
$region0: #{_patch_embed_forward.4}
  #allocation0 [shape = 'u32[]', space=smem, size = 0x4, offset = 0x4, fixed_abs, tag = 'smem constant byte address 0x4 - core index']
  #allocation1 [shape = 'u32[144,128]{1,0:T(1,128)}', space=vmem, size = 0x12000, scoped, tag = 'internal scratch']
  %s0 = inlined_call_operand.hbm [shape: bf16[2,4,8,8], index: 0, kind: input, shape index: {}]
  %s1 = inlined_call_operand.hbm [shape: f32[4,1,1], index: 1, kind: input, shape index: {}]
  %s2 = inlined_call_operand.hbm [shape: f32[4,1,1], index: 2, kind: input, shape index: {}]
  %s3 = inlined_call_operand.hbm [shape: f32[2,4,1,8], index: 3, kind: output, shape index: {0}]
  %s4 = inlined_call_operand.hbm [shape: f32[2,4,1,8], index: 4, kind: output, shape index: {1}]
  %5 = xla_tuple %s3, %s4
  %s6 = sld [smem:[#allocation0]]
  $region69: #{_patch_embed_forward.4} parent=0
    _
  %s8 = ssub.s32 1, %s6
  %s9 = scalar_select 0, %s8, %s6
  $region1: #{_patch_embed_forward.4} parent=0
    #allocation2 [shape = 'u8[16384]{0}', space=vmem, size = 0x4000, scoped, tag = 'input window, operand 0']
    #allocation3 [shape = 's32[2]{0}', space=sflag, size = 0x8, scoped, tag = 'scoped memory for _patch_embed_forward.4']
    #allocation4 [shape = 's32[2]{0}', space=sflag, size = 0x8, scoped, tag = 'scoped memory for _patch_embed_forward.4']
    #allocation5 [shape = 'u8[2048]{0}', space=vmem, size = 0x800, scoped, tag = 'input window, operand 1, single buffered']
    #allocation6 [shape = 's32[1]{0}', space=sflag, size = 0x4, scoped, tag = 'scoped memory for _patch_embed_forward.4']
    #allocation7 [shape = 'u8[2048]{0}', space=vmem, size = 0x800, scoped, tag = 'input window, operand 2, single buffered']
    #allocation8 [shape = 'u8[4096]{0}', space=vmem, size = 0x1000, scoped, tag = 'output window, operand 0']
    #allocation9 [shape = 'u8[4096]{0}', space=vmem, size = 0x1000, scoped, tag = 'output window, operand 1']
    #allocation10 [shape = 's32[2]{0}', space=sflag, size = 0x8, scoped, tag = 'scoped memory for _patch_embed_forward.4']
    %10 = vsyncpa [#allocation3], 0
    %s11 = scalar_lea.sflag [#allocation3], 1
    %12 = vsyncpa %s11, 0
    %13 = vsyncpa [#allocation6], 0
    %14 = vsyncpa [#allocation4], 0
    %s15 = scalar_lea.sflag [#allocation4], 1
    %16 = vsyncpa %s15, 0
    %17 = vsyncpa [#allocation10], 0
    %s18 = scalar_lea.sflag [#allocation10], 1
    %19 = vsyncpa %s18, 0
    loop: start=0, step=1, limit=4
    $region2: #{_patch_embed_forward.4} parent=1 // loop_pre_header
      _
    $region3: #{_patch_embed_forward.4} parent=1 // loop_header
      %s21 = sphi 0, %s25
      %p22 = scmp.ge.s32.totalorder %s21, 4
      %s28 = sphi 0, %s40
      %s29 = sphi 0, %s36
      %s30 = sphi 0, %s28
      %s31 = sphi 0, %s29
      %s32 = sphi 0, %s30
      %s33 = sphi 0, %s31
      %s45 = sphi 0, %s47
      %s48 = sphi 0, %s45
      %s49 = sphi 0, %s48
      %s65 = sphi 0, %s49
      %s69 = sphi 0, %s69
      %s71 = sphi 0, %s69
      %s72 = sphi 0, %s71
      %s86 = sphi 0, %s72
      %s90 = sphi 0, %s90
      %s92 = sphi 0, %s90
      %s93 = sphi 0, %s92
      %s107 = sphi 0, %s93
      %s113 = sphi 0, %s115
      %s116 = sphi 0, %s113
      %s117 = sphi 0, %s116
      %s133 = sphi 0, %s117
      %s139 = sphi 0, %s141
      %s142 = sphi 0, %s139
      %s143 = sphi 0, %s142
      %s159 = sphi 0, %s143
    $region4: #{_patch_embed_forward.4} parent=1 // loop_header_branch
      %24 = sbr.rel (%p22) target = $region8
    $region5: #{_patch_embed_forward.4} parent=1 // loop_body
      %s26 = ssub.s32 %s21, 1
      %s27 = ssub.s32 %s21, 2
      %s34 = sadd.s32 1, %s29
      %p35 = scmp.ge.s32.totalorder %s34, 1
      %s36 = scalar_select %p35, 0, %s34
      %s37 = sadd.s32 1, %s28
      %s38 = scalar_select %p35, %s37, %s28
      %p39 = scmp.ge.s32.totalorder %s38, 2
      %s40 = scalar_select %p39, 0, %s38
      %s41 = ssub.s32 %s28, %s40
      %s42 = ssub.s32 %s29, %s36
      %s43 = sor.u32 %s41, %s42
      %p44 = scmp.eq.s32.totalorder %s43, 0
      %s46 = sadd.s32 %s45, 1
      %s47 = scalar_select %p44, %s45, %s46
      %p50 = pneg %p44
      %p51 = scmp.eq.s32.totalorder %s21, 1
      %p52 = por %p50, %p51
      %p53 = scmp.ne.s32.totalorder %s45, %s48
      %p54 = scmp.eq.s32.totalorder %s21, 0
      %p55 = por %p53, %p54
      %p56 = scmp.ne.s32.totalorder %s45, %s48
      %p57 = scmp.eq.s32.totalorder %s26, 1
      %p58 = por %p56, %p57
      %p59 = scmp.ne.s32.totalorder %s48, %s49
      %p60 = scmp.eq.s32.totalorder %s26, 0
      %p61 = por %p59, %p60
      %p62 = scmp.ne.s32.totalorder %s48, %s49
      %p63 = scmp.eq.s32.totalorder %s27, 1
      %p64 = por %p62, %p63
      %p66 = scmp.ne.s32.totalorder %s49, %s65
      %p67 = scmp.eq.s32.totalorder %s27, 0
      %p68 = por %p66, %p67
      %s70 = sadd.s32 %s69, 1
      %p73 = scmp.eq.s32.totalorder %s21, 1
      %p74 = scmp.ne.s32.totalorder %s69, %s71
      %p75 = scmp.eq.s32.totalorder %s21, 0
      %p76 = por %p74, %p75
      %p77 = scmp.ne.s32.totalorder %s69, %s71
      %p78 = scmp.eq.s32.totalorder %s26, 1
      %p79 = por %p77, %p78
      %p80 = scmp.ne.s32.totalorder %s71, %s72
      %p81 = scmp.eq.s32.totalorder %s26, 0
      %p82 = por %p80, %p81
      %p83 = scmp.ne.s32.totalorder %s71, %s72
      %p84 = scmp.eq.s32.totalorder %s27, 1
      %p85 = por %p83, %p84
      %p87 = scmp.ne.s32.totalorder %s72, %s86
      %p88 = scmp.eq.s32.totalorder %s27, 0
      %p89 = por %p87, %p88
      %s91 = sadd.s32 %s90, 1
      %p94 = scmp.eq.s32.totalorder %s21, 1
      %p95 = scmp.ne.s32.totalorder %s90, %s92
      %p96 = scmp.eq.s32.totalorder %s21, 0
      %p97 = por %p95, %p96
      %p98 = scmp.ne.s32.totalorder %s90, %s92
      %p99 = scmp.eq.s32.totalorder %s26, 1
      %p100 = por %p98, %p99
      %p101 = scmp.ne.s32.totalorder %s92, %s93
      %p102 = scmp.eq.s32.totalorder %s26, 0
      %p103 = por %p101, %p102
      %p104 = scmp.ne.s32.totalorder %s92, %s93
      %p105 = scmp.eq.s32.totalorder %s27, 1
      %p106 = por %p104, %p105
      %p108 = scmp.ne.s32.totalorder %s93, %s107
      %p109 = scmp.eq.s32.totalorder %s27, 0
      %p110 = por %p108, %p109
      %s111 = ssub.s32 %s28, %s40
      %p112 = scmp.eq.s32.totalorder %s111, 0
      %s114 = sadd.s32 %s113, 1
      %s115 = scalar_select %p112, %s113, %s114
      %p118 = pneg %p112
      %p119 = scmp.eq.s32.totalorder %s21, 1
      %p120 = por %p118, %p119
      %p121 = scmp.ne.s32.totalorder %s113, %s116
      %p122 = scmp.eq.s32.totalorder %s21, 0
      %p123 = por %p121, %p122
      %p124 = scmp.ne.s32.totalorder %s113, %s116
      %p125 = scmp.eq.s32.totalorder %s26, 1
      %p126 = por %p124, %p125
      %p127 = scmp.ne.s32.totalorder %s116, %s117
      %p128 = scmp.eq.s32.totalorder %s26, 0
      %p129 = por %p127, %p128
      %p130 = scmp.ne.s32.totalorder %s116, %s117
      %p131 = scmp.eq.s32.totalorder %s27, 1
      %p132 = por %p130, %p131
      %p134 = scmp.ne.s32.totalorder %s117, %s133
      %p135 = scmp.eq.s32.totalorder %s27, 0
      %p136 = por %p134, %p135
      %s137 = ssub.s32 %s28, %s40
      %p138 = scmp.eq.s32.totalorder %s137, 0
      %s140 = sadd.s32 %s139, 1
      %s141 = scalar_select %p138, %s139, %s140
      %p144 = pneg %p138
      %p145 = scmp.eq.s32.totalorder %s21, 1
      %p146 = por %p144, %p145
      %p147 = scmp.ne.s32.totalorder %s139, %s142
      %p148 = scmp.eq.s32.totalorder %s21, 0
      %p149 = por %p147, %p148
      %p150 = scmp.ne.s32.totalorder %s139, %s142
      %p151 = scmp.eq.s32.totalorder %s26, 1
      %p152 = por %p150, %p151
      %p153 = scmp.ne.s32.totalorder %s142, %s143
      %p154 = scmp.eq.s32.totalorder %s26, 0
      %p155 = por %p153, %p154
      %p156 = scmp.ne.s32.totalorder %s142, %s143
      %p157 = scmp.eq.s32.totalorder %s27, 1
      %p158 = por %p156, %p157
      %p160 = scmp.ne.s32.totalorder %s143, %s159
      %p161 = scmp.eq.s32.totalorder %s27, 0
      %p162 = por %p160, %p161
      %p163 = scmp.le.s32.totalorder 1, %s21
      %p164 = scmp.lt.s32.totalorder %s21, 3
      %p165 = pnand %p163, %p164
      %p166 = pneg %p165
      // Predicated region
      $region9: #{_patch_embed_forward.4} parent=5 // pred_check
        _
      $region10: #{_patch_embed_forward.4} parent=5 // pred_check_branch
        %168 = sbr.rel (%p165) target = $region12
      $region11: #{_patch_embed_forward.4} parent=5 // pred_region
        %s169 = ssub.s32 %s21, 1
        // Predicated region
        $region13: #{_patch_embed_forward.4} parent=11 // pred_check
          %p170 = pneg %p82
        $region14: #{_patch_embed_forward.4} parent=11 // pred_check_branch
          %172 = sbr.rel (%p170) target = $region16
        $region15: #{_patch_embed_forward.4} parent=11 // pred_region
          %s174 = ssub.s32 64, 64
          %175 = vsyncadd [#allocation6], %s174
          %s176 = sshll.u32 [#allocation5], 4
          %s177 = int_to_ptr.vmem [resolvable:$true] %s176
          %182 = dma.hbm_to_vmem [thread:$0]  %s1, 64, %s177, [#allocation6], 16, 16, 1
        $region16: #{_patch_embed_forward.4} parent=11 // pred_fallthru
          _
        // Predicated region
        $region17: #{_patch_embed_forward.4} parent=11 // pred_check
          %p183 = pneg %p103
        $region18: #{_patch_embed_forward.4} parent=11 // pred_check_branch
          %185 = sbr.rel (%p183) target = $region20
        $region19: #{_patch_embed_forward.4} parent=11 // pred_region
          %s187 = ssub.s32 64, 64
          %188 = vsyncadd [#allocation6], %s187
          %s189 = sshll.u32 [#allocation7], 4
          %s190 = int_to_ptr.vmem [resolvable:$true] %s189
          %195 = dma.hbm_to_vmem [thread:$0]  %s2, 64, %s190, [#allocation6], 16, 16, 1
        $region20: #{_patch_embed_forward.4} parent=11 // pred_fallthru
          _
      $region12: #{_patch_embed_forward.4} parent=5 // pred_fallthru
        _
      %p196 = scmp.lt.s32.totalorder %s21, 2
      // Predicated region
      $region21: #{_patch_embed_forward.4} parent=5 // pred_check
        %p197 = pneg %p196
      $region22: #{_patch_embed_forward.4} parent=5 // pred_check_branch
        %199 = sbr.rel (%p197) target = $region24
      $region23: #{_patch_embed_forward.4} parent=5 // pred_region
        // Predicated region
        $region25: #{_patch_embed_forward.4} parent=23 // pred_check
          %p200 = pneg %p55
        $region26: #{_patch_embed_forward.4} parent=23 // pred_check_branch
          %202 = sbr.rel (%p200) target = $region28
        $region27: #{_patch_embed_forward.4} parent=23 // pred_region
          %s203 = sand.u32 %s45, 1
          %s204 = scalar_lea.sflag [#allocation3], %s203
          %s205 = sand.u32 %s45, 1
          %s206 = smul.addr %s205, 16
          %s207 = scalar_lea.vmem [#allocation2], %s206
          %s209 = ssub.s32 256, 256
          %210 = vsyncadd %s204, %s209
          %s211 = smul.addr %s28, 4
          %s212 = sadd.s32 %s29, %s211
          %s213 = smul.addr %s212, 64
          %s214 = scalar_lea.hbm %s0, %s213
          %s215 = sshll.u32 %s207, 4
          %s216 = int_to_ptr.vmem [resolvable:$true] %s215
          %221 = dma.hbm_to_vmem [thread:$0]  %s214, 256, %s216, %s204, 64, 64, 4
        $region28: #{_patch_embed_forward.4} parent=23 // pred_fallthru
          _
      $region24: #{_patch_embed_forward.4} parent=5 // pred_fallthru
        _
      %p222 = scmp.le.s32.totalorder 1, %s21
      %p223 = scmp.lt.s32.totalorder %s21, 3
      %p224 = pnand %p222, %p223
      %p225 = pneg %p224
      // Predicated region
      $region29: #{_patch_embed_forward.4} parent=5 // pred_check
        _
      $region30: #{_patch_embed_forward.4} parent=5 // pred_check_branch
        %227 = sbr.rel (%p224) target = $region32
      $region31: #{_patch_embed_forward.4} parent=5 // pred_region
        %s228 = ssub.s32 %s21, 1
        %s229 = sand.u32 %s48, 1
        %s230 = scalar_lea.sflag [#allocation3], %s229
        %s231 = sand.u32 %s48, 1
        %s232 = smul.addr %s231, 16
        %s233 = scalar_lea.vmem [#allocation2], %s232
        // Predicated region
        $region33: #{_patch_embed_forward.4} parent=31 // pred_check
          %p234 = pneg %p61
        $region34: #{_patch_embed_forward.4} parent=31 // pred_check_branch
          %236 = sbr.rel (%p234) target = $region36
        $region35: #{_patch_embed_forward.4} parent=31 // pred_region
          %237 = dma.done %s230, 256
        $region36: #{_patch_embed_forward.4} parent=31 // pred_fallthru
          _
        // Predicated region
        $region37: #{_patch_embed_forward.4} parent=31 // pred_check
          %p238 = pneg %p82
        $region38: #{_patch_embed_forward.4} parent=31 // pred_check_branch
          %240 = sbr.rel (%p238) target = $region40
        $region39: #{_patch_embed_forward.4} parent=31 // pred_region
          %241 = dma.done [#allocation6], 64
        $region40: #{_patch_embed_forward.4} parent=31 // pred_fallthru
          _
        // Predicated region
        $region41: #{_patch_embed_forward.4} parent=31 // pred_check
          %p242 = pneg %p103
        $region42: #{_patch_embed_forward.4} parent=31 // pred_check_branch
          %244 = sbr.rel (%p242) target = $region44
        $region43: #{_patch_embed_forward.4} parent=31 // pred_region
          %245 = dma.done [#allocation6], 64
        $region44: #{_patch_embed_forward.4} parent=31 // pred_fallthru
          _
        %s246 = sand.u32 %s48, 1
        %s247 = scalar_lea.sflag [#allocation3], %s246
        %s248 = sand.u32 %s48, 1
        %s249 = smul.addr %s248, 16
        %s250 = scalar_lea.vmem [#allocation2], %s249
        %p251 = pneg %p61
        %p252 = pneg %p58
        %p253 = pneg %p82
        %p254 = pneg %p79
        %p255 = pneg %p103
        %p256 = pneg %p100
        %p257 = pneg %p129
        %p258 = pneg %p126
        %s259 = sand.u32 %s116, 1
        %s260 = scalar_lea.sflag [#allocation4], %s259
        %s261 = sand.u32 %s116, 1
        %s262 = smul.addr %s261, 4
        %s263 = scalar_lea.vmem [#allocation8], %s262
        %p264 = pneg %p155
        %p265 = pneg %p152
        %s266 = sand.u32 %s142, 1
        %s267 = scalar_lea.sflag [#allocation10], %s266
        %s268 = sand.u32 %s142, 1
        %s269 = smul.addr %s268, 4
        %s270 = scalar_lea.vmem [#allocation9], %s269
        %p271 = scmp.eq.s32.totalorder %s31, 0
        // Predicated region
        $region45: #{_patch_embed_forward.4} parent=31 // pred_check
          %p272 = pneg %p271
        $region46: #{_patch_embed_forward.4} parent=31 // pred_check_branch
          %274 = sbr.rel (%p272) target = $region48
        $region47: #{_patch_embed_forward.4} parent=31 // pred_region
          %vm275 = vcmask 57344
          %276 = vst.msk [vmem:[%s263] sm:$0x1] %vm275, 0.0
          %277 = vst.msk [vmem:[%s263 + $0x1] sm:$0x1] %vm275, 0.0
          %278 = vst.msk [vmem:[%s263 + $0x2] sm:$0x1] %vm275, 0.0
          %279 = vst.msk [vmem:[%s263 + $0x3] sm:$0x1] %vm275, 0.0
          %280 = vst.msk [vmem:[%s270] sm:$0x1] %vm275, 0.0
          %281 = vst.msk [vmem:[%s270 + $0x1] sm:$0x1] %vm275, 0.0
          %282 = vst.msk [vmem:[%s270 + $0x2] sm:$0x1] %vm275, 0.0
          %283 = vst.msk [vmem:[%s270 + $0x3] sm:$0x1] %vm275, 0.0
        $region48: #{_patch_embed_forward.4} parent=31 // pred_fallthru
          _
        %v284 = vld [vmem:[%s233] sm:$0xf]
        %v285 = vld [vmem:[%s233 + $0x4] sm:$0xf]
        %v286 = vld [vmem:[%s233 + $0x8] sm:$0xf]
        %v287 = vld [vmem:[%s233 + $0xc] sm:$0xf]
        %v288 = vunpack.c.l.bf16 %v284
        %v289 = vunpack.c.l.bf16 %v285
        %v290 = vunpack.c.l.bf16 %v286
        %v291 = vunpack.c.l.bf16 %v287
        %v292 = vld [vmem:[#allocation5] sm:$0x1]
        %v293 = vld [vmem:[#allocation5 + $0x1] sm:$0x1]
        %v294 = vld [vmem:[#allocation5 + $0x2] sm:$0x1]
        %v295 = vld [vmem:[#allocation5 + $0x3] sm:$0x1]
        %v300 = vlaneseq
        %v301 = vshrl.u32 %v300, 7
        %v302 = vsub.s32 0, %v301
        %v303 = vrot.slane %v292, %v302
        %v304 = vlaneseq
        %v305 = vshrl.u32 %v304, 7
        %v306 = vsub.s32 0, %v305
        %v307 = vrot.slane %v293, %v306
        %v308 = vlaneseq
        %v309 = vshrl.u32 %v308, 7
        %v310 = vsub.s32 0, %v309
        %v311 = vrot.slane %v294, %v310
        %v312 = vlaneseq
        %v313 = vshrl.u32 %v312, 7
        %v314 = vsub.s32 0, %v313
        %v315 = vrot.slane %v295, %v314
        %316 = vset.pattern.permute.xlu0 0
        %317 = vperm.xlu0 %316, %v303
        %v318 = vpop.permute.xlu0 %317
        %320 = vset.pattern.permute.xlu0 0
        %321 = vperm.xlu0 %320, %v307
        %v322 = vpop.permute.xlu0 %321
        %324 = vset.pattern.permute.xlu0 0
        %325 = vperm.xlu0 %324, %v311
        %v326 = vpop.permute.xlu0 %325
        %328 = vset.pattern.permute.xlu0 0
        %329 = vperm.xlu0 %328, %v315
        %v330 = vpop.permute.xlu0 %329
        %v332 = vmul.f32 %v288, %v318
        %v333 = vmul.f32 %v289, %v322
        %v334 = vmul.f32 %v290, %v326
        %v335 = vmul.f32 %v291, %v330
        %v336 = vld [vmem:[#allocation7] sm:$0x1]
        %v337 = vld [vmem:[#allocation7 + $0x1] sm:$0x1]
        %v338 = vld [vmem:[#allocation7 + $0x2] sm:$0x1]
        %v339 = vld [vmem:[#allocation7 + $0x3] sm:$0x1]
        %v344 = vlaneseq
        %v345 = vshrl.u32 %v344, 7
        %v346 = vsub.s32 0, %v345
        %v347 = vrot.slane %v336, %v346
        %v348 = vlaneseq
        %v349 = vshrl.u32 %v348, 7
        %v350 = vsub.s32 0, %v349
        %v351 = vrot.slane %v337, %v350
        %v352 = vlaneseq
        %v353 = vshrl.u32 %v352, 7
        %v354 = vsub.s32 0, %v353
        %v355 = vrot.slane %v338, %v354
        %v356 = vlaneseq
        %v357 = vshrl.u32 %v356, 7
        %v358 = vsub.s32 0, %v357
        %v359 = vrot.slane %v339, %v358
        %360 = vset.pattern.permute.xlu0 0
        %361 = vperm.xlu0 %360, %v347
        %v362 = vpop.permute.xlu0 %361
        %364 = vset.pattern.permute.xlu0 0
        %365 = vperm.xlu0 %364, %v351
        %v366 = vpop.permute.xlu0 %365
        %368 = vset.pattern.permute.xlu0 0
        %369 = vperm.xlu0 %368, %v355
        %v370 = vpop.permute.xlu0 %369
        %372 = vset.pattern.permute.xlu0 0
        %373 = vperm.xlu0 %372, %v359
        %v374 = vpop.permute.xlu0 %373
        %v376 = vadd.f32 %v332, %v362
        %v377 = vadd.f32 %v333, %v366
        %v378 = vadd.f32 %v334, %v370
        %v379 = vadd.f32 %v335, %v374
        %v380 = vmax.f32 %v376, 0.0
        %v381 = vmax.f32 %v377, 0.0
        %v382 = vmax.f32 %v378, 0.0
        %v383 = vmax.f32 %v379, 0.0
        %v384 = vld [vmem:[%s263] sm:$0x1]
        %v385 = vld [vmem:[%s263 + $0x1] sm:$0x1]
        %v386 = vld [vmem:[%s263 + $0x2] sm:$0x1]
        %v387 = vld [vmem:[%s263 + $0x3] sm:$0x1]
        %vm388 = vcmask 64512
        %v389 = vsel %vm388, %v380, 0.0
        %v390 = vrot.slane %v389, 4
        %v391 = vadd.f32 %v389, %v390
        %v392 = vrot.slane %v391, 2
        %v393 = vadd.f32 %v391, %v392
        %v394 = vrot.slane %v393, 1
        %v395 = vadd.f32 %v393, %v394
        %v396 = vsel %vm388, %v381, 0.0
        %v397 = vrot.slane %v396, 4
        %v398 = vadd.f32 %v396, %v397
        %v399 = vrot.slane %v398, 2
        %v400 = vadd.f32 %v398, %v399
        %v401 = vrot.slane %v400, 1
        %v402 = vadd.f32 %v400, %v401
        %v403 = vsel %vm388, %v382, 0.0
        %v404 = vrot.slane %v403, 4
        %v405 = vadd.f32 %v403, %v404
        %v406 = vrot.slane %v405, 2
        %v407 = vadd.f32 %v405, %v406
        %v408 = vrot.slane %v407, 1
        %v409 = vadd.f32 %v407, %v408
        %v410 = vsel %vm388, %v383, 0.0
        %v411 = vrot.slane %v410, 4
        %v412 = vadd.f32 %v410, %v411
        %v413 = vrot.slane %v412, 2
        %v414 = vadd.f32 %v412, %v413
        %v415 = vrot.slane %v414, 1
        %v416 = vadd.f32 %v414, %v415
        %v417 = vadd.f32 %v384, %v395
        %v418 = vadd.f32 %v385, %v402
        %v419 = vadd.f32 %v386, %v409
        %v420 = vadd.f32 %v387, %v416
        %vm421 = vcmask 57344
        %422 = vst.msk [vmem:[%s263] sm:$0x1] %vm421, %v417
        %423 = vst.msk [vmem:[%s263 + $0x1] sm:$0x1] %vm421, %v418
        %424 = vst.msk [vmem:[%s263 + $0x2] sm:$0x1] %vm421, %v419
        %425 = vst.msk [vmem:[%s263 + $0x3] sm:$0x1] %vm421, %v420
        %v426 = vld [vmem:[%s270] sm:$0x1]
        %v427 = vld [vmem:[%s270 + $0x1] sm:$0x1]
        %v428 = vld [vmem:[%s270 + $0x2] sm:$0x1]
        %v429 = vld [vmem:[%s270 + $0x3] sm:$0x1]
        %v430 = vmul.f32 %v380, %v380
        %v431 = vmul.f32 %v381, %v381
        %v432 = vmul.f32 %v382, %v382
        %v433 = vmul.f32 %v383, %v383
        %v434 = vsel %vm388, %v430, 0.0
        %v435 = vrot.slane %v434, 4
        %v436 = vadd.f32 %v434, %v435
        %v437 = vrot.slane %v436, 2
        %v438 = vadd.f32 %v436, %v437
        %v439 = vrot.slane %v438, 1
        %v440 = vadd.f32 %v438, %v439
        %v441 = vsel %vm388, %v431, 0.0
        %v442 = vrot.slane %v441, 4
        %v443 = vadd.f32 %v441, %v442
        %v444 = vrot.slane %v443, 2
        %v445 = vadd.f32 %v443, %v444
        %v446 = vrot.slane %v445, 1
        %v447 = vadd.f32 %v445, %v446
        %v448 = vsel %vm388, %v432, 0.0
        %v449 = vrot.slane %v448, 4
        %v450 = vadd.f32 %v448, %v449
        %v451 = vrot.slane %v450, 2
        %v452 = vadd.f32 %v450, %v451
        %v453 = vrot.slane %v452, 1
        %v454 = vadd.f32 %v452, %v453
        %v455 = vsel %vm388, %v433, 0.0
        %v456 = vrot.slane %v455, 4
        %v457 = vadd.f32 %v455, %v456
        %v458 = vrot.slane %v457, 2
        %v459 = vadd.f32 %v457, %v458
        %v460 = vrot.slane %v459, 1
        %v461 = vadd.f32 %v459, %v460
        %v462 = vadd.f32 %v426, %v440
        %v463 = vadd.f32 %v427, %v447
        %v464 = vadd.f32 %v428, %v454
        %v465 = vadd.f32 %v429, %v461
        %466 = vst.msk [vmem:[%s270] sm:$0x1] %vm421, %v462
        %467 = vst.msk [vmem:[%s270 + $0x1] sm:$0x1] %vm421, %v463
        %468 = vst.msk [vmem:[%s270 + $0x2] sm:$0x1] %vm421, %v464
        %469 = vst.msk [vmem:[%s270 + $0x3] sm:$0x1] %vm421, %v465
        %s470 = sand.u32 %s116, 1
        %s471 = scalar_lea.sflag [#allocation4], %s470
        %s472 = sand.u32 %s116, 1
        %s473 = smul.addr %s472, 4
        %s474 = scalar_lea.vmem [#allocation8], %s473
        %s475 = sand.u32 %s142, 1
        %s476 = scalar_lea.sflag [#allocation10], %s475
        %s477 = sand.u32 %s142, 1
        %s478 = smul.addr %s477, 4
        %s479 = scalar_lea.vmem [#allocation9], %s478
        // Predicated region
        $region49: #{_patch_embed_forward.4} parent=31 // pred_check
          %p480 = pneg %p126
        $region50: #{_patch_embed_forward.4} parent=31 // pred_check_branch
          %482 = sbr.rel (%p480) target = $region52
        $region51: #{_patch_embed_forward.4} parent=31 // pred_region
          %s484 = ssub.s32 64, 64
          %485 = vsyncadd %s471, %s484
          %s486 = smul.addr %s30, 4
          %s487 = smul.addr %s486, 16
          %s488 = scalar_lea.hbm %s3, %s487
          %s489 = sshll.u32 %s474, 4
          %s490 = int_to_ptr.vmem [resolvable:$true] %s489
          %495 = dma.vmem_to_hbm [thread:$0]  %s490, 64, %s488, %s471, 16, 16, 1
        $region52: #{_patch_embed_forward.4} parent=31 // pred_fallthru
          _
        // Predicated region
        $region53: #{_patch_embed_forward.4} parent=31 // pred_check
          %p496 = pneg %p152
        $region54: #{_patch_embed_forward.4} parent=31 // pred_check_branch
          %498 = sbr.rel (%p496) target = $region56
        $region55: #{_patch_embed_forward.4} parent=31 // pred_region
          %s500 = ssub.s32 64, 64
          %501 = vsyncadd %s476, %s500
          %s502 = smul.addr %s30, 4
          %s503 = smul.addr %s502, 16
          %s504 = scalar_lea.hbm %s4, %s503
          %s505 = sshll.u32 %s479, 4
          %s506 = int_to_ptr.vmem [resolvable:$true] %s505
          %511 = dma.vmem_to_hbm [thread:$0]  %s506, 64, %s504, %s476, 16, 16, 1
        $region56: #{_patch_embed_forward.4} parent=31 // pred_fallthru
          _
      $region32: #{_patch_embed_forward.4} parent=5 // pred_fallthru
        _
      %p512 = scmp.le.s32.totalorder 2, %s21
      // Predicated region
      $region57: #{_patch_embed_forward.4} parent=5 // pred_check
        %p513 = pneg %p512
      $region58: #{_patch_embed_forward.4} parent=5 // pred_check_branch
        %515 = sbr.rel (%p513) target = $region60
      $region59: #{_patch_embed_forward.4} parent=5 // pred_region
        %s516 = ssub.s32 %s21, 2
        // Predicated region
        $region61: #{_patch_embed_forward.4} parent=59 // pred_check
          %p517 = pneg %p132
        $region62: #{_patch_embed_forward.4} parent=59 // pred_check_branch
          %519 = sbr.rel (%p517) target = $region64
        $region63: #{_patch_embed_forward.4} parent=59 // pred_region
          %s520 = sand.u32 %s117, 1
          %s521 = scalar_lea.sflag [#allocation4], %s520
          %s522 = sand.u32 %s117, 1
          %s523 = smul.addr %s522, 4
          %s524 = scalar_lea.vmem [#allocation8], %s523
          %525 = dma.done %s521, 64
        $region64: #{_patch_embed_forward.4} parent=59 // pred_fallthru
          _
        // Predicated region
        $region65: #{_patch_embed_forward.4} parent=59 // pred_check
          %p526 = pneg %p158
        $region66: #{_patch_embed_forward.4} parent=59 // pred_check_branch
          %528 = sbr.rel (%p526) target = $region68
        $region67: #{_patch_embed_forward.4} parent=59 // pred_region
          %s529 = sand.u32 %s143, 1
          %s530 = scalar_lea.sflag [#allocation10], %s529
          %s531 = sand.u32 %s143, 1
          %s532 = smul.addr %s531, 4
          %s533 = scalar_lea.vmem [#allocation9], %s532
          %534 = dma.done %s530, 64
        $region68: #{_patch_embed_forward.4} parent=59 // pred_fallthru
          _
      $region60: #{_patch_embed_forward.4} parent=5 // pred_fallthru
        _
    $region6: #{_patch_embed_forward.4} parent=1 // loop_footer
      %s25 = sadd.s32 1, %s21
    $region7: #{_patch_embed_forward.4} parent=1 // loop_footer_branch
      %20 = sbr.rel target = $region3
    $region8: #{_patch_embed_forward.4} parent=1 // loop_exit
      _
    %535 = vsyncpa [#allocation3], 1
    %s536 = scalar_lea.sflag [#allocation3], 1
    %537 = vsyncpa %s536, 1
    %538 = vsyncpa [#allocation6], 1
    %539 = vsyncpa [#allocation4], 1
    %s540 = scalar_lea.sflag [#allocation4], 1
    %541 = vsyncpa %s540, 1
    %542 = vsyncpa [#allocation10], 1
    %s543 = scalar_lea.sflag [#allocation10], 1
    %544 = vsyncpa %s543, 1

// kernel: _patch_embed_forward.3
$region0: #{_patch_embed_forward.3}
  #allocation0 [shape = 'u32[]', space=smem, size = 0x4, offset = 0x4, fixed_abs, tag = 'smem constant byte address 0x4 - core index']
  #allocation1 [shape = 'u32[144,128]{1,0:T(1,128)}', space=vmem, size = 0x12000, scoped, tag = 'internal scratch']
  %s0 = inlined_call_operand.hbm [shape: f32[2,4,16,16], index: 0, kind: input, shape index: {}]
  %s1 = inlined_call_operand.hbm [shape: f32[64], index: 1, kind: input, shape index: {}]
  %s2 = inlined_call_operand.hbm [shape: bf16[2,8,16], index: 2, kind: input, shape index: {}]
  %s3 = inlined_call_operand.hbm [shape: bf16[2,16,8], index: 3, kind: input, shape index: {}]
  %s4 = inlined_call_operand.hbm [shape: bf16[2,4,8,8], index: 4, kind: output, shape index: {0}]
  %s5 = inlined_call_operand.hbm [shape: f32[2,4,1,8], index: 5, kind: output, shape index: {1}]
  %s6 = inlined_call_operand.hbm [shape: f32[2,4,1,8], index: 6, kind: output, shape index: {2}]
  %7 = xla_tuple %s4, %s5, %s6
  %s8 = sld [smem:[#allocation0]]
  $region85: #{_patch_embed_forward.3} parent=0
    _
  %s10 = ssub.s32 1, %s8
  %s11 = scalar_select 0, %s10, %s8
  $region1: #{_patch_embed_forward.3} parent=0
    #allocation2 [shape = 'u8[65536]{0}', space=vmem, size = 0x10000, scoped, tag = 'input window, operand 0']
    #allocation3 [shape = 's32[2]{0}', space=sflag, size = 0x8, scoped, tag = 'scoped memory for _patch_embed_forward.3']
    #allocation4 [shape = 's32[2]{0}', space=sflag, size = 0x8, scoped, tag = 'scoped memory for _patch_embed_forward.3']
    #allocation5 [shape = 's32[2]{0}', space=sflag, size = 0x8, scoped, tag = 'scoped memory for _patch_embed_forward.3']
    #allocation6 [shape = 'u8[512]{0}', space=smem, size = 0x200, scoped, tag = 'input window, operand 1, single buffered']
    #allocation7 [shape = 'u8[4096]{0}', space=vmem, size = 0x1000, scoped, tag = 'input window, operand 2, single buffered']
    #allocation8 [shape = 's32[1]{0}', space=sflag, size = 0x4, scoped, tag = 'scoped memory for _patch_embed_forward.3']
    #allocation9 [shape = 'u8[8192]{0}', space=vmem, size = 0x2000, scoped, tag = 'input window, operand 3, single buffered']
    #allocation10 [shape = 'u8[16384]{0}', space=vmem, size = 0x4000, scoped, tag = 'output window, operand 0']
    #allocation11 [shape = 'u8[4096]{0}', space=vmem, size = 0x1000, scoped, tag = 'output window, operand 1']
    #allocation12 [shape = 's32[2]{0}', space=sflag, size = 0x8, scoped, tag = 'scoped memory for _patch_embed_forward.3']
    #allocation13 [shape = 'u8[4096]{0}', space=vmem, size = 0x1000, scoped, tag = 'output window, operand 2']
    %12 = vsyncpa [#allocation3], 0
    %s13 = scalar_lea.sflag [#allocation3], 1
    %14 = vsyncpa %s13, 0
    %15 = vsyncpa [#allocation5], 0
    %16 = vsyncpa [#allocation8], 0
    %17 = vsyncpa [#allocation4], 0
    %s18 = scalar_lea.sflag [#allocation4], 1
    %19 = vsyncpa %s18, 0
    %20 = vsyncpa [#allocation12], 0
    %s21 = scalar_lea.sflag [#allocation12], 1
    %22 = vsyncpa %s21, 0
    loop: start=0, step=1, limit=4
    $region2: #{_patch_embed_forward.3} parent=1 // loop_pre_header
      _
    $region3: #{_patch_embed_forward.3} parent=1 // loop_header
      %s24 = sphi 0, %s28
      %p25 = scmp.ge.s32.totalorder %s24, 4
      %s31 = sphi 0, %s43
      %s32 = sphi 0, %s39
      %s33 = sphi 0, %s31
      %s34 = sphi 0, %s32
      %s35 = sphi 0, %s33
      %s36 = sphi 0, %s34
      %s48 = sphi 0, %s50
      %s51 = sphi 0, %s48
      %s52 = sphi 0, %s51
      %s68 = sphi 0, %s52
      %s72 = sphi 0, %s72
      %s74 = sphi 0, %s72
      %s75 = sphi 0, %s74
      %s89 = sphi 0, %s75
      %s93 = sphi 0, %s93
      %s95 = sphi 0, %s93
      %s96 = sphi 0, %s95
      %s110 = sphi 0, %s96
      %s114 = sphi 0, %s114
      %s116 = sphi 0, %s114
      %s117 = sphi 0, %s116
      %s131 = sphi 0, %s117
      %s139 = sphi 0, %s141
      %s142 = sphi 0, %s139
      %s143 = sphi 0, %s142
      %s159 = sphi 0, %s143
      %s165 = sphi 0, %s167
      %s168 = sphi 0, %s165
      %s169 = sphi 0, %s168
      %s185 = sphi 0, %s169
      %s191 = sphi 0, %s193
      %s194 = sphi 0, %s191
      %s195 = sphi 0, %s194
      %s211 = sphi 0, %s195
    $region4: #{_patch_embed_forward.3} parent=1 // loop_header_branch
      %27 = sbr.rel (%p25) target = $region8
    $region5: #{_patch_embed_forward.3} parent=1 // loop_body
      %s29 = ssub.s32 %s24, 1
      %s30 = ssub.s32 %s24, 2
      %s37 = sadd.s32 1, %s32
      %p38 = scmp.ge.s32.totalorder %s37, 1
      %s39 = scalar_select %p38, 0, %s37
      %s40 = sadd.s32 1, %s31
      %s41 = scalar_select %p38, %s40, %s31
      %p42 = scmp.ge.s32.totalorder %s41, 2
      %s43 = scalar_select %p42, 0, %s41
      %s44 = ssub.s32 %s31, %s43
      %s45 = ssub.s32 %s32, %s39
      %s46 = sor.u32 %s44, %s45
      %p47 = scmp.eq.s32.totalorder %s46, 0
      %s49 = sadd.s32 %s48, 1
      %s50 = scalar_select %p47, %s48, %s49
      %p53 = pneg %p47
      %p54 = scmp.eq.s32.totalorder %s24, 1
      %p55 = por %p53, %p54
      %p56 = scmp.ne.s32.totalorder %s48, %s51
      %p57 = scmp.eq.s32.totalorder %s24, 0
      %p58 = por %p56, %p57
      %p59 = scmp.ne.s32.totalorder %s48, %s51
      %p60 = scmp.eq.s32.totalorder %s29, 1
      %p61 = por %p59, %p60
      %p62 = scmp.ne.s32.totalorder %s51, %s52
      %p63 = scmp.eq.s32.totalorder %s29, 0
      %p64 = por %p62, %p63
      %p65 = scmp.ne.s32.totalorder %s51, %s52
      %p66 = scmp.eq.s32.totalorder %s30, 1
      %p67 = por %p65, %p66
      %p69 = scmp.ne.s32.totalorder %s52, %s68
      %p70 = scmp.eq.s32.totalorder %s30, 0
      %p71 = por %p69, %p70
      %s73 = sadd.s32 %s72, 1
      %p76 = scmp.eq.s32.totalorder %s24, 1
      %p77 = scmp.ne.s32.totalorder %s72, %s74
      %p78 = scmp.eq.s32.totalorder %s24, 0
      %p79 = por %p77, %p78
      %p80 = scmp.ne.s32.totalorder %s72, %s74
      %p81 = scmp.eq.s32.totalorder %s29, 1
      %p82 = por %p80, %p81
      %p83 = scmp.ne.s32.totalorder %s74, %s75
      %p84 = scmp.eq.s32.totalorder %s29, 0
      %p85 = por %p83, %p84
      %p86 = scmp.ne.s32.totalorder %s74, %s75
      %p87 = scmp.eq.s32.totalorder %s30, 1
      %p88 = por %p86, %p87
      %p90 = scmp.ne.s32.totalorder %s75, %s89
      %p91 = scmp.eq.s32.totalorder %s30, 0
      %p92 = por %p90, %p91
      %s94 = sadd.s32 %s93, 1
      %p97 = scmp.eq.s32.totalorder %s24, 1
      %p98 = scmp.ne.s32.totalorder %s93, %s95
      %p99 = scmp.eq.s32.totalorder %s24, 0
      %p100 = por %p98, %p99
      %p101 = scmp.ne.s32.totalorder %s93, %s95
      %p102 = scmp.eq.s32.totalorder %s29, 1
      %p103 = por %p101, %p102
      %p104 = scmp.ne.s32.totalorder %s95, %s96
      %p105 = scmp.eq.s32.totalorder %s29, 0
      %p106 = por %p104, %p105
      %p107 = scmp.ne.s32.totalorder %s95, %s96
      %p108 = scmp.eq.s32.totalorder %s30, 1
      %p109 = por %p107, %p108
      %p111 = scmp.ne.s32.totalorder %s96, %s110
      %p112 = scmp.eq.s32.totalorder %s30, 0
      %p113 = por %p111, %p112
      %s115 = sadd.s32 %s114, 1
      %p118 = scmp.eq.s32.totalorder %s24, 1
      %p119 = scmp.ne.s32.totalorder %s114, %s116
      %p120 = scmp.eq.s32.totalorder %s24, 0
      %p121 = por %p119, %p120
      %p122 = scmp.ne.s32.totalorder %s114, %s116
      %p123 = scmp.eq.s32.totalorder %s29, 1
      %p124 = por %p122, %p123
      %p125 = scmp.ne.s32.totalorder %s116, %s117
      %p126 = scmp.eq.s32.totalorder %s29, 0
      %p127 = por %p125, %p126
      %p128 = scmp.ne.s32.totalorder %s116, %s117
      %p129 = scmp.eq.s32.totalorder %s30, 1
      %p130 = por %p128, %p129
      %p132 = scmp.ne.s32.totalorder %s117, %s131
      %p133 = scmp.eq.s32.totalorder %s30, 0
      %p134 = por %p132, %p133
      %s135 = ssub.s32 %s31, %s43
      %s136 = ssub.s32 %s32, %s39
      %s137 = sor.u32 %s135, %s136
      %p138 = scmp.eq.s32.totalorder %s137, 0
      %s140 = sadd.s32 %s139, 1
      %s141 = scalar_select %p138, %s139, %s140
      %p144 = pneg %p138
      %p145 = scmp.eq.s32.totalorder %s24, 1
      %p146 = por %p144, %p145
      %p147 = scmp.ne.s32.totalorder %s139, %s142
      %p148 = scmp.eq.s32.totalorder %s24, 0
      %p149 = por %p147, %p148
      %p150 = scmp.ne.s32.totalorder %s139, %s142
      %p151 = scmp.eq.s32.totalorder %s29, 1
      %p152 = por %p150, %p151
      %p153 = scmp.ne.s32.totalorder %s142, %s143
      %p154 = scmp.eq.s32.totalorder %s29, 0
      %p155 = por %p153, %p154
      %p156 = scmp.ne.s32.totalorder %s142, %s143
      %p157 = scmp.eq.s32.totalorder %s30, 1
      %p158 = por %p156, %p157
      %p160 = scmp.ne.s32.totalorder %s143, %s159
      %p161 = scmp.eq.s32.totalorder %s30, 0
      %p162 = por %p160, %p161
      %s163 = ssub.s32 %s31, %s43
      %p164 = scmp.eq.s32.totalorder %s163, 0
      %s166 = sadd.s32 %s165, 1
      %s167 = scalar_select %p164, %s165, %s166
      %p170 = pneg %p164
      %p171 = scmp.eq.s32.totalorder %s24, 1
      %p172 = por %p170, %p171
      %p173 = scmp.ne.s32.totalorder %s165, %s168
      %p174 = scmp.eq.s32.totalorder %s24, 0
      %p175 = por %p173, %p174
      %p176 = scmp.ne.s32.totalorder %s165, %s168
      %p177 = scmp.eq.s32.totalorder %s29, 1
      %p178 = por %p176, %p177
      %p179 = scmp.ne.s32.totalorder %s168, %s169
      %p180 = scmp.eq.s32.totalorder %s29, 0
      %p181 = por %p179, %p180
      %p182 = scmp.ne.s32.totalorder %s168, %s169
      %p183 = scmp.eq.s32.totalorder %s30, 1
      %p184 = por %p182, %p183
      %p186 = scmp.ne.s32.totalorder %s169, %s185
      %p187 = scmp.eq.s32.totalorder %s30, 0
      %p188 = por %p186, %p187
      %s189 = ssub.s32 %s31, %s43
      %p190 = scmp.eq.s32.totalorder %s189, 0
      %s192 = sadd.s32 %s191, 1
      %s193 = scalar_select %p190, %s191, %s192
      %p196 = pneg %p190
      %p197 = scmp.eq.s32.totalorder %s24, 1
      %p198 = por %p196, %p197
      %p199 = scmp.ne.s32.totalorder %s191, %s194
      %p200 = scmp.eq.s32.totalorder %s24, 0
      %p201 = por %p199, %p200
      %p202 = scmp.ne.s32.totalorder %s191, %s194
      %p203 = scmp.eq.s32.totalorder %s29, 1
      %p204 = por %p202, %p203
      %p205 = scmp.ne.s32.totalorder %s194, %s195
      %p206 = scmp.eq.s32.totalorder %s29, 0
      %p207 = por %p205, %p206
      %p208 = scmp.ne.s32.totalorder %s194, %s195
      %p209 = scmp.eq.s32.totalorder %s30, 1
      %p210 = por %p208, %p209
      %p212 = scmp.ne.s32.totalorder %s195, %s211
      %p213 = scmp.eq.s32.totalorder %s30, 0
      %p214 = por %p212, %p213
      %p215 = scmp.le.s32.totalorder 1, %s24
      %p216 = scmp.lt.s32.totalorder %s24, 3
      %p217 = pnand %p215, %p216
      %p218 = pneg %p217
      // Predicated region
      $region9: #{_patch_embed_forward.3} parent=5 // pred_check
        _
      $region10: #{_patch_embed_forward.3} parent=5 // pred_check_branch
        %220 = sbr.rel (%p217) target = $region12
      $region11: #{_patch_embed_forward.3} parent=5 // pred_region
        %s221 = ssub.s32 %s24, 1
        // Predicated region
        $region13: #{_patch_embed_forward.3} parent=11 // pred_check
          %p222 = pneg %p85
        $region14: #{_patch_embed_forward.3} parent=11 // pred_check_branch
          %224 = sbr.rel (%p222) target = $region16
        $region15: #{_patch_embed_forward.3} parent=11 // pred_region
          %s226 = ssub.s32 16, 16
          %227 = vsyncadd [#allocation5], %s226
          %230 = dma.hbm_to_smem %s1, 16, [#allocation6], [#allocation5]
        $region16: #{_patch_embed_forward.3} parent=11 // pred_fallthru
          _
        // Predicated region
        $region17: #{_patch_embed_forward.3} parent=11 // pred_check
          %p231 = pneg %p106
        $region18: #{_patch_embed_forward.3} parent=11 // pred_check_branch
          %233 = sbr.rel (%p231) target = $region20
        $region19: #{_patch_embed_forward.3} parent=11 // pred_region
          %s235 = ssub.s32 128, 128
          %236 = vsyncadd [#allocation8], %s235
          %s237 = sshll.u32 [#allocation7], 4
          %s238 = int_to_ptr.vmem [resolvable:$true] %s237
          %243 = dma.hbm_to_vmem [thread:$0]  %s2, 128, %s238, [#allocation8], 64, 64, 4
        $region20: #{_patch_embed_forward.3} parent=11 // pred_fallthru
          _
        // Predicated region
        $region21: #{_patch_embed_forward.3} parent=11 // pred_check
          %p244 = pneg %p127
        $region22: #{_patch_embed_forward.3} parent=11 // pred_check_branch
          %246 = sbr.rel (%p244) target = $region24
        $region23: #{_patch_embed_forward.3} parent=11 // pred_region
          %s248 = ssub.s32 256, 256
          %249 = vsyncadd [#allocation8], %s248
          %s250 = sshll.u32 [#allocation9], 4
          %s251 = int_to_ptr.vmem [resolvable:$true] %s250
          %256 = dma.hbm_to_vmem [thread:$0]  %s3, 256, %s251, [#allocation8], 64, 64, 4
        $region24: #{_patch_embed_forward.3} parent=11 // pred_fallthru
          _
      $region12: #{_patch_embed_forward.3} parent=5 // pred_fallthru
        _
      %p257 = scmp.lt.s32.totalorder %s24, 2
      // Predicated region
      $region25: #{_patch_embed_forward.3} parent=5 // pred_check
        %p258 = pneg %p257
      $region26: #{_patch_embed_forward.3} parent=5 // pred_check_branch
        %260 = sbr.rel (%p258) target = $region28
      $region27: #{_patch_embed_forward.3} parent=5 // pred_region
        // Predicated region
        $region29: #{_patch_embed_forward.3} parent=27 // pred_check
          %p261 = pneg %p58
        $region30: #{_patch_embed_forward.3} parent=27 // pred_check_branch
          %263 = sbr.rel (%p261) target = $region32
        $region31: #{_patch_embed_forward.3} parent=27 // pred_region
          %s264 = sand.u32 %s48, 1
          %s265 = scalar_lea.sflag [#allocation3], %s264
          %s266 = sand.u32 %s48, 1
          %s267 = smul.addr %s266, 64
          %s268 = scalar_lea.vmem [#allocation2], %s267
          %s269 = smul.u32 2, %s32
          %s271 = ssub.s32 1024, 1024
          %272 = vsyncadd %s265, %s271
          %s273 = smul.addr %s31, 8
          %s274 = sadd.s32 %s269, %s273
          %s275 = smul.addr %s274, 128
          %s276 = scalar_lea.hbm %s0, %s275
          %s277 = sshll.u32 %s268, 4
          %s278 = int_to_ptr.vmem [resolvable:$true] %s277
          %283 = dma.hbm_to_vmem [thread:$0]  %s276, 1024, %s278, %s265, 128, 128, 8
        $region32: #{_patch_embed_forward.3} parent=27 // pred_fallthru
          _
      $region28: #{_patch_embed_forward.3} parent=5 // pred_fallthru
        _
      %p284 = scmp.le.s32.totalorder 1, %s24
      %p285 = scmp.lt.s32.totalorder %s24, 3
      %p286 = pnand %p284, %p285
      %p287 = pneg %p286
      // Predicated region
      $region33: #{_patch_embed_forward.3} parent=5 // pred_check
        _
      $region34: #{_patch_embed_forward.3} parent=5 // pred_check_branch
        %289 = sbr.rel (%p286) target = $region36
      $region35: #{_patch_embed_forward.3} parent=5 // pred_region
        %s290 = ssub.s32 %s24, 1
        %s291 = sand.u32 %s51, 1
        %s292 = scalar_lea.sflag [#allocation3], %s291
        %s293 = sand.u32 %s51, 1
        %s294 = smul.addr %s293, 64
        %s295 = scalar_lea.vmem [#allocation2], %s294
        // Predicated region
        $region37: #{_patch_embed_forward.3} parent=35 // pred_check
          %p296 = pneg %p64
        $region38: #{_patch_embed_forward.3} parent=35 // pred_check_branch
          %298 = sbr.rel (%p296) target = $region40
        $region39: #{_patch_embed_forward.3} parent=35 // pred_region
          %299 = dma.done %s292, 1024
        $region40: #{_patch_embed_forward.3} parent=35 // pred_fallthru
          _
        // Predicated region
        $region41: #{_patch_embed_forward.3} parent=35 // pred_check
          %p300 = pneg %p85
        $region42: #{_patch_embed_forward.3} parent=35 // pred_check_branch
          %302 = sbr.rel (%p300) target = $region44
        $region43: #{_patch_embed_forward.3} parent=35 // pred_region
          %303 = dma.done [#allocation5], 16
        $region44: #{_patch_embed_forward.3} parent=35 // pred_fallthru
          _
        // Predicated region
        $region45: #{_patch_embed_forward.3} parent=35 // pred_check
          %p304 = pneg %p106
        $region46: #{_patch_embed_forward.3} parent=35 // pred_check_branch
          %306 = sbr.rel (%p304) target = $region48
        $region47: #{_patch_embed_forward.3} parent=35 // pred_region
          %307 = dma.done [#allocation8], 128
        $region48: #{_patch_embed_forward.3} parent=35 // pred_fallthru
          _
        // Predicated region
        $region49: #{_patch_embed_forward.3} parent=35 // pred_check
          %p308 = pneg %p127
        $region50: #{_patch_embed_forward.3} parent=35 // pred_check_branch
          %310 = sbr.rel (%p308) target = $region52
        $region51: #{_patch_embed_forward.3} parent=35 // pred_region
          %311 = dma.done [#allocation8], 256
        $region52: #{_patch_embed_forward.3} parent=35 // pred_fallthru
          _
        %312 = sfence
        %s313 = sand.u32 %s51, 1
        %s314 = scalar_lea.sflag [#allocation3], %s313
        %s315 = sand.u32 %s51, 1
        %s316 = smul.addr %s315, 64
        %s317 = scalar_lea.vmem [#allocation2], %s316
        %p318 = pneg %p64
        %p319 = pneg %p61
        %p320 = pneg %p85
        %p321 = pneg %p82
        %p322 = pneg %p106
        %p323 = pneg %p103
        %p324 = pneg %p127
        %p325 = pneg %p124
        %p326 = pneg %p155
        %p327 = pneg %p152
        %s328 = sand.u32 %s142, 1
        %s329 = scalar_lea.sflag [#allocation4], %s328
        %s330 = sand.u32 %s142, 1
        %s331 = smul.addr %s330, 16
        %s332 = scalar_lea.vmem [#allocation10], %s331
        %p333 = pneg %p181
        %p334 = pneg %p178
        %s335 = sand.u32 %s29, 1
        %s336 = scalar_lea.sflag [#allocation12], %s335
        %s337 = sand.u32 %s168, 1
        %s338 = smul.addr %s337, 4
        %s339 = scalar_lea.vmem [#allocation11], %s338
        %p340 = pneg %p207
        %p341 = pneg %p204
        %s342 = sand.u32 %s29, 1
        %s343 = scalar_lea.sflag [#allocation12], %s342
        %s344 = sand.u32 %s194, 1
        %s345 = smul.addr %s344, 4
        %s346 = scalar_lea.vmem [#allocation13], %s345
        %s347 = smul.u32 2, %s34
        %p349 = scmp.eq.s32.totalorder %s34, 0
        // Predicated region
        $region53: #{_patch_embed_forward.3} parent=35 // pred_check
          %p350 = pneg %p349
        $region54: #{_patch_embed_forward.3} parent=35 // pred_check_branch
          %352 = sbr.rel (%p350) target = $region56
        $region55: #{_patch_embed_forward.3} parent=35 // pred_region
          %vm353 = vcmask 57344
          %354 = vst.msk [vmem:[%s339] sm:$0x1] %vm353, 0.0
          %355 = vst.msk [vmem:[%s339 + $0x1] sm:$0x1] %vm353, 0.0
          %356 = vst.msk [vmem:[%s339 + $0x2] sm:$0x1] %vm353, 0.0
          %357 = vst.msk [vmem:[%s339 + $0x3] sm:$0x1] %vm353, 0.0
          %358 = vst.msk [vmem:[%s346] sm:$0x1] %vm353, 0.0
          %359 = vst.msk [vmem:[%s346 + $0x1] sm:$0x1] %vm353, 0.0
          %360 = vst.msk [vmem:[%s346 + $0x2] sm:$0x1] %vm353, 0.0
          %361 = vst.msk [vmem:[%s346 + $0x3] sm:$0x1] %vm353, 0.0
        $region56: #{_patch_embed_forward.3} parent=35 // pred_fallthru
          _
        %v362 = vld [vmem:[%s295] sm:$0xff]
        %v363 = vld [vmem:[%s295 + $0x8] sm:$0xff]
        %v364 = vpack.c.bf16 %v363, %v362
        %v365 = vld [vmem:[#allocation7] sm:$0xf]
        %vm366 = vcmask 130048
        %v368 = vsel %vm366, %v365, 0
        %370 = vmatprep.subr.bf16.mxu0 0
        %371 = vmatpush1.bf16.msra.mxu0 %v364
        %372 = vmatprep.subr.bf16.mxu0 0
        %373 = vmatpush1.bf16.msra.mxu0 0
        %374 = vmatprep.subr.bf16.mxu0 0
        %375 = vmatpush1.bf16.msra.mxu0 0
        %376 = vmatprep.subr.bf16.mxu0 0
        %377 = vmatpush1.bf16.msra.mxu0 0
        %378 = vmatprep.subr.bf16.mxu0 0
        %379 = vmatpush1.bf16.msra.mxu0 0
        %380 = vmatprep.subr.bf16.mxu0 0
        %381 = vmatpush1.bf16.msra.mxu0 0
        %382 = vmatprep.subr.bf16.mxu0 0
        %383 = vmatpush1.bf16.msra.mxu0 0
        %384 = vmatprep.subr.bf16.mxu0 0
        %385 = vmatpush1.bf16.msra.mxu0 0
        %386 = vmatprep.subr.bf16.mxu0 0
        %387 = vmatpush1.bf16.msra.mxu0 0
        %388 = vmatprep.subr.bf16.mxu0 0
        %389 = vmatpush1.bf16.msra.mxu0 0
        %390 = vmatprep.subr.bf16.mxu0 0
        %391 = vmatpush1.bf16.msra.mxu0 0
        %392 = vmatprep.subr.bf16.mxu0 0
        %393 = vmatpush1.bf16.msra.mxu0 0
        %394 = vmatprep.subr.bf16.mxu0 0
        %395 = vmatpush1.bf16.msra.mxu0 0
        %396 = vmatprep.subr.bf16.mxu0 0
        %397 = vmatpush1.bf16.msra.mxu0 0
        %398 = vmatprep.subr.bf16.mxu0 0
        %399 = vmatpush1.bf16.msra.mxu0 0
        %400 = vmatprep.subr.bf16.mxu0 0
        %401 = vmatpush1.bf16.msra.mxu0 0
        %402 = vmatprep.mubr.bf16.mxu0 0
        %403 = vmatmul.mubr.bf16.gmra.mrb[0].mxu0 %v368
        %v404 = vpop.f32.mrb[0].mxu0
        %v405 = vadd.f32 0.0, %v404
        %v406 = vpop.f32.mrb[0].mxu0
        %v407 = vpop.f32.mrb[0].mxu0
        %v408 = vpop.f32.mrb[0].mxu0
        %409 = vdwg.mxu0
        %v410 = vpack.c.bf16 %v405, %v405
        %v411 = vld [vmem:[#allocation9] sm:$0xf]
        %v412 = vld [vmem:[#allocation9 + $0x4] sm:$0xf]
        %v415 = vunpack.c.l.b16 %v411
        %v416 = vunpack.c.l.b16 %v412
        %v417 = vpack.c.b16 %v416, %v415
        %v420 = vsel %vm366, %v410, 0
        %422 = vmatprep.subr.bf16.mxu0 0
        %423 = vmatpush1.bf16.msra.mxu0 %v417
        %424 = vmatprep.subr.bf16.mxu0 0
        %425 = vmatpush1.bf16.msra.mxu0 0
        %426 = vmatprep.subr.bf16.mxu0 0
        %427 = vmatpush1.bf16.msra.mxu0 0
        %428 = vmatprep.subr.bf16.mxu0 0
        %429 = vmatpush1.bf16.msra.mxu0 0
        %430 = vmatprep.subr.bf16.mxu0 0
        %431 = vmatpush1.bf16.msra.mxu0 0
        %432 = vmatprep.subr.bf16.mxu0 0
        %433 = vmatpush1.bf16.msra.mxu0 0
        %434 = vmatprep.subr.bf16.mxu0 0
        %435 = vmatpush1.bf16.msra.mxu0 0
        %436 = vmatprep.subr.bf16.mxu0 0
        %437 = vmatpush1.bf16.msra.mxu0 0
        %438 = vmatprep.subr.bf16.mxu0 0
        %439 = vmatpush1.bf16.msra.mxu0 0
        %440 = vmatprep.subr.bf16.mxu0 0
        %441 = vmatpush1.bf16.msra.mxu0 0
        %442 = vmatprep.subr.bf16.mxu0 0
        %443 = vmatpush1.bf16.msra.mxu0 0
        %444 = vmatprep.subr.bf16.mxu0 0
        %445 = vmatpush1.bf16.msra.mxu0 0
        %446 = vmatprep.subr.bf16.mxu0 0
        %447 = vmatpush1.bf16.msra.mxu0 0
        %448 = vmatprep.subr.bf16.mxu0 0
        %449 = vmatpush1.bf16.msra.mxu0 0
        %450 = vmatprep.subr.bf16.mxu0 0
        %451 = vmatpush1.bf16.msra.mxu0 0
        %452 = vmatprep.subr.bf16.mxu0 0
        %453 = vmatpush1.bf16.msra.mxu0 0
        %454 = vmatprep.mubr.bf16.mxu0 0
        %455 = vmatmul.mubr.bf16.gmra.mrb[0].mxu0 %v420
        %v456 = vpop.f32.mrb[0].mxu0
        %v457 = vadd.f32 0.0, %v456
        %v458 = vpop.f32.mrb[0].mxu0
        %v459 = vpop.f32.mrb[0].mxu0
        %v460 = vpop.f32.mrb[0].mxu0
        %461 = vdwg.mxu0
        %s462 = sld [smem:[#allocation6]]
        %v463 = vstv %s462
        %v464 = vmul.f32 %v463, %v457
        %v465 = vadd.f32 %v464, 0.0
        %s466 = sld [smem:[#allocation6 + $0x10]]
        %v467 = vstv %s466
        %v468 = vmul.f32 %v467, %v457
        %v469 = vadd.f32 %v468, 0.0
        %s470 = sld [smem:[#allocation6 + $0x20]]
        %v471 = vstv %s470
        %v472 = vmul.f32 %v471, %v457
        %v473 = vadd.f32 %v472, 0.0
        %s474 = sld [smem:[#allocation6 + $0x30]]
        %v475 = vstv %s474
        %v476 = vmul.f32 %v475, %v457
        %v477 = vadd.f32 %v476, 0.0
        %s478 = scalar_lea.vmem [#allocation9], 8
        %v479 = vld [vmem:[%s478] sm:$0xf]
        %v480 = vld [vmem:[%s478 + $0x4] sm:$0xf]
        %v483 = vunpack.c.l.b16 %v479
        %v484 = vunpack.c.l.b16 %v480
        %v485 = vpack.c.b16 %v484, %v483
        %487 = vmatprep.subr.bf16.mxu0 0
        %488 = vmatpush1.bf16.msra.mxu0 %v485
        %489 = vmatprep.subr.bf16.mxu0 0
        %490 = vmatpush1.bf16.msra.mxu0 0
        %491 = vmatprep.subr.bf16.mxu0 0
        %492 = vmatpush1.bf16.msra.mxu0 0
        %493 = vmatprep.subr.bf16.mxu0 0
        %494 = vmatpush1.bf16.msra.mxu0 0
        %495 = vmatprep.subr.bf16.mxu0 0
        %496 = vmatpush1.bf16.msra.mxu0 0
        %497 = vmatprep.subr.bf16.mxu0 0
        %498 = vmatpush1.bf16.msra.mxu0 0
        %499 = vmatprep.subr.bf16.mxu0 0
        %500 = vmatpush1.bf16.msra.mxu0 0
        %501 = vmatprep.subr.bf16.mxu0 0
        %502 = vmatpush1.bf16.msra.mxu0 0
        %503 = vmatprep.subr.bf16.mxu0 0
        %504 = vmatpush1.bf16.msra.mxu0 0
        %505 = vmatprep.subr.bf16.mxu0 0
        %506 = vmatpush1.bf16.msra.mxu0 0
        %507 = vmatprep.subr.bf16.mxu0 0
        %508 = vmatpush1.bf16.msra.mxu0 0
        %509 = vmatprep.subr.bf16.mxu0 0
        %510 = vmatpush1.bf16.msra.mxu0 0
        %511 = vmatprep.subr.bf16.mxu0 0
        %512 = vmatpush1.bf16.msra.mxu0 0
        %513 = vmatprep.subr.bf16.mxu0 0
        %514 = vmatpush1.bf16.msra.mxu0 0
        %515 = vmatprep.subr.bf16.mxu0 0
        %516 = vmatpush1.bf16.msra.mxu0 0
        %517 = vmatprep.subr.bf16.mxu0 0
        %518 = vmatpush1.bf16.msra.mxu0 0
        %519 = vmatprep.mubr.bf16.mxu0 0
        %520 = vmatmul.mubr.bf16.gmra.mrb[0].mxu0 %v420
        %v521 = vpop.f32.mrb[0].mxu0
        %v522 = vadd.f32 0.0, %v521
        %v523 = vpop.f32.mrb[0].mxu0
        %v524 = vpop.f32.mrb[0].mxu0
        %v525 = vpop.f32.mrb[0].mxu0
        %526 = vdwg.mxu0
        %s527 = sld [smem:[#allocation6 + $0x1]]
        %v528 = vstv %s527
        %v529 = vmul.f32 %v528, %v522
        %v530 = vadd.f32 %v465, %v529
        %s531 = sld [smem:[#allocation6 + $0x11]]
        %v532 = vstv %s531
        %v533 = vmul.f32 %v532, %v522
        %v534 = vadd.f32 %v469, %v533
        %s535 = sld [smem:[#allocation6 + $0x21]]
        %v536 = vstv %s535
        %v537 = vmul.f32 %v536, %v522
        %v538 = vadd.f32 %v473, %v537
        %s539 = sld [smem:[#allocation6 + $0x31]]
        %v540 = vstv %s539
        %v541 = vmul.f32 %v540, %v522
        %v542 = vadd.f32 %v477, %v541
        %s543 = scalar_lea.vmem [#allocation7], 4
        %v544 = vld [vmem:[%s543] sm:$0xf]
        %v546 = vsel %vm366, %v544, 0
        %548 = vmatprep.subr.bf16.mxu0 0
        %549 = vmatpush1.bf16.msra.mxu0 %v364
        %550 = vmatprep.subr.bf16.mxu0 0
        %551 = vmatpush1.bf16.msra.mxu0 0
        %552 = vmatprep.subr.bf16.mxu0 0
        %553 = vmatpush1.bf16.msra.mxu0 0
        %554 = vmatprep.subr.bf16.mxu0 0
        %555 = vmatpush1.bf16.msra.mxu0 0
        %556 = vmatprep.subr.bf16.mxu0 0
        %557 = vmatpush1.bf16.msra.mxu0 0
        %558 = vmatprep.subr.bf16.mxu0 0
        %559 = vmatpush1.bf16.msra.mxu0 0
        %560 = vmatprep.subr.bf16.mxu0 0
        %561 = vmatpush1.bf16.msra.mxu0 0
        %562 = vmatprep.subr.bf16.mxu0 0
        %563 = vmatpush1.bf16.msra.mxu0 0
        %564 = vmatprep.subr.bf16.mxu0 0
        %565 = vmatpush1.bf16.msra.mxu0 0
        %566 = vmatprep.subr.bf16.mxu0 0
        %567 = vmatpush1.bf16.msra.mxu0 0
        %568 = vmatprep.subr.bf16.mxu0 0
        %569 = vmatpush1.bf16.msra.mxu0 0
        %570 = vmatprep.subr.bf16.mxu0 0
        %571 = vmatpush1.bf16.msra.mxu0 0
        %572 = vmatprep.subr.bf16.mxu0 0
        %573 = vmatpush1.bf16.msra.mxu0 0
        %574 = vmatprep.subr.bf16.mxu0 0
        %575 = vmatpush1.bf16.msra.mxu0 0
        %576 = vmatprep.subr.bf16.mxu0 0
        %577 = vmatpush1.bf16.msra.mxu0 0
        %578 = vmatprep.subr.bf16.mxu0 0
        %579 = vmatpush1.bf16.msra.mxu0 0
        %580 = vmatprep.mubr.bf16.mxu0 0
        %581 = vmatmul.mubr.bf16.gmra.mrb[0].mxu0 %v546
        %v582 = vpop.f32.mrb[0].mxu0
        %v583 = vadd.f32 0.0, %v582
        %v584 = vpop.f32.mrb[0].mxu0
        %v585 = vpop.f32.mrb[0].mxu0
        %v586 = vpop.f32.mrb[0].mxu0
        %587 = vdwg.mxu0
        %v588 = vpack.c.bf16 %v583, %v583
        %v590 = vsel %vm366, %v588, 0
        %592 = vmatprep.subr.bf16.mxu0 0
        %593 = vmatpush1.bf16.msra.mxu0 %v417
        %594 = vmatprep.subr.bf16.mxu0 0
        %595 = vmatpush1.bf16.msra.mxu0 0
        %596 = vmatprep.subr.bf16.mxu0 0
        %597 = vmatpush1.bf16.msra.mxu0 0
        %598 = vmatprep.subr.bf16.mxu0 0
        %599 = vmatpush1.bf16.msra.mxu0 0
        %600 = vmatprep.subr.bf16.mxu0 0
        %601 = vmatpush1.bf16.msra.mxu0 0
        %602 = vmatprep.subr.bf16.mxu0 0
        %603 = vmatpush1.bf16.msra.mxu0 0
        %604 = vmatprep.subr.bf16.mxu0 0
        %605 = vmatpush1.bf16.msra.mxu0 0
        %606 = vmatprep.subr.bf16.mxu0 0
        %607 = vmatpush1.bf16.msra.mxu0 0
        %608 = vmatprep.subr.bf16.mxu0 0
        %609 = vmatpush1.bf16.msra.mxu0 0
        %610 = vmatprep.subr.bf16.mxu0 0
        %611 = vmatpush1.bf16.msra.mxu0 0
        %612 = vmatprep.subr.bf16.mxu0 0
        %613 = vmatpush1.bf16.msra.mxu0 0
        %614 = vmatprep.subr.bf16.mxu0 0
        %615 = vmatpush1.bf16.msra.mxu0 0
        %616 = vmatprep.subr.bf16.mxu0 0
        %617 = vmatpush1.bf16.msra.mxu0 0
        %618 = vmatprep.subr.bf16.mxu0 0
        %619 = vmatpush1.bf16.msra.mxu0 0
        %620 = vmatprep.subr.bf16.mxu0 0
        %621 = vmatpush1.bf16.msra.mxu0 0
        %622 = vmatprep.subr.bf16.mxu0 0
        %623 = vmatpush1.bf16.msra.mxu0 0
        %624 = vmatprep.mubr.bf16.mxu0 0
        %625 = vmatmul.mubr.bf16.gmra.mrb[0].mxu0 %v590
        %v626 = vpop.f32.mrb[0].mxu0
        %v627 = vadd.f32 0.0, %v626
        %v628 = vpop.f32.mrb[0].mxu0
        %v629 = vpop.f32.mrb[0].mxu0
        %v630 = vpop.f32.mrb[0].mxu0
        %631 = vdwg.mxu0
        %s632 = sld [smem:[#allocation6 + $0x2]]
        %v633 = vstv %s632
        %v634 = vmul.f32 %v633, %v627
        %v635 = vadd.f32 %v530, %v634
        %s636 = sld [smem:[#allocation6 + $0x12]]
        %v637 = vstv %s636
        %v638 = vmul.f32 %v637, %v627
        %v639 = vadd.f32 %v534, %v638
        %s640 = sld [smem:[#allocation6 + $0x22]]
        %v641 = vstv %s640
        %v642 = vmul.f32 %v641, %v627
        %v643 = vadd.f32 %v538, %v642
        %s644 = sld [smem:[#allocation6 + $0x32]]
        %v645 = vstv %s644
        %v646 = vmul.f32 %v645, %v627
        %v647 = vadd.f32 %v542, %v646
        %648 = vmatprep.subr.bf16.mxu0 0
        %649 = vmatpush1.bf16.msra.mxu0 %v485
        %650 = vmatprep.subr.bf16.mxu0 0
        %651 = vmatpush1.bf16.msra.mxu0 0
        %652 = vmatprep.subr.bf16.mxu0 0
        %653 = vmatpush1.bf16.msra.mxu0 0
        %654 = vmatprep.subr.bf16.mxu0 0
        %655 = vmatpush1.bf16.msra.mxu0 0
        %656 = vmatprep.subr.bf16.mxu0 0
        %657 = vmatpush1.bf16.msra.mxu0 0
        %658 = vmatprep.subr.bf16.mxu0 0
        %659 = vmatpush1.bf16.msra.mxu0 0
        %660 = vmatprep.subr.bf16.mxu0 0
        %661 = vmatpush1.bf16.msra.mxu0 0
        %662 = vmatprep.subr.bf16.mxu0 0
        %663 = vmatpush1.bf16.msra.mxu0 0
        %664 = vmatprep.subr.bf16.mxu0 0
        %665 = vmatpush1.bf16.msra.mxu0 0
        %666 = vmatprep.subr.bf16.mxu0 0
        %667 = vmatpush1.bf16.msra.mxu0 0
        %668 = vmatprep.subr.bf16.mxu0 0
        %669 = vmatpush1.bf16.msra.mxu0 0
        %670 = vmatprep.subr.bf16.mxu0 0
        %671 = vmatpush1.bf16.msra.mxu0 0
        %672 = vmatprep.subr.bf16.mxu0 0
        %673 = vmatpush1.bf16.msra.mxu0 0
        %674 = vmatprep.subr.bf16.mxu0 0
        %675 = vmatpush1.bf16.msra.mxu0 0
        %676 = vmatprep.subr.bf16.mxu0 0
        %677 = vmatpush1.bf16.msra.mxu0 0
        %678 = vmatprep.subr.bf16.mxu0 0
        %679 = vmatpush1.bf16.msra.mxu0 0
        %680 = vmatprep.mubr.bf16.mxu0 0
        %681 = vmatmul.mubr.bf16.gmra.mrb[0].mxu0 %v590
        %v682 = vpop.f32.mrb[0].mxu0
        %v683 = vadd.f32 0.0, %v682
        %v684 = vpop.f32.mrb[0].mxu0
        %v685 = vpop.f32.mrb[0].mxu0
        %v686 = vpop.f32.mrb[0].mxu0
        %687 = vdwg.mxu0
        %s688 = sld [smem:[#allocation6 + $0x3]]
        %v689 = vstv %s688
        %v690 = vmul.f32 %v689, %v683
        %v691 = vadd.f32 %v635, %v690
        %s692 = sld [smem:[#allocation6 + $0x13]]
        %v693 = vstv %s692
        %v694 = vmul.f32 %v693, %v683
        %v695 = vadd.f32 %v639, %v694
        %s696 = sld [smem:[#allocation6 + $0x23]]
        %v697 = vstv %s696
        %v698 = vmul.f32 %v697, %v683
        %v699 = vadd.f32 %v643, %v698
        %s700 = sld [smem:[#allocation6 + $0x33]]
        %v701 = vstv %s700
        %v702 = vmul.f32 %v701, %v683
        %v703 = vadd.f32 %v647, %v702
        %s704 = scalar_lea.vmem %s295, 16 [#allocation2]
        %v705 = vld [vmem:[%s704] sm:$0xff]
        %v706 = vld [vmem:[%s704 + $0x8] sm:$0xff]
        %v707 = vpack.c.bf16 %v706, %v705
        %708 = vmatprep.subr.bf16.mxu0 0
        %709 = vmatpush1.bf16.msra.mxu0 %v707
        %710 = vmatprep.subr.bf16.mxu0 0
        %711 = vmatpush1.bf16.msra.mxu0 0
        %712 = vmatprep.subr.bf16.mxu0 0
        %713 = vmatpush1.bf16.msra.mxu0 0
        %714 = vmatprep.subr.bf16.mxu0 0
        %715 = vmatpush1.bf16.msra.mxu0 0
        %716 = vmatprep.subr.bf16.mxu0 0
        %717 = vmatpush1.bf16.msra.mxu0 0
        %718 = vmatprep.subr.bf16.mxu0 0
        %719 = vmatpush1.bf16.msra.mxu0 0
        %720 = vmatprep.subr.bf16.mxu0 0
        %721 = vmatpush1.bf16.msra.mxu0 0
        %722 = vmatprep.subr.bf16.mxu0 0
        %723 = vmatpush1.bf16.msra.mxu0 0
        %724 = vmatprep.subr.bf16.mxu0 0
        %725 = vmatpush1.bf16.msra.mxu0 0
        %726 = vmatprep.subr.bf16.mxu0 0
        %727 = vmatpush1.bf16.msra.mxu0 0
        %728 = vmatprep.subr.bf16.mxu0 0
        %729 = vmatpush1.bf16.msra.mxu0 0
        %730 = vmatprep.subr.bf16.mxu0 0
        %731 = vmatpush1.bf16.msra.mxu0 0
        %732 = vmatprep.subr.bf16.mxu0 0
        %733 = vmatpush1.bf16.msra.mxu0 0
        %734 = vmatprep.subr.bf16.mxu0 0
        %735 = vmatpush1.bf16.msra.mxu0 0
        %736 = vmatprep.subr.bf16.mxu0 0
        %737 = vmatpush1.bf16.msra.mxu0 0
        %738 = vmatprep.subr.bf16.mxu0 0
        %739 = vmatpush1.bf16.msra.mxu0 0
        %740 = vmatprep.mubr.bf16.mxu0 0
        %741 = vmatmul.mubr.bf16.gmra.mrb[0].mxu0 %v368
        %v742 = vpop.f32.mrb[0].mxu0
        %v743 = vadd.f32 0.0, %v742
        %v744 = vpop.f32.mrb[0].mxu0
        %v745 = vpop.f32.mrb[0].mxu0
        %v746 = vpop.f32.mrb[0].mxu0
        %747 = vdwg.mxu0
        %v748 = vpack.c.bf16 %v743, %v743
        %v750 = vsel %vm366, %v748, 0
        %752 = vmatprep.subr.bf16.mxu0 0
        %753 = vmatpush1.bf16.msra.mxu0 %v417
        %754 = vmatprep.subr.bf16.mxu0 0
        %755 = vmatpush1.bf16.msra.mxu0 0
        %756 = vmatprep.subr.bf16.mxu0 0
        %757 = vmatpush1.bf16.msra.mxu0 0
        %758 = vmatprep.subr.bf16.mxu0 0
        %759 = vmatpush1.bf16.msra.mxu0 0
        %760 = vmatprep.subr.bf16.mxu0 0
        %761 = vmatpush1.bf16.msra.mxu0 0
        %762 = vmatprep.subr.bf16.mxu0 0
        %763 = vmatpush1.bf16.msra.mxu0 0
        %764 = vmatprep.subr.bf16.mxu0 0
        %765 = vmatpush1.bf16.msra.mxu0 0
        %766 = vmatprep.subr.bf16.mxu0 0
        %767 = vmatpush1.bf16.msra.mxu0 0
        %768 = vmatprep.subr.bf16.mxu0 0
        %769 = vmatpush1.bf16.msra.mxu0 0
        %770 = vmatprep.subr.bf16.mxu0 0
        %771 = vmatpush1.bf16.msra.mxu0 0
        %772 = vmatprep.subr.bf16.mxu0 0
        %773 = vmatpush1.bf16.msra.mxu0 0
        %774 = vmatprep.subr.bf16.mxu0 0
        %775 = vmatpush1.bf16.msra.mxu0 0
        %776 = vmatprep.subr.bf16.mxu0 0
        %777 = vmatpush1.bf16.msra.mxu0 0
        %778 = vmatprep.subr.bf16.mxu0 0
        %779 = vmatpush1.bf16.msra.mxu0 0
        %780 = vmatprep.subr.bf16.mxu0 0
        %781 = vmatpush1.bf16.msra.mxu0 0
        %782 = vmatprep.subr.bf16.mxu0 0
        %783 = vmatpush1.bf16.msra.mxu0 0
        %784 = vmatprep.mubr.bf16.mxu0 0
        %785 = vmatmul.mubr.bf16.gmra.mrb[0].mxu0 %v750
        %v786 = vpop.f32.mrb[0].mxu0
        %v787 = vadd.f32 0.0, %v786
        %v788 = vpop.f32.mrb[0].mxu0
        %v789 = vpop.f32.mrb[0].mxu0
        %v790 = vpop.f32.mrb[0].mxu0
        %791 = vdwg.mxu0
        %s792 = sld [smem:[#allocation6 + $0x4]]
        %v793 = vstv %s792
        %v794 = vmul.f32 %v793, %v787
        %v795 = vadd.f32 %v691, %v794
        %s796 = sld [smem:[#allocation6 + $0x14]]
        %v797 = vstv %s796
        %v798 = vmul.f32 %v797, %v787
        %v799 = vadd.f32 %v695, %v798
        %s800 = sld [smem:[#allocation6 + $0x24]]
        %v801 = vstv %s800
        %v802 = vmul.f32 %v801, %v787
        %v803 = vadd.f32 %v699, %v802
        %s804 = sld [smem:[#allocation6 + $0x34]]
        %v805 = vstv %s804
        %v806 = vmul.f32 %v805, %v787
        %v807 = vadd.f32 %v703, %v806
        %808 = vmatprep.subr.bf16.mxu0 0
        %809 = vmatpush1.bf16.msra.mxu0 %v485
        %810 = vmatprep.subr.bf16.mxu0 0
        %811 = vmatpush1.bf16.msra.mxu0 0
        %812 = vmatprep.subr.bf16.mxu0 0
        %813 = vmatpush1.bf16.msra.mxu0 0
        %814 = vmatprep.subr.bf16.mxu0 0
        %815 = vmatpush1.bf16.msra.mxu0 0
        %816 = vmatprep.subr.bf16.mxu0 0
        %817 = vmatpush1.bf16.msra.mxu0 0
        %818 = vmatprep.subr.bf16.mxu0 0
        %819 = vmatpush1.bf16.msra.mxu0 0
        %820 = vmatprep.subr.bf16.mxu0 0
        %821 = vmatpush1.bf16.msra.mxu0 0
        %822 = vmatprep.subr.bf16.mxu0 0
        %823 = vmatpush1.bf16.msra.mxu0 0
        %824 = vmatprep.subr.bf16.mxu0 0
        %825 = vmatpush1.bf16.msra.mxu0 0
        %826 = vmatprep.subr.bf16.mxu0 0
        %827 = vmatpush1.bf16.msra.mxu0 0
        %828 = vmatprep.subr.bf16.mxu0 0
        %829 = vmatpush1.bf16.msra.mxu0 0
        %830 = vmatprep.subr.bf16.mxu0 0
        %831 = vmatpush1.bf16.msra.mxu0 0
        %832 = vmatprep.subr.bf16.mxu0 0
        %833 = vmatpush1.bf16.msra.mxu0 0
        %834 = vmatprep.subr.bf16.mxu0 0
        %835 = vmatpush1.bf16.msra.mxu0 0
        %836 = vmatprep.subr.bf16.mxu0 0
        %837 = vmatpush1.bf16.msra.mxu0 0
        %838 = vmatprep.subr.bf16.mxu0 0
        %839 = vmatpush1.bf16.msra.mxu0 0
        %840 = vmatprep.mubr.bf16.mxu0 0
        %841 = vmatmul.mubr.bf16.gmra.mrb[0].mxu0 %v750
        %v842 = vpop.f32.mrb[0].mxu0
        %v843 = vadd.f32 0.0, %v842
        %v844 = vpop.f32.mrb[0].mxu0
        %v845 = vpop.f32.mrb[0].mxu0
        %v846 = vpop.f32.mrb[0].mxu0
        %847 = vdwg.mxu0
        %s848 = sld [smem:[#allocation6 + $0x5]]
        %v849 = vstv %s848
        %v850 = vmul.f32 %v849, %v843
        %v851 = vadd.f32 %v795, %v850
        %s852 = sld [smem:[#allocation6 + $0x15]]
        %v853 = vstv %s852
        %v854 = vmul.f32 %v853, %v843
        %v855 = vadd.f32 %v799, %v854
        %s856 = sld [smem:[#allocation6 + $0x25]]
        %v857 = vstv %s856
        %v858 = vmul.f32 %v857, %v843
        %v859 = vadd.f32 %v803, %v858
        %s860 = sld [smem:[#allocation6 + $0x35]]
        %v861 = vstv %s860
        %v862 = vmul.f32 %v861, %v843
        %v863 = vadd.f32 %v807, %v862
        %864 = vmatprep.subr.bf16.mxu0 0
        %865 = vmatpush1.bf16.msra.mxu0 %v707
        %866 = vmatprep.subr.bf16.mxu0 0
        %867 = vmatpush1.bf16.msra.mxu0 0
        %868 = vmatprep.subr.bf16.mxu0 0
        %869 = vmatpush1.bf16.msra.mxu0 0
        %870 = vmatprep.subr.bf16.mxu0 0
        %871 = vmatpush1.bf16.msra.mxu0 0
        %872 = vmatprep.subr.bf16.mxu0 0
        %873 = vmatpush1.bf16.msra.mxu0 0
        %874 = vmatprep.subr.bf16.mxu0 0
        %875 = vmatpush1.bf16.msra.mxu0 0
        %876 = vmatprep.subr.bf16.mxu0 0
        %877 = vmatpush1.bf16.msra.mxu0 0
        %878 = vmatprep.subr.bf16.mxu0 0
        %879 = vmatpush1.bf16.msra.mxu0 0
        %880 = vmatprep.subr.bf16.mxu0 0
        %881 = vmatpush1.bf16.msra.mxu0 0
        %882 = vmatprep.subr.bf16.mxu0 0
        %883 = vmatpush1.bf16.msra.mxu0 0
        %884 = vmatprep.subr.bf16.mxu0 0
        %885 = vmatpush1.bf16.msra.mxu0 0
        %886 = vmatprep.subr.bf16.mxu0 0
        %887 = vmatpush1.bf16.msra.mxu0 0
        %888 = vmatprep.subr.bf16.mxu0 0
        %889 = vmatpush1.bf16.msra.mxu0 0
        %890 = vmatprep.subr.bf16.mxu0 0
        %891 = vmatpush1.bf16.msra.mxu0 0
        %892 = vmatprep.subr.bf16.mxu0 0
        %893 = vmatpush1.bf16.msra.mxu0 0
        %894 = vmatprep.subr.bf16.mxu0 0
        %895 = vmatpush1.bf16.msra.mxu0 0
        %896 = vmatprep.mubr.bf16.mxu0 0
        %897 = vmatmul.mubr.bf16.gmra.mrb[0].mxu0 %v546
        %v898 = vpop.f32.mrb[0].mxu0
        %v899 = vadd.f32 0.0, %v898
        %v900 = vpop.f32.mrb[0].mxu0
        %v901 = vpop.f32.mrb[0].mxu0
        %v902 = vpop.f32.mrb[0].mxu0
        %903 = vdwg.mxu0
        %v904 = vpack.c.bf16 %v899, %v899
        %v906 = vsel %vm366, %v904, 0
        %908 = vmatprep.subr.bf16.mxu0 0
        %909 = vmatpush1.bf16.msra.mxu0 %v417
        %910 = vmatprep.subr.bf16.mxu0 0
        %911 = vmatpush1.bf16.msra.mxu0 0
        %912 = vmatprep.subr.bf16.mxu0 0
        %913 = vmatpush1.bf16.msra.mxu0 0
        %914 = vmatprep.subr.bf16.mxu0 0
        %915 = vmatpush1.bf16.msra.mxu0 0
        %916 = vmatprep.subr.bf16.mxu0 0
        %917 = vmatpush1.bf16.msra.mxu0 0
        %918 = vmatprep.subr.bf16.mxu0 0
        %919 = vmatpush1.bf16.msra.mxu0 0
        %920 = vmatprep.subr.bf16.mxu0 0
        %921 = vmatpush1.bf16.msra.mxu0 0
        %922 = vmatprep.subr.bf16.mxu0 0
        %923 = vmatpush1.bf16.msra.mxu0 0
        %924 = vmatprep.subr.bf16.mxu0 0
        %925 = vmatpush1.bf16.msra.mxu0 0
        %926 = vmatprep.subr.bf16.mxu0 0
        %927 = vmatpush1.bf16.msra.mxu0 0
        %928 = vmatprep.subr.bf16.mxu0 0
        %929 = vmatpush1.bf16.msra.mxu0 0
        %930 = vmatprep.subr.bf16.mxu0 0
        %931 = vmatpush1.bf16.msra.mxu0 0
        %932 = vmatprep.subr.bf16.mxu0 0
        %933 = vmatpush1.bf16.msra.mxu0 0
        %934 = vmatprep.subr.bf16.mxu0 0
        %935 = vmatpush1.bf16.msra.mxu0 0
        %936 = vmatprep.subr.bf16.mxu0 0
        %937 = vmatpush1.bf16.msra.mxu0 0
        %938 = vmatprep.subr.bf16.mxu0 0
        %939 = vmatpush1.bf16.msra.mxu0 0
        %940 = vmatprep.mubr.bf16.mxu0 0
        %941 = vmatmul.mubr.bf16.gmra.mrb[0].mxu0 %v906
        %v942 = vpop.f32.mrb[0].mxu0
        %v943 = vadd.f32 0.0, %v942
        %v944 = vpop.f32.mrb[0].mxu0
        %v945 = vpop.f32.mrb[0].mxu0
        %v946 = vpop.f32.mrb[0].mxu0
        %947 = vdwg.mxu0
        %s948 = sld [smem:[#allocation6 + $0x6]]
        %v949 = vstv %s948
        %v950 = vmul.f32 %v949, %v943
        %v951 = vadd.f32 %v851, %v950
        %s952 = sld [smem:[#allocation6 + $0x16]]
        %v953 = vstv %s952
        %v954 = vmul.f32 %v953, %v943
        %v955 = vadd.f32 %v855, %v954
        %s956 = sld [smem:[#allocation6 + $0x26]]
        %v957 = vstv %s956
        %v958 = vmul.f32 %v957, %v943
        %v959 = vadd.f32 %v859, %v958
        %s960 = sld [smem:[#allocation6 + $0x36]]
        %v961 = vstv %s960
        %v962 = vmul.f32 %v961, %v943
        %v963 = vadd.f32 %v863, %v962
        %964 = vmatprep.subr.bf16.mxu0 0
        %965 = vmatpush1.bf16.msra.mxu0 %v485
        %966 = vmatprep.subr.bf16.mxu0 0
        %967 = vmatpush1.bf16.msra.mxu0 0
        %968 = vmatprep.subr.bf16.mxu0 0
        %969 = vmatpush1.bf16.msra.mxu0 0
        %970 = vmatprep.subr.bf16.mxu0 0
        %971 = vmatpush1.bf16.msra.mxu0 0
        %972 = vmatprep.subr.bf16.mxu0 0
        %973 = vmatpush1.bf16.msra.mxu0 0
        %974 = vmatprep.subr.bf16.mxu0 0
        %975 = vmatpush1.bf16.msra.mxu0 0
        %976 = vmatprep.subr.bf16.mxu0 0
        %977 = vmatpush1.bf16.msra.mxu0 0
        %978 = vmatprep.subr.bf16.mxu0 0
        %979 = vmatpush1.bf16.msra.mxu0 0
        %980 = vmatprep.subr.bf16.mxu0 0
        %981 = vmatpush1.bf16.msra.mxu0 0
        %982 = vmatprep.subr.bf16.mxu0 0
        %983 = vmatpush1.bf16.msra.mxu0 0
        %984 = vmatprep.subr.bf16.mxu0 0
        %985 = vmatpush1.bf16.msra.mxu0 0
        %986 = vmatprep.subr.bf16.mxu0 0
        %987 = vmatpush1.bf16.msra.mxu0 0
        %988 = vmatprep.subr.bf16.mxu0 0
        %989 = vmatpush1.bf16.msra.mxu0 0
        %990 = vmatprep.subr.bf16.mxu0 0
        %991 = vmatpush1.bf16.msra.mxu0 0
        %992 = vmatprep.subr.bf16.mxu0 0
        %993 = vmatpush1.bf16.msra.mxu0 0
        %994 = vmatprep.subr.bf16.mxu0 0
        %995 = vmatpush1.bf16.msra.mxu0 0
        %996 = vmatprep.mubr.bf16.mxu0 0
        %997 = vmatmul.mubr.bf16.gmra.mrb[0].mxu0 %v906
        %v998 = vpop.f32.mrb[0].mxu0
        %v999 = vadd.f32 0.0, %v998
        %v1000 = vpop.f32.mrb[0].mxu0
        %v1001 = vpop.f32.mrb[0].mxu0
        %v1002 = vpop.f32.mrb[0].mxu0
        %1003 = vdwg.mxu0
        %s1004 = sld [smem:[#allocation6 + $0x7]]
        %v1005 = vstv %s1004
        %v1006 = vmul.f32 %v1005, %v999
        %v1007 = vadd.f32 %v951, %v1006
        %s1008 = sld [smem:[#allocation6 + $0x17]]
        %v1009 = vstv %s1008
        %v1010 = vmul.f32 %v1009, %v999
        %v1011 = vadd.f32 %v955, %v1010
        %s1012 = sld [smem:[#allocation6 + $0x27]]
        %v1013 = vstv %s1012
        %v1014 = vmul.f32 %v1013, %v999
        %v1015 = vadd.f32 %v959, %v1014
        %s1016 = sld [smem:[#allocation6 + $0x37]]
        %v1017 = vstv %s1016
        %v1018 = vmul.f32 %v1017, %v999
        %v1019 = vadd.f32 %v963, %v1018
        %s1020 = scalar_lea.vmem %s295, 32 [#allocation2]
        %v1021 = vld [vmem:[%s1020] sm:$0xff]
        %v1022 = vld [vmem:[%s1020 + $0x8] sm:$0xff]
        %v1023 = vpack.c.bf16 %v1022, %v1021
        %1024 = vmatprep.subr.bf16.mxu0 0
        %1025 = vmatpush1.bf16.msra.mxu0 %v1023
        %1026 = vmatprep.subr.bf16.mxu0 0
        %1027 = vmatpush1.bf16.msra.mxu0 0
        %1028 = vmatprep.subr.bf16.mxu0 0
        %1029 = vmatpush1.bf16.msra.mxu0 0
        %1030 = vmatprep.subr.bf16.mxu0 0
        %1031 = vmatpush1.bf16.msra.mxu0 0
        %1032 = vmatprep.subr.bf16.mxu0 0
        %1033 = vmatpush1.bf16.msra.mxu0 0
        %1034 = vmatprep.subr.bf16.mxu0 0
        %1035 = vmatpush1.bf16.msra.mxu0 0
        %1036 = vmatprep.subr.bf16.mxu0 0
        %1037 = vmatpush1.bf16.msra.mxu0 0
        %1038 = vmatprep.subr.bf16.mxu0 0
        %1039 = vmatpush1.bf16.msra.mxu0 0
        %1040 = vmatprep.subr.bf16.mxu0 0
        %1041 = vmatpush1.bf16.msra.mxu0 0
        %1042 = vmatprep.subr.bf16.mxu0 0
        %1043 = vmatpush1.bf16.msra.mxu0 0
        %1044 = vmatprep.subr.bf16.mxu0 0
        %1045 = vmatpush1.bf16.msra.mxu0 0
        %1046 = vmatprep.subr.bf16.mxu0 0
        %1047 = vmatpush1.bf16.msra.mxu0 0
        %1048 = vmatprep.subr.bf16.mxu0 0
        %1049 = vmatpush1.bf16.msra.mxu0 0
        %1050 = vmatprep.subr.bf16.mxu0 0
        %1051 = vmatpush1.bf16.msra.mxu0 0
        %1052 = vmatprep.subr.bf16.mxu0 0
        %1053 = vmatpush1.bf16.msra.mxu0 0
        %1054 = vmatprep.subr.bf16.mxu0 0
        %1055 = vmatpush1.bf16.msra.mxu0 0
        %1056 = vmatprep.mubr.bf16.mxu0 0
        %1057 = vmatmul.mubr.bf16.gmra.mrb[0].mxu0 %v368
        %v1058 = vpop.f32.mrb[0].mxu0
        %v1059 = vadd.f32 0.0, %v1058
        %v1060 = vpop.f32.mrb[0].mxu0
        %v1061 = vpop.f32.mrb[0].mxu0
        %v1062 = vpop.f32.mrb[0].mxu0
        %1063 = vdwg.mxu0
        %v1064 = vpack.c.bf16 %v1059, %v1059
        %v1066 = vsel %vm366, %v1064, 0
        %1068 = vmatprep.subr.bf16.mxu0 0
        %1069 = vmatpush1.bf16.msra.mxu0 %v417
        %1070 = vmatprep.subr.bf16.mxu0 0
        %1071 = vmatpush1.bf16.msra.mxu0 0
        %1072 = vmatprep.subr.bf16.mxu0 0
        %1073 = vmatpush1.bf16.msra.mxu0 0
        %1074 = vmatprep.subr.bf16.mxu0 0
        %1075 = vmatpush1.bf16.msra.mxu0 0
        %1076 = vmatprep.subr.bf16.mxu0 0
        %1077 = vmatpush1.bf16.msra.mxu0 0
        %1078 = vmatprep.subr.bf16.mxu0 0
        %1079 = vmatpush1.bf16.msra.mxu0 0
        %1080 = vmatprep.subr.bf16.mxu0 0
        %1081 = vmatpush1.bf16.msra.mxu0 0
        %1082 = vmatprep.subr.bf16.mxu0 0
        %1083 = vmatpush1.bf16.msra.mxu0 0
        %1084 = vmatprep.subr.bf16.mxu0 0
        %1085 = vmatpush1.bf16.msra.mxu0 0
        %1086 = vmatprep.subr.bf16.mxu0 0
        %1087 = vmatpush1.bf16.msra.mxu0 0
        %1088 = vmatprep.subr.bf16.mxu0 0
        %1089 = vmatpush1.bf16.msra.mxu0 0
        %1090 = vmatprep.subr.bf16.mxu0 0
        %1091 = vmatpush1.bf16.msra.mxu0 0
        %1092 = vmatprep.subr.bf16.mxu0 0
        %1093 = vmatpush1.bf16.msra.mxu0 0
        %1094 = vmatprep.subr.bf16.mxu0 0
        %1095 = vmatpush1.bf16.msra.mxu0 0
        %1096 = vmatprep.subr.bf16.mxu0 0
        %1097 = vmatpush1.bf16.msra.mxu0 0
        %1098 = vmatprep.subr.bf16.mxu0 0
        %1099 = vmatpush1.bf16.msra.mxu0 0
        %1100 = vmatprep.mubr.bf16.mxu0 0
        %1101 = vmatmul.mubr.bf16.gmra.mrb[0].mxu0 %v1066
        %v1102 = vpop.f32.mrb[0].mxu0
        %v1103 = vadd.f32 0.0, %v1102
        %v1104 = vpop.f32.mrb[0].mxu0
        %v1105 = vpop.f32.mrb[0].mxu0
        %v1106 = vpop.f32.mrb[0].mxu0
        %1107 = vdwg.mxu0
        %s1108 = sld [smem:[#allocation6 + $0x8]]
        %v1109 = vstv %s1108
        %v1110 = vmul.f32 %v1109, %v1103
        %v1111 = vadd.f32 %v1007, %v1110
        %s1112 = sld [smem:[#allocation6 + $0x18]]
        %v1113 = vstv %s1112
        %v1114 = vmul.f32 %v1113, %v1103
        %v1115 = vadd.f32 %v1011, %v1114
        %s1116 = sld [smem:[#allocation6 + $0x28]]
        %v1117 = vstv %s1116
        %v1118 = vmul.f32 %v1117, %v1103
        %v1119 = vadd.f32 %v1015, %v1118
        %s1120 = sld [smem:[#allocation6 + $0x38]]
        %v1121 = vstv %s1120
        %v1122 = vmul.f32 %v1121, %v1103
        %v1123 = vadd.f32 %v1019, %v1122
        %1124 = vmatprep.subr.bf16.mxu0 0
        %1125 = vmatpush1.bf16.msra.mxu0 %v485
        %1126 = vmatprep.subr.bf16.mxu0 0
        %1127 = vmatpush1.bf16.msra.mxu0 0
        %1128 = vmatprep.subr.bf16.mxu0 0
        %1129 = vmatpush1.bf16.msra.mxu0 0
        %1130 = vmatprep.subr.bf16.mxu0 0
        %1131 = vmatpush1.bf16.msra.mxu0 0
        %1132 = vmatprep.subr.bf16.mxu0 0
        %1133 = vmatpush1.bf16.msra.mxu0 0
        %1134 = vmatprep.subr.bf16.mxu0 0
        %1135 = vmatpush1.bf16.msra.mxu0 0
        %1136 = vmatprep.subr.bf16.mxu0 0
        %1137 = vmatpush1.bf16.msra.mxu0 0
        %1138 = vmatprep.subr.bf16.mxu0 0
        %1139 = vmatpush1.bf16.msra.mxu0 0
        %1140 = vmatprep.subr.bf16.mxu0 0
        %1141 = vmatpush1.bf16.msra.mxu0 0
        %1142 = vmatprep.subr.bf16.mxu0 0
        %1143 = vmatpush1.bf16.msra.mxu0 0
        %1144 = vmatprep.subr.bf16.mxu0 0
        %1145 = vmatpush1.bf16.msra.mxu0 0
        %1146 = vmatprep.subr.bf16.mxu0 0
        %1147 = vmatpush1.bf16.msra.mxu0 0
        %1148 = vmatprep.subr.bf16.mxu0 0
        %1149 = vmatpush1.bf16.msra.mxu0 0
        %1150 = vmatprep.subr.bf16.mxu0 0
        %1151 = vmatpush1.bf16.msra.mxu0 0
        %1152 = vmatprep.subr.bf16.mxu0 0
        %1153 = vmatpush1.bf16.msra.mxu0 0
        %1154 = vmatprep.subr.bf16.mxu0 0
        %1155 = vmatpush1.bf16.msra.mxu0 0
        %1156 = vmatprep.mubr.bf16.mxu0 0
        %1157 = vmatmul.mubr.bf16.gmra.mrb[0].mxu0 %v1066
        %v1158 = vpop.f32.mrb[0].mxu0
        %v1159 = vadd.f32 0.0, %v1158
        %v1160 = vpop.f32.mrb[0].mxu0
        %v1161 = vpop.f32.mrb[0].mxu0
        %v1162 = vpop.f32.mrb[0].mxu0
        %1163 = vdwg.mxu0
        %s1164 = sld [smem:[#allocation6 + $0x9]]
        %v1165 = vstv %s1164
        %v1166 = vmul.f32 %v1165, %v1159
        %v1167 = vadd.f32 %v1111, %v1166
        %s1168 = sld [smem:[#allocation6 + $0x19]]
        %v1169 = vstv %s1168
        %v1170 = vmul.f32 %v1169, %v1159
        %v1171 = vadd.f32 %v1115, %v1170
        %s1172 = sld [smem:[#allocation6 + $0x29]]
        %v1173 = vstv %s1172
        %v1174 = vmul.f32 %v1173, %v1159
        %v1175 = vadd.f32 %v1119, %v1174
        %s1176 = sld [smem:[#allocation6 + $0x39]]
        %v1177 = vstv %s1176
        %v1178 = vmul.f32 %v1177, %v1159
        %v1179 = vadd.f32 %v1123, %v1178
        %1180 = vmatprep.subr.bf16.mxu0 0
        %1181 = vmatpush1.bf16.msra.mxu0 %v1023
        %1182 = vmatprep.subr.bf16.mxu0 0
        %1183 = vmatpush1.bf16.msra.mxu0 0
        %1184 = vmatprep.subr.bf16.mxu0 0
        %1185 = vmatpush1.bf16.msra.mxu0 0
        %1186 = vmatprep.subr.bf16.mxu0 0
        %1187 = vmatpush1.bf16.msra.mxu0 0
        %1188 = vmatprep.subr.bf16.mxu0 0
        %1189 = vmatpush1.bf16.msra.mxu0 0
        %1190 = vmatprep.subr.bf16.mxu0 0
        %1191 = vmatpush1.bf16.msra.mxu0 0
        %1192 = vmatprep.subr.bf16.mxu0 0
        %1193 = vmatpush1.bf16.msra.mxu0 0
        %1194 = vmatprep.subr.bf16.mxu0 0
        %1195 = vmatpush1.bf16.msra.mxu0 0
        %1196 = vmatprep.subr.bf16.mxu0 0
        %1197 = vmatpush1.bf16.msra.mxu0 0
        %1198 = vmatprep.subr.bf16.mxu0 0
        %1199 = vmatpush1.bf16.msra.mxu0 0
        %1200 = vmatprep.subr.bf16.mxu0 0
        %1201 = vmatpush1.bf16.msra.mxu0 0
        %1202 = vmatprep.subr.bf16.mxu0 0
        %1203 = vmatpush1.bf16.msra.mxu0 0
        %1204 = vmatprep.subr.bf16.mxu0 0
        %1205 = vmatpush1.bf16.msra.mxu0 0
        %1206 = vmatprep.subr.bf16.mxu0 0
        %1207 = vmatpush1.bf16.msra.mxu0 0
        %1208 = vmatprep.subr.bf16.mxu0 0
        %1209 = vmatpush1.bf16.msra.mxu0 0
        %1210 = vmatprep.subr.bf16.mxu0 0
        %1211 = vmatpush1.bf16.msra.mxu0 0
        %1212 = vmatprep.mubr.bf16.mxu0 0
        %1213 = vmatmul.mubr.bf16.gmra.mrb[0].mxu0 %v546
        %v1214 = vpop.f32.mrb[0].mxu0
        %v1215 = vadd.f32 0.0, %v1214
        %v1216 = vpop.f32.mrb[0].mxu0
        %v1217 = vpop.f32.mrb[0].mxu0
        %v1218 = vpop.f32.mrb[0].mxu0
        %1219 = vdwg.mxu0
        %v1220 = vpack.c.bf16 %v1215, %v1215
        %v1222 = vsel %vm366, %v1220, 0
        %1224 = vmatprep.subr.bf16.mxu0 0
        %1225 = vmatpush1.bf16.msra.mxu0 %v417
        %1226 = vmatprep.subr.bf16.mxu0 0
        %1227 = vmatpush1.bf16.msra.mxu0 0
        %1228 = vmatprep.subr.bf16.mxu0 0
        %1229 = vmatpush1.bf16.msra.mxu0 0
        %1230 = vmatprep.subr.bf16.mxu0 0
        %1231 = vmatpush1.bf16.msra.mxu0 0
        %1232 = vmatprep.subr.bf16.mxu0 0
        %1233 = vmatpush1.bf16.msra.mxu0 0
        %1234 = vmatprep.subr.bf16.mxu0 0
        %1235 = vmatpush1.bf16.msra.mxu0 0
        %1236 = vmatprep.subr.bf16.mxu0 0
        %1237 = vmatpush1.bf16.msra.mxu0 0
        %1238 = vmatprep.subr.bf16.mxu0 0
        %1239 = vmatpush1.bf16.msra.mxu0 0
        %1240 = vmatprep.subr.bf16.mxu0 0
        %1241 = vmatpush1.bf16.msra.mxu0 0
        %1242 = vmatprep.subr.bf16.mxu0 0
        %1243 = vmatpush1.bf16.msra.mxu0 0
        %1244 = vmatprep.subr.bf16.mxu0 0
        %1245 = vmatpush1.bf16.msra.mxu0 0
        %1246 = vmatprep.subr.bf16.mxu0 0
        %1247 = vmatpush1.bf16.msra.mxu0 0
        %1248 = vmatprep.subr.bf16.mxu0 0
        %1249 = vmatpush1.bf16.msra.mxu0 0
        %1250 = vmatprep.subr.bf16.mxu0 0
        %1251 = vmatpush1.bf16.msra.mxu0 0
        %1252 = vmatprep.subr.bf16.mxu0 0
        %1253 = vmatpush1.bf16.msra.mxu0 0
        %1254 = vmatprep.subr.bf16.mxu0 0
        %1255 = vmatpush1.bf16.msra.mxu0 0
        %1256 = vmatprep.mubr.bf16.mxu0 0
        %1257 = vmatmul.mubr.bf16.gmra.mrb[0].mxu0 %v1222
        %v1258 = vpop.f32.mrb[0].mxu0
        %v1259 = vadd.f32 0.0, %v1258
        %v1260 = vpop.f32.mrb[0].mxu0
        %v1261 = vpop.f32.mrb[0].mxu0
        %v1262 = vpop.f32.mrb[0].mxu0
        %1263 = vdwg.mxu0
        %s1264 = sld [smem:[#allocation6 + $0xa]]
        %v1265 = vstv %s1264
        %v1266 = vmul.f32 %v1265, %v1259
        %v1267 = vadd.f32 %v1167, %v1266
        %s1268 = sld [smem:[#allocation6 + $0x1a]]
        %v1269 = vstv %s1268
        %v1270 = vmul.f32 %v1269, %v1259
        %v1271 = vadd.f32 %v1171, %v1270
        %s1272 = sld [smem:[#allocation6 + $0x2a]]
        %v1273 = vstv %s1272
        %v1274 = vmul.f32 %v1273, %v1259
        %v1275 = vadd.f32 %v1175, %v1274
        %s1276 = sld [smem:[#allocation6 + $0x3a]]
        %v1277 = vstv %s1276
        %v1278 = vmul.f32 %v1277, %v1259
        %v1279 = vadd.f32 %v1179, %v1278
        %1280 = vmatprep.subr.bf16.mxu0 0
        %1281 = vmatpush1.bf16.msra.mxu0 %v485
        %1282 = vmatprep.subr.bf16.mxu0 0
        %1283 = vmatpush1.bf16.msra.mxu0 0
        %1284 = vmatprep.subr.bf16.mxu0 0
        %1285 = vmatpush1.bf16.msra.mxu0 0
        %1286 = vmatprep.subr.bf16.mxu0 0
        %1287 = vmatpush1.bf16.msra.mxu0 0
        %1288 = vmatprep.subr.bf16.mxu0 0
        %1289 = vmatpush1.bf16.msra.mxu0 0
        %1290 = vmatprep.subr.bf16.mxu0 0
        %1291 = vmatpush1.bf16.msra.mxu0 0
        %1292 = vmatprep.subr.bf16.mxu0 0
        %1293 = vmatpush1.bf16.msra.mxu0 0
        %1294 = vmatprep.subr.bf16.mxu0 0
        %1295 = vmatpush1.bf16.msra.mxu0 0
        %1296 = vmatprep.subr.bf16.mxu0 0
        %1297 = vmatpush1.bf16.msra.mxu0 0
        %1298 = vmatprep.subr.bf16.mxu0 0
        %1299 = vmatpush1.bf16.msra.mxu0 0
        %1300 = vmatprep.subr.bf16.mxu0 0
        %1301 = vmatpush1.bf16.msra.mxu0 0
        %1302 = vmatprep.subr.bf16.mxu0 0
        %1303 = vmatpush1.bf16.msra.mxu0 0
        %1304 = vmatprep.subr.bf16.mxu0 0
        %1305 = vmatpush1.bf16.msra.mxu0 0
        %1306 = vmatprep.subr.bf16.mxu0 0
        %1307 = vmatpush1.bf16.msra.mxu0 0
        %1308 = vmatprep.subr.bf16.mxu0 0
        %1309 = vmatpush1.bf16.msra.mxu0 0
        %1310 = vmatprep.subr.bf16.mxu0 0
        %1311 = vmatpush1.bf16.msra.mxu0 0
        %1312 = vmatprep.mubr.bf16.mxu0 0
        %1313 = vmatmul.mubr.bf16.gmra.mrb[0].mxu0 %v1222
        %v1314 = vpop.f32.mrb[0].mxu0
        %v1315 = vadd.f32 0.0, %v1314
        %v1316 = vpop.f32.mrb[0].mxu0
        %v1317 = vpop.f32.mrb[0].mxu0
        %v1318 = vpop.f32.mrb[0].mxu0
        %1319 = vdwg.mxu0
        %s1320 = sld [smem:[#allocation6 + $0xb]]
        %v1321 = vstv %s1320
        %v1322 = vmul.f32 %v1321, %v1315
        %v1323 = vadd.f32 %v1267, %v1322
        %s1324 = sld [smem:[#allocation6 + $0x1b]]
        %v1325 = vstv %s1324
        %v1326 = vmul.f32 %v1325, %v1315
        %v1327 = vadd.f32 %v1271, %v1326
        %s1328 = sld [smem:[#allocation6 + $0x2b]]
        %v1329 = vstv %s1328
        %v1330 = vmul.f32 %v1329, %v1315
        %v1331 = vadd.f32 %v1275, %v1330
        %s1332 = sld [smem:[#allocation6 + $0x3b]]
        %v1333 = vstv %s1332
        %v1334 = vmul.f32 %v1333, %v1315
        %v1335 = vadd.f32 %v1279, %v1334
        %s1336 = scalar_lea.vmem %s295, 48 [#allocation2]
        %v1337 = vld [vmem:[%s1336] sm:$0xff]
        %v1338 = vld [vmem:[%s1336 + $0x8] sm:$0xff]
        %v1339 = vpack.c.bf16 %v1338, %v1337
        %1340 = vmatprep.subr.bf16.mxu0 0
        %1341 = vmatpush1.bf16.msra.mxu0 %v1339
        %1342 = vmatprep.subr.bf16.mxu0 0
        %1343 = vmatpush1.bf16.msra.mxu0 0
        %1344 = vmatprep.subr.bf16.mxu0 0
        %1345 = vmatpush1.bf16.msra.mxu0 0
        %1346 = vmatprep.subr.bf16.mxu0 0
        %1347 = vmatpush1.bf16.msra.mxu0 0
        %1348 = vmatprep.subr.bf16.mxu0 0
        %1349 = vmatpush1.bf16.msra.mxu0 0
        %1350 = vmatprep.subr.bf16.mxu0 0
        %1351 = vmatpush1.bf16.msra.mxu0 0
        %1352 = vmatprep.subr.bf16.mxu0 0
        %1353 = vmatpush1.bf16.msra.mxu0 0
        %1354 = vmatprep.subr.bf16.mxu0 0
        %1355 = vmatpush1.bf16.msra.mxu0 0
        %1356 = vmatprep.subr.bf16.mxu0 0
        %1357 = vmatpush1.bf16.msra.mxu0 0
        %1358 = vmatprep.subr.bf16.mxu0 0
        %1359 = vmatpush1.bf16.msra.mxu0 0
        %1360 = vmatprep.subr.bf16.mxu0 0
        %1361 = vmatpush1.bf16.msra.mxu0 0
        %1362 = vmatprep.subr.bf16.mxu0 0
        %1363 = vmatpush1.bf16.msra.mxu0 0
        %1364 = vmatprep.subr.bf16.mxu0 0
        %1365 = vmatpush1.bf16.msra.mxu0 0
        %1366 = vmatprep.subr.bf16.mxu0 0
        %1367 = vmatpush1.bf16.msra.mxu0 0
        %1368 = vmatprep.subr.bf16.mxu0 0
        %1369 = vmatpush1.bf16.msra.mxu0 0
        %1370 = vmatprep.subr.bf16.mxu0 0
        %1371 = vmatpush1.bf16.msra.mxu0 0
        %1372 = vmatprep.mubr.bf16.mxu0 0
        %1373 = vmatmul.mubr.bf16.gmra.mrb[0].mxu0 %v368
        %v1374 = vpop.f32.mrb[0].mxu0
        %v1375 = vadd.f32 0.0, %v1374
        %v1376 = vpop.f32.mrb[0].mxu0
        %v1377 = vpop.f32.mrb[0].mxu0
        %v1378 = vpop.f32.mrb[0].mxu0
        %1379 = vdwg.mxu0
        %v1380 = vpack.c.bf16 %v1375, %v1375
        %v1382 = vsel %vm366, %v1380, 0
        %1384 = vmatprep.subr.bf16.mxu0 0
        %1385 = vmatpush1.bf16.msra.mxu0 %v417
        %1386 = vmatprep.subr.bf16.mxu0 0
        %1387 = vmatpush1.bf16.msra.mxu0 0
        %1388 = vmatprep.subr.bf16.mxu0 0
        %1389 = vmatpush1.bf16.msra.mxu0 0
        %1390 = vmatprep.subr.bf16.mxu0 0
        %1391 = vmatpush1.bf16.msra.mxu0 0
        %1392 = vmatprep.subr.bf16.mxu0 0
        %1393 = vmatpush1.bf16.msra.mxu0 0
        %1394 = vmatprep.subr.bf16.mxu0 0
        %1395 = vmatpush1.bf16.msra.mxu0 0
        %1396 = vmatprep.subr.bf16.mxu0 0
        %1397 = vmatpush1.bf16.msra.mxu0 0
        %1398 = vmatprep.subr.bf16.mxu0 0
        %1399 = vmatpush1.bf16.msra.mxu0 0
        %1400 = vmatprep.subr.bf16.mxu0 0
        %1401 = vmatpush1.bf16.msra.mxu0 0
        %1402 = vmatprep.subr.bf16.mxu0 0
        %1403 = vmatpush1.bf16.msra.mxu0 0
        %1404 = vmatprep.subr.bf16.mxu0 0
        %1405 = vmatpush1.bf16.msra.mxu0 0
        %1406 = vmatprep.subr.bf16.mxu0 0
        %1407 = vmatpush1.bf16.msra.mxu0 0
        %1408 = vmatprep.subr.bf16.mxu0 0
        %1409 = vmatpush1.bf16.msra.mxu0 0
        %1410 = vmatprep.subr.bf16.mxu0 0
        %1411 = vmatpush1.bf16.msra.mxu0 0
        %1412 = vmatprep.subr.bf16.mxu0 0
        %1413 = vmatpush1.bf16.msra.mxu0 0
        %1414 = vmatprep.subr.bf16.mxu0 0
        %1415 = vmatpush1.bf16.msra.mxu0 0
        %1416 = vmatprep.mubr.bf16.mxu0 0
        %1417 = vmatmul.mubr.bf16.gmra.mrb[0].mxu0 %v1382
        %v1418 = vpop.f32.mrb[0].mxu0
        %v1419 = vadd.f32 0.0, %v1418
        %v1420 = vpop.f32.mrb[0].mxu0
        %v1421 = vpop.f32.mrb[0].mxu0
        %v1422 = vpop.f32.mrb[0].mxu0
        %1423 = vdwg.mxu0
        %s1424 = sld [smem:[#allocation6 + $0xc]]
        %v1425 = vstv %s1424
        %v1426 = vmul.f32 %v1425, %v1419
        %v1427 = vadd.f32 %v1323, %v1426
        %s1428 = sld [smem:[#allocation6 + $0x1c]]
        %v1429 = vstv %s1428
        %v1430 = vmul.f32 %v1429, %v1419
        %v1431 = vadd.f32 %v1327, %v1430
        %s1432 = sld [smem:[#allocation6 + $0x2c]]
        %v1433 = vstv %s1432
        %v1434 = vmul.f32 %v1433, %v1419
        %v1435 = vadd.f32 %v1331, %v1434
        %s1436 = sld [smem:[#allocation6 + $0x3c]]
        %v1437 = vstv %s1436
        %v1438 = vmul.f32 %v1437, %v1419
        %v1439 = vadd.f32 %v1335, %v1438
        %1440 = vmatprep.subr.bf16.mxu0 0
        %1441 = vmatpush1.bf16.msra.mxu0 %v485
        %1442 = vmatprep.subr.bf16.mxu0 0
        %1443 = vmatpush1.bf16.msra.mxu0 0
        %1444 = vmatprep.subr.bf16.mxu0 0
        %1445 = vmatpush1.bf16.msra.mxu0 0
        %1446 = vmatprep.subr.bf16.mxu0 0
        %1447 = vmatpush1.bf16.msra.mxu0 0
        %1448 = vmatprep.subr.bf16.mxu0 0
        %1449 = vmatpush1.bf16.msra.mxu0 0
        %1450 = vmatprep.subr.bf16.mxu0 0
        %1451 = vmatpush1.bf16.msra.mxu0 0
        %1452 = vmatprep.subr.bf16.mxu0 0
        %1453 = vmatpush1.bf16.msra.mxu0 0
        %1454 = vmatprep.subr.bf16.mxu0 0
        %1455 = vmatpush1.bf16.msra.mxu0 0
        %1456 = vmatprep.subr.bf16.mxu0 0
        %1457 = vmatpush1.bf16.msra.mxu0 0
        %1458 = vmatprep.subr.bf16.mxu0 0
        %1459 = vmatpush1.bf16.msra.mxu0 0
        %1460 = vmatprep.subr.bf16.mxu0 0
        %1461 = vmatpush1.bf16.msra.mxu0 0
        %1462 = vmatprep.subr.bf16.mxu0 0
        %1463 = vmatpush1.bf16.msra.mxu0 0
        %1464 = vmatprep.subr.bf16.mxu0 0
        %1465 = vmatpush1.bf16.msra.mxu0 0
        %1466 = vmatprep.subr.bf16.mxu0 0
        %1467 = vmatpush1.bf16.msra.mxu0 0
        %1468 = vmatprep.subr.bf16.mxu0 0
        %1469 = vmatpush1.bf16.msra.mxu0 0
        %1470 = vmatprep.subr.bf16.mxu0 0
        %1471 = vmatpush1.bf16.msra.mxu0 0
        %1472 = vmatprep.mubr.bf16.mxu0 0
        %1473 = vmatmul.mubr.bf16.gmra.mrb[0].mxu0 %v1382
        %v1474 = vpop.f32.mrb[0].mxu0
        %v1475 = vadd.f32 0.0, %v1474
        %v1476 = vpop.f32.mrb[0].mxu0
        %v1477 = vpop.f32.mrb[0].mxu0
        %v1478 = vpop.f32.mrb[0].mxu0
        %1479 = vdwg.mxu0
        %s1480 = sld [smem:[#allocation6 + $0xd]]
        %v1481 = vstv %s1480
        %v1482 = vmul.f32 %v1481, %v1475
        %v1483 = vadd.f32 %v1427, %v1482
        %s1484 = sld [smem:[#allocation6 + $0x1d]]
        %v1485 = vstv %s1484
        %v1486 = vmul.f32 %v1485, %v1475
        %v1487 = vadd.f32 %v1431, %v1486
        %s1488 = sld [smem:[#allocation6 + $0x2d]]
        %v1489 = vstv %s1488
        %v1490 = vmul.f32 %v1489, %v1475
        %v1491 = vadd.f32 %v1435, %v1490
        %s1492 = sld [smem:[#allocation6 + $0x3d]]
        %v1493 = vstv %s1492
        %v1494 = vmul.f32 %v1493, %v1475
        %v1495 = vadd.f32 %v1439, %v1494
        %1496 = vmatprep.subr.bf16.mxu0 0
        %1497 = vmatpush1.bf16.msra.mxu0 %v1339
        %1498 = vmatprep.subr.bf16.mxu0 0
        %1499 = vmatpush1.bf16.msra.mxu0 0
        %1500 = vmatprep.subr.bf16.mxu0 0
        %1501 = vmatpush1.bf16.msra.mxu0 0
        %1502 = vmatprep.subr.bf16.mxu0 0
        %1503 = vmatpush1.bf16.msra.mxu0 0
        %1504 = vmatprep.subr.bf16.mxu0 0
        %1505 = vmatpush1.bf16.msra.mxu0 0
        %1506 = vmatprep.subr.bf16.mxu0 0
        %1507 = vmatpush1.bf16.msra.mxu0 0
        %1508 = vmatprep.subr.bf16.mxu0 0
        %1509 = vmatpush1.bf16.msra.mxu0 0
        %1510 = vmatprep.subr.bf16.mxu0 0
        %1511 = vmatpush1.bf16.msra.mxu0 0
        %1512 = vmatprep.subr.bf16.mxu0 0
        %1513 = vmatpush1.bf16.msra.mxu0 0
        %1514 = vmatprep.subr.bf16.mxu0 0
        %1515 = vmatpush1.bf16.msra.mxu0 0
        %1516 = vmatprep.subr.bf16.mxu0 0
        %1517 = vmatpush1.bf16.msra.mxu0 0
        %1518 = vmatprep.subr.bf16.mxu0 0
        %1519 = vmatpush1.bf16.msra.mxu0 0
        %1520 = vmatprep.subr.bf16.mxu0 0
        %1521 = vmatpush1.bf16.msra.mxu0 0
        %1522 = vmatprep.subr.bf16.mxu0 0
        %1523 = vmatpush1.bf16.msra.mxu0 0
        %1524 = vmatprep.subr.bf16.mxu0 0
        %1525 = vmatpush1.bf16.msra.mxu0 0
        %1526 = vmatprep.subr.bf16.mxu0 0
        %1527 = vmatpush1.bf16.msra.mxu0 0
        %1528 = vmatprep.mubr.bf16.mxu0 0
        %1529 = vmatmul.mubr.bf16.gmra.mrb[0].mxu0 %v546
        %v1530 = vpop.f32.mrb[0].mxu0
        %v1531 = vadd.f32 0.0, %v1530
        %v1532 = vpop.f32.mrb[0].mxu0
        %v1533 = vpop.f32.mrb[0].mxu0
        %v1534 = vpop.f32.mrb[0].mxu0
        %1535 = vdwg.mxu0
        %v1536 = vpack.c.bf16 %v1531, %v1531
        %v1538 = vsel %vm366, %v1536, 0
        %1540 = vmatprep.subr.bf16.mxu0 0
        %1541 = vmatpush1.bf16.msra.mxu0 %v417
        %1542 = vmatprep.subr.bf16.mxu0 0
        %1543 = vmatpush1.bf16.msra.mxu0 0
        %1544 = vmatprep.subr.bf16.mxu0 0
        %1545 = vmatpush1.bf16.msra.mxu0 0
        %1546 = vmatprep.subr.bf16.mxu0 0
        %1547 = vmatpush1.bf16.msra.mxu0 0
        %1548 = vmatprep.subr.bf16.mxu0 0
        %1549 = vmatpush1.bf16.msra.mxu0 0
        %1550 = vmatprep.subr.bf16.mxu0 0
        %1551 = vmatpush1.bf16.msra.mxu0 0
        %1552 = vmatprep.subr.bf16.mxu0 0
        %1553 = vmatpush1.bf16.msra.mxu0 0
        %1554 = vmatprep.subr.bf16.mxu0 0
        %1555 = vmatpush1.bf16.msra.mxu0 0
        %1556 = vmatprep.subr.bf16.mxu0 0
        %1557 = vmatpush1.bf16.msra.mxu0 0
        %1558 = vmatprep.subr.bf16.mxu0 0
        %1559 = vmatpush1.bf16.msra.mxu0 0
        %1560 = vmatprep.subr.bf16.mxu0 0
        %1561 = vmatpush1.bf16.msra.mxu0 0
        %1562 = vmatprep.subr.bf16.mxu0 0
        %1563 = vmatpush1.bf16.msra.mxu0 0
        %1564 = vmatprep.subr.bf16.mxu0 0
        %1565 = vmatpush1.bf16.msra.mxu0 0
        %1566 = vmatprep.subr.bf16.mxu0 0
        %1567 = vmatpush1.bf16.msra.mxu0 0
        %1568 = vmatprep.subr.bf16.mxu0 0
        %1569 = vmatpush1.bf16.msra.mxu0 0
        %1570 = vmatprep.subr.bf16.mxu0 0
        %1571 = vmatpush1.bf16.msra.mxu0 0
        %1572 = vmatprep.mubr.bf16.mxu0 0
        %1573 = vmatmul.mubr.bf16.gmra.mrb[0].mxu0 %v1538
        %v1574 = vpop.f32.mrb[0].mxu0
        %v1575 = vadd.f32 0.0, %v1574
        %v1576 = vpop.f32.mrb[0].mxu0
        %v1577 = vpop.f32.mrb[0].mxu0
        %v1578 = vpop.f32.mrb[0].mxu0
        %1579 = vdwg.mxu0
        %s1580 = sld [smem:[#allocation6 + $0xe]]
        %v1581 = vstv %s1580
        %v1582 = vmul.f32 %v1581, %v1575
        %v1583 = vadd.f32 %v1483, %v1582
        %s1584 = sld [smem:[#allocation6 + $0x1e]]
        %v1585 = vstv %s1584
        %v1586 = vmul.f32 %v1585, %v1575
        %v1587 = vadd.f32 %v1487, %v1586
        %s1588 = sld [smem:[#allocation6 + $0x2e]]
        %v1589 = vstv %s1588
        %v1590 = vmul.f32 %v1589, %v1575
        %v1591 = vadd.f32 %v1491, %v1590
        %s1592 = sld [smem:[#allocation6 + $0x3e]]
        %v1593 = vstv %s1592
        %v1594 = vmul.f32 %v1593, %v1575
        %v1595 = vadd.f32 %v1495, %v1594
        %1596 = vmatprep.subr.bf16.mxu0 0
        %1597 = vmatpush1.bf16.msra.mxu0 %v485
        %1598 = vmatprep.subr.bf16.mxu0 0
        %1599 = vmatpush1.bf16.msra.mxu0 0
        %1600 = vmatprep.subr.bf16.mxu0 0
        %1601 = vmatpush1.bf16.msra.mxu0 0
        %1602 = vmatprep.subr.bf16.mxu0 0
        %1603 = vmatpush1.bf16.msra.mxu0 0
        %1604 = vmatprep.subr.bf16.mxu0 0
        %1605 = vmatpush1.bf16.msra.mxu0 0
        %1606 = vmatprep.subr.bf16.mxu0 0
        %1607 = vmatpush1.bf16.msra.mxu0 0
        %1608 = vmatprep.subr.bf16.mxu0 0
        %1609 = vmatpush1.bf16.msra.mxu0 0
        %1610 = vmatprep.subr.bf16.mxu0 0
        %1611 = vmatpush1.bf16.msra.mxu0 0
        %1612 = vmatprep.subr.bf16.mxu0 0
        %1613 = vmatpush1.bf16.msra.mxu0 0
        %1614 = vmatprep.subr.bf16.mxu0 0
        %1615 = vmatpush1.bf16.msra.mxu0 0
        %1616 = vmatprep.subr.bf16.mxu0 0
        %1617 = vmatpush1.bf16.msra.mxu0 0
        %1618 = vmatprep.subr.bf16.mxu0 0
        %1619 = vmatpush1.bf16.msra.mxu0 0
        %1620 = vmatprep.subr.bf16.mxu0 0
        %1621 = vmatpush1.bf16.msra.mxu0 0
        %1622 = vmatprep.subr.bf16.mxu0 0
        %1623 = vmatpush1.bf16.msra.mxu0 0
        %1624 = vmatprep.subr.bf16.mxu0 0
        %1625 = vmatpush1.bf16.msra.mxu0 0
        %1626 = vmatprep.subr.bf16.mxu0 0
        %1627 = vmatpush1.bf16.msra.mxu0 0
        %1628 = vmatprep.mubr.bf16.mxu0 0
        %1629 = vmatmul.mubr.bf16.gmra.mrb[0].mxu0 %v1538
        %v1630 = vpop.f32.mrb[0].mxu0
        %v1631 = vadd.f32 0.0, %v1630
        %v1632 = vpop.f32.mrb[0].mxu0
        %v1633 = vpop.f32.mrb[0].mxu0
        %v1634 = vpop.f32.mrb[0].mxu0
        %1635 = vdwg.mxu0
        %s1636 = sld [smem:[#allocation6 + $0xf]]
        %v1637 = vstv %s1636
        %v1638 = vmul.f32 %v1637, %v1631
        %v1639 = vadd.f32 %v1583, %v1638
        %s1640 = sld [smem:[#allocation6 + $0x1f]]
        %v1641 = vstv %s1640
        %v1642 = vmul.f32 %v1641, %v1631
        %v1643 = vadd.f32 %v1587, %v1642
        %s1644 = sld [smem:[#allocation6 + $0x2f]]
        %v1645 = vstv %s1644
        %v1646 = vmul.f32 %v1645, %v1631
        %v1647 = vadd.f32 %v1591, %v1646
        %s1648 = sld [smem:[#allocation6 + $0x3f]]
        %v1649 = vstv %s1648
        %v1650 = vmul.f32 %v1649, %v1631
        %v1651 = vadd.f32 %v1595, %v1650
        %v1652 = vpack.c.bf16 %v1639, %v1639
        %vm1653 = vcmask 60416
        %1654 = vst.msk [vmem:[%s332] sm:$0xf] %vm1653, %v1652
        %v1655 = vpack.c.bf16 %v1643, %v1643
        %s1656 = scalar_lea.vmem %s332, 4 [#allocation10]
        %1657 = vst.msk [vmem:[%s1656] sm:$0xf] %vm1653, %v1655
        %v1658 = vpack.c.bf16 %v1647, %v1647
        %s1659 = scalar_lea.vmem %s332, 8 [#allocation10]
        %1660 = vst.msk [vmem:[%s1659] sm:$0xf] %vm1653, %v1658
        %v1661 = vpack.c.bf16 %v1651, %v1651
        %s1662 = scalar_lea.vmem %s332, 12 [#allocation10]
        %1663 = vst.msk [vmem:[%s1662] sm:$0xf] %vm1653, %v1661
        %v1664 = vld [vmem:[%s332] sm:$0xf]
        %v1665 = vld [vmem:[%s332 + $0x4] sm:$0xf]
        %v1666 = vld [vmem:[%s332 + $0x8] sm:$0xf]
        %v1667 = vld [vmem:[%s332 + $0xc] sm:$0xf]
        %v1668 = vunpack.c.l.bf16 %v1664
        %v1669 = vunpack.c.l.bf16 %v1665
        %v1670 = vunpack.c.l.bf16 %v1666
        %v1671 = vunpack.c.l.bf16 %v1667
        %v1672 = vld [vmem:[%s339] sm:$0x1]
        %v1673 = vld [vmem:[%s339 + $0x1] sm:$0x1]
        %v1674 = vld [vmem:[%s339 + $0x2] sm:$0x1]
        %v1675 = vld [vmem:[%s339 + $0x3] sm:$0x1]
        %vm1676 = vcmask 64512
        %v1677 = vsel %vm1676, %v1668, 0.0
        %v1678 = vrot.slane %v1677, 4
        %v1679 = vadd.f32 %v1677, %v1678
        %v1680 = vrot.slane %v1679, 2
        %v1681 = vadd.f32 %v1679, %v1680
        %v1682 = vrot.slane %v1681, 1
        %v1683 = vadd.f32 %v1681, %v1682
        %v1684 = vsel %vm1676, %v1669, 0.0
        %v1685 = vrot.slane %v1684, 4
        %v1686 = vadd.f32 %v1684, %v1685
        %v1687 = vrot.slane %v1686, 2
        %v1688 = vadd.f32 %v1686, %v1687
        %v1689 = vrot.slane %v1688, 1
        %v1690 = vadd.f32 %v1688, %v1689
        %v1691 = vsel %vm1676, %v1670, 0.0
        %v1692 = vrot.slane %v1691, 4
        %v1693 = vadd.f32 %v1691, %v1692
        %v1694 = vrot.slane %v1693, 2
        %v1695 = vadd.f32 %v1693, %v1694
        %v1696 = vrot.slane %v1695, 1
        %v1697 = vadd.f32 %v1695, %v1696
        %v1698 = vsel %vm1676, %v1671, 0.0
        %v1699 = vrot.slane %v1698, 4
        %v1700 = vadd.f32 %v1698, %v1699
        %v1701 = vrot.slane %v1700, 2
        %v1702 = vadd.f32 %v1700, %v1701
        %v1703 = vrot.slane %v1702, 1
        %v1704 = vadd.f32 %v1702, %v1703
        %v1705 = vadd.f32 %v1672, %v1683
        %v1706 = vadd.f32 %v1673, %v1690
        %v1707 = vadd.f32 %v1674, %v1697
        %v1708 = vadd.f32 %v1675, %v1704
        %vm1709 = vcmask 57344
        %1710 = vst.msk [vmem:[%s339] sm:$0x1] %vm1709, %v1705
        %1711 = vst.msk [vmem:[%s339 + $0x1] sm:$0x1] %vm1709, %v1706
        %1712 = vst.msk [vmem:[%s339 + $0x2] sm:$0x1] %vm1709, %v1707
        %1713 = vst.msk [vmem:[%s339 + $0x3] sm:$0x1] %vm1709, %v1708
        %v1714 = vld [vmem:[%s346] sm:$0x1]
        %v1715 = vld [vmem:[%s346 + $0x1] sm:$0x1]
        %v1716 = vld [vmem:[%s346 + $0x2] sm:$0x1]
        %v1717 = vld [vmem:[%s346 + $0x3] sm:$0x1]
        %v1718 = vmul.f32 %v1668, %v1668
        %v1719 = vmul.f32 %v1669, %v1669
        %v1720 = vmul.f32 %v1670, %v1670
        %v1721 = vmul.f32 %v1671, %v1671
        %v1722 = vsel %vm1676, %v1718, 0.0
        %v1723 = vrot.slane %v1722, 4
        %v1724 = vadd.f32 %v1722, %v1723
        %v1725 = vrot.slane %v1724, 2
        %v1726 = vadd.f32 %v1724, %v1725
        %v1727 = vrot.slane %v1726, 1
        %v1728 = vadd.f32 %v1726, %v1727
        %v1729 = vsel %vm1676, %v1719, 0.0
        %v1730 = vrot.slane %v1729, 4
        %v1731 = vadd.f32 %v1729, %v1730
        %v1732 = vrot.slane %v1731, 2
        %v1733 = vadd.f32 %v1731, %v1732
        %v1734 = vrot.slane %v1733, 1
        %v1735 = vadd.f32 %v1733, %v1734
        %v1736 = vsel %vm1676, %v1720, 0.0
        %v1737 = vrot.slane %v1736, 4
        %v1738 = vadd.f32 %v1736, %v1737
        %v1739 = vrot.slane %v1738, 2
        %v1740 = vadd.f32 %v1738, %v1739
        %v1741 = vrot.slane %v1740, 1
        %v1742 = vadd.f32 %v1740, %v1741
        %v1743 = vsel %vm1676, %v1721, 0.0
        %v1744 = vrot.slane %v1743, 4
        %v1745 = vadd.f32 %v1743, %v1744
        %v1746 = vrot.slane %v1745, 2
        %v1747 = vadd.f32 %v1745, %v1746
        %v1748 = vrot.slane %v1747, 1
        %v1749 = vadd.f32 %v1747, %v1748
        %v1750 = vadd.f32 %v1714, %v1728
        %v1751 = vadd.f32 %v1715, %v1735
        %v1752 = vadd.f32 %v1716, %v1742
        %v1753 = vadd.f32 %v1717, %v1749
        %1754 = vst.msk [vmem:[%s346] sm:$0x1] %vm1709, %v1750
        %1755 = vst.msk [vmem:[%s346 + $0x1] sm:$0x1] %vm1709, %v1751
        %1756 = vst.msk [vmem:[%s346 + $0x2] sm:$0x1] %vm1709, %v1752
        %1757 = vst.msk [vmem:[%s346 + $0x3] sm:$0x1] %vm1709, %v1753
        %s1758 = sand.u32 %s142, 1
        %s1759 = scalar_lea.sflag [#allocation4], %s1758
        %s1760 = sand.u32 %s142, 1
        %s1761 = smul.addr %s1760, 16
        %s1762 = scalar_lea.vmem [#allocation10], %s1761
        %s1763 = sand.u32 %s29, 1
        %s1764 = scalar_lea.sflag [#allocation12], %s1763
        %s1765 = sand.u32 %s168, 1
        %s1766 = smul.addr %s1765, 4
        %s1767 = scalar_lea.vmem [#allocation11], %s1766
        %s1768 = sand.u32 %s29, 1
        %s1769 = scalar_lea.sflag [#allocation12], %s1768
        %s1770 = sand.u32 %s194, 1
        %s1771 = smul.addr %s1770, 4
        %s1772 = scalar_lea.vmem [#allocation13], %s1771
        // Predicated region
        $region57: #{_patch_embed_forward.3} parent=35 // pred_check
          %p1773 = pneg %p152
        $region58: #{_patch_embed_forward.3} parent=35 // pred_check_branch
          %1775 = sbr.rel (%p1773) target = $region60
        $region59: #{_patch_embed_forward.3} parent=35 // pred_region
          %s1777 = ssub.s32 256, 256
          %1778 = vsyncadd %s1759, %s1777
          %s1779 = smul.addr %s33, 4
          %s1780 = sadd.s32 %s34, %s1779
          %s1781 = smul.addr %s1780, 64
          %s1782 = scalar_lea.hbm %s4, %s1781
          %s1783 = sshll.u32 %s1762, 4
          %s1784 = int_to_ptr.vmem [resolvable:$true] %s1783
          %1789 = dma.vmem_to_hbm [thread:$0]  %s1784, 256, %s1782, %s1759, 64, 64, 4
        $region60: #{_patch_embed_forward.3} parent=35 // pred_fallthru
          _
        // Predicated region
        $region61: #{_patch_embed_forward.3} parent=35 // pred_check
          %p1790 = pneg %p178
        $region62: #{_patch_embed_forward.3} parent=35 // pred_check_branch
          %1792 = sbr.rel (%p1790) target = $region64
        $region63: #{_patch_embed_forward.3} parent=35 // pred_region
          %s1794 = ssub.s32 64, 64
          %1795 = vsyncadd %s1764, %s1794
          %s1796 = smul.addr %s33, 4
          %s1797 = smul.addr %s1796, 16
          %s1798 = scalar_lea.hbm %s5, %s1797
          %s1799 = sshll.u32 %s1767, 4
          %s1800 = int_to_ptr.vmem [resolvable:$true] %s1799
          %1805 = dma.vmem_to_hbm [thread:$0]  %s1800, 64, %s1798, %s1764, 16, 16, 1
        $region64: #{_patch_embed_forward.3} parent=35 // pred_fallthru
          _
        // Predicated region
        $region65: #{_patch_embed_forward.3} parent=35 // pred_check
          %p1806 = pneg %p204
        $region66: #{_patch_embed_forward.3} parent=35 // pred_check_branch
          %1808 = sbr.rel (%p1806) target = $region68
        $region67: #{_patch_embed_forward.3} parent=35 // pred_region
          %s1810 = ssub.s32 64, 64
          %1811 = vsyncadd %s1769, %s1810
          %s1812 = smul.addr %s33, 4
          %s1813 = smul.addr %s1812, 16
          %s1814 = scalar_lea.hbm %s6, %s1813
          %s1815 = sshll.u32 %s1772, 4
          %s1816 = int_to_ptr.vmem [resolvable:$true] %s1815
          %1821 = dma.vmem_to_hbm [thread:$0]  %s1816, 64, %s1814, %s1769, 16, 16, 1
        $region68: #{_patch_embed_forward.3} parent=35 // pred_fallthru
          _
      $region36: #{_patch_embed_forward.3} parent=5 // pred_fallthru
        _
      %p1822 = scmp.le.s32.totalorder 2, %s24
      // Predicated region
      $region69: #{_patch_embed_forward.3} parent=5 // pred_check
        %p1823 = pneg %p1822
      $region70: #{_patch_embed_forward.3} parent=5 // pred_check_branch
        %1825 = sbr.rel (%p1823) target = $region72
      $region71: #{_patch_embed_forward.3} parent=5 // pred_region
        %s1826 = ssub.s32 %s24, 2
        // Predicated region
        $region73: #{_patch_embed_forward.3} parent=71 // pred_check
          %p1827 = pneg %p158
        $region74: #{_patch_embed_forward.3} parent=71 // pred_check_branch
          %1829 = sbr.rel (%p1827) target = $region76
        $region75: #{_patch_embed_forward.3} parent=71 // pred_region
          %s1830 = sand.u32 %s143, 1
          %s1831 = scalar_lea.sflag [#allocation4], %s1830
          %s1832 = sand.u32 %s143, 1
          %s1833 = smul.addr %s1832, 16
          %s1834 = scalar_lea.vmem [#allocation10], %s1833
          %1835 = dma.done %s1831, 256
        $region76: #{_patch_embed_forward.3} parent=71 // pred_fallthru
          _
        // Predicated region
        $region77: #{_patch_embed_forward.3} parent=71 // pred_check
          %p1836 = pneg %p184
        $region78: #{_patch_embed_forward.3} parent=71 // pred_check_branch
          %1838 = sbr.rel (%p1836) target = $region80
        $region79: #{_patch_embed_forward.3} parent=71 // pred_region
          %s1839 = sand.u32 %s30, 1
          %s1840 = scalar_lea.sflag [#allocation12], %s1839
          %s1841 = sand.u32 %s169, 1
          %s1842 = smul.addr %s1841, 4
          %s1843 = scalar_lea.vmem [#allocation11], %s1842
          %1844 = dma.done %s1840, 64
        $region80: #{_patch_embed_forward.3} parent=71 // pred_fallthru
          _
        // Predicated region
        $region81: #{_patch_embed_forward.3} parent=71 // pred_check
          %p1845 = pneg %p210
        $region82: #{_patch_embed_forward.3} parent=71 // pred_check_branch
          %1847 = sbr.rel (%p1845) target = $region84
        $region83: #{_patch_embed_forward.3} parent=71 // pred_region
          %s1848 = sand.u32 %s30, 1
          %s1849 = scalar_lea.sflag [#allocation12], %s1848
          %s1850 = sand.u32 %s195, 1
          %s1851 = smul.addr %s1850, 4
          %s1852 = scalar_lea.vmem [#allocation13], %s1851
          %1853 = dma.done %s1849, 64
        $region84: #{_patch_embed_forward.3} parent=71 // pred_fallthru
          _
      $region72: #{_patch_embed_forward.3} parent=5 // pred_fallthru
        _
    $region6: #{_patch_embed_forward.3} parent=1 // loop_footer
      %s28 = sadd.s32 1, %s24
    $region7: #{_patch_embed_forward.3} parent=1 // loop_footer_branch
      %23 = sbr.rel target = $region3
    $region8: #{_patch_embed_forward.3} parent=1 // loop_exit
      _
    %1854 = vsyncpa [#allocation3], 1
    %s1855 = scalar_lea.sflag [#allocation3], 1
    %1856 = vsyncpa %s1855, 1
    %1857 = vsyncpa [#allocation8], 1
    %1858 = vsyncpa [#allocation4], 1
    %s1859 = scalar_lea.sflag [#allocation4], 1
    %1860 = vsyncpa %s1859, 1
    %1861 = vsyncpa [#allocation12], 1
    %s1862 = scalar_lea.sflag [#allocation12], 1
    %1863 = vsyncpa %s1862, 1
    %1864 = vsyncpa [#allocation5], 1
    %s1865 = scalar_lea.sflag [#allocation5], 1
    %1866 = vsyncpa %s1865, 1

</llo_original>
